<compile_context>
chip_gen: v5e
topology: v5e:2x2
jax: 0.10.0
libtpu: 0.0.40
codegen_flags: <defaults>
</compile_context>

<pallas_src>
import math

import jax
import jax.numpy as jnp
from jax.experimental import pallas as pl
from jax.experimental.pallas import tpu as pltpu

W_DIM = 512           # latent size == hidden_size == output_size
LM_DIM = 68 * 2       # flattened landmark size (136)
LM_PAD = 256          # lane-aligned landmark K dimension (zero-padded)
HIDDEN = 512
OUT = 512


def _round_up(x, m):
    return ((x + m - 1) // m) * m


def _mlp_kernel(w_ref, lm_ref,
                w1a_ref, w1b_ref,
                w2_ref, w3_ref, w4_ref,
                b_ref,
                o_ref):
    bf16 = jnp.bfloat16

    # fc1 on concat([w, lm]) == w @ W1a + lm @ W1b  (bf16 operands, f32 accumulate)
    h = jnp.dot(w_ref[...].astype(bf16), w1a_ref[...],
                preferred_element_type=jnp.float32)
    h = h + jnp.dot(lm_ref[...], w1b_ref[...],
                    preferred_element_type=jnp.float32)
    h = jnp.maximum(h + b_ref[0, :], 0.0)

    # fc2 + relu
    h = jnp.dot(h.astype(bf16), w2_ref[...], preferred_element_type=jnp.float32)
    h = jnp.maximum(h + b_ref[1, :], 0.0)

    # fc3 + relu
    h = jnp.dot(h.astype(bf16), w3_ref[...], preferred_element_type=jnp.float32)
    h = jnp.maximum(h + b_ref[2, :], 0.0)

    # fc4 (no relu) + residual.  Re-read the (VMEM-resident) input block here
    # instead of holding a (tb,512) f32 value live across all four matmuls.
    out = jnp.dot(h.astype(bf16), w4_ref[...], preferred_element_type=jnp.float32)
    o_ref[...] = (w_ref[...] + (out + b_ref[3, :])).astype(o_ref.dtype)


def prepare_kernel_params(params):
    """Convert f32 master params to the kernel layout.

    bf16 weights, W1b zero-row-padded 136->256, and the four biases packed into
    one (4, 512) f32 array.  Call once outside the per-step forward.
    """
    (w1a, w1b, b1, w2, b2, w3, b3, w4, b4) = params
    bf = jnp.bfloat16
    w1b_pad = jnp.pad(w1b, ((0, LM_PAD - LM_DIM), (0, 0)))        # (256, 512), zero rows
    biases = jnp.concatenate([b1, b2, b3, b4], axis=0)            # (4, 512) f32
    return (w1a.astype(bf), w1b_pad.astype(bf),
            w2.astype(bf), w3.astype(bf), w4.astype(bf),
            biases)


def transfer_decoder_blink_forward(w, lm, kparams, *, block_b=512,
                                   out_dtype=jnp.float32):
    """w: (B, 512) f32, lm: (B, 68, 2) f32, kparams from prepare_kernel_params.

    Returns (B, 512) in `out_dtype` (default f32; bf16 halves the output write
    on HBM-bound chips at the cost of quantizing the residual output).
    """
    B = w.shape[0]

    # lm: flatten, cast to bf16, zero-pad 136 -> 256 lanes.  Doing the pad in
    # bf16 avoids materializing an extra (B, 256) f32 copy in HBM.
    lm_flat = lm.reshape(B, -1)                                   # (B, 136) f32
    lm_pad = jnp.pad(lm_flat.astype(jnp.bfloat16),
                     ((0, 0), (0, LM_PAD - LM_DIM)))              # (B, 256) bf16

    # Batch tiling:
    #  * n_tiles = cdiv(B, block_b) avoids the pad-overshoot of round_up(B, tb)
    #    (e.g. B=260 now pads to 272, not 512).
    #  * Force >= 2 tiles whenever B >= 16 so the "parallel" batch axis shards
    #    across v7x's two TensorCores instead of leaving one idle.
    n_tiles = pl.cdiv(B, block_b)
    if B >= 16 and n_tiles < 2:
        n_tiles = 2
    tb = _round_up(pl.cdiv(B, n_tiles), 8)
    Bp = n_tiles * tb

    if Bp != B:
        w_p = jnp.pad(w, ((0, Bp - B), (0, 0)))
        lm_p = jnp.pad(lm_pad, ((0, Bp - B), (0, 0)))
    else:
        w_p, lm_p = w, lm_pad

    (w1a, w1b, w2, w3, w4, biases) = kparams

    grid = (n_tiles,)

    # Activation/output tiles move with the batch grid index.
    act_spec = lambda cols: pl.BlockSpec((tb, cols), lambda i: (i, 0))
    # Weights/biases: constant block index -> fetched once, VMEM-resident.
    wgt_spec = lambda r, c: pl.BlockSpec((r, c), lambda i: (0, 0))

    in_specs = [
        act_spec(W_DIM),               # w   (tb, 512) f32
        act_spec(LM_PAD),              # lm  (tb, 256) bf16
        wgt_spec(W_DIM, HIDDEN),       # w1a (512, 512) bf16
        wgt_spec(LM_PAD, HIDDEN),      # w1b (256, 512) bf16
        wgt_spec(HIDDEN, HIDDEN),      # w2
        wgt_spec(HIDDEN, HIDDEN),      # w3
        wgt_spec(HIDDEN, OUT),         # w4
        wgt_spec(4, HIDDEN),           # packed biases (4, 512) f32
    ]
    out_specs = act_spec(OUT)

    # VMEM budget: bf16 weights (double-buffered by default), double-buffered
    # activation tiles, plus generous headroom for in-kernel f32/bf16 temps.
    weight_bytes_bf16 = 2 * HIDDEN * (W_DIM + LM_PAD + 3 * HIDDEN)      # ~2.36 MiB
    act_tile_bytes = tb * (W_DIM * 4 + LM_PAD * 2 + OUT * 4)
    vmem_limit = int(min(2 * weight_bytes_bf16 + 2 * act_tile_bytes
                         + 10 * tb * HIDDEN * 4 + (1 << 20),
                         48 * 1024 * 1024))

    flops = 2 * Bp * HIDDEN * (W_DIM + LM_PAD + 3 * HIDDEN)
    bytes_accessed = (weight_bytes_bf16 + 4 * 4 * HIDDEN
                      + Bp * (W_DIM * 4 + LM_PAD * 2)
                      + Bp * OUT * jnp.dtype(out_dtype).itemsize)
    cost = pl.CostEstimate(flops=flops, transcendentals=0,
                           bytes_accessed=bytes_accessed)

    out = pl.pallas_call(
        _mlp_kernel,
        out_shape=jax.ShapeDtypeStruct((Bp, OUT), out_dtype),
        grid=grid,
        in_specs=in_specs,
        out_specs=out_specs,
        compiler_params=pltpu.CompilerParams(
            dimension_semantics=("parallel",),
            vmem_limit_bytes=vmem_limit),
        cost_estimate=cost,
    )(w_p, lm_p, w1a, w1b, w2, w3, w4, biases)

    if Bp != B:
        out = out[:B]
    return out


# ------------------------- init (PyTorch parity) -------------------------

def _xavier_uniform(key, fan_in, fan_out):
    # torch.nn.init.xavier_uniform_: U(-a, a), a = sqrt(6 / (fan_in + fan_out)).
    # Stored as (in, out) so the kernel computes x @ W.
    a = math.sqrt(6.0 / (fan_in + fan_out))
    return jax.random.uniform(key, (fan_in, fan_out), jnp.float32, -a, a)


def _linear_bias(key, fan_in, fan_out):
    # torch default Linear bias init: U(-1/sqrt(fan_in), 1/sqrt(fan_in))
    bound = 1.0 / math.sqrt(fan_in)
    return jax.random.uniform(key, (1, fan_out), jnp.float32, -bound, bound)


def init_params(key):
    input_size = W_DIM + LM_DIM            # 648
    ks = jax.random.split(key, 8)
    w1_full = _xavier_uniform(ks[0], input_size, HIDDEN)    # (648, 512)
    w1a = w1_full[:W_DIM, :]                                # (512, 512)
    w1b = w1_full[W_DIM:, :]                                # (136, 512)
    b1 = _linear_bias(ks[1], input_size, HIDDEN)
    w2 = _xavier_uniform(ks[2], HIDDEN, HIDDEN)
    b2 = _linear_bias(ks[3], HIDDEN, HIDDEN)
    w3 = _xavier_uniform(ks[4], HIDDEN, HIDDEN)
    b3 = _linear_bias(ks[5], HIDDEN, HIDDEN)
    w4 = _xavier_uniform(ks[6], HIDDEN, OUT)
    b4 = _linear_bias(ks[7], HIDDEN, OUT)
    return (w1a, w1b, b1, w2, b2, w3, b3, w4, b4)


# ------------------------------ references ------------------------------

def _reference_f32(w, lm, params):
    """Pure-f32 JAX mirror of the PyTorch forward (original semantics)."""
    (w1a, w1b, b1, w2, b2, w3, b3, w4, b4) = params
    x = jnp.concatenate([w, lm.reshape(w.shape[0], -1)], axis=-1)
    w1 = jnp.concatenate([w1a, w1b], axis=0)
    h = jax.nn.relu(x @ w1 + b1)
    h = jax.nn.relu(h @ w2 + b2)
    h = jax.nn.relu(h @ w3 + b3)
    return w + (h @ w4 + b4)


def _reference_bf16(w, lm, params):
    """Mirrors the kernel numerics: bf16 dot operands, f32 accumulation/elementwise."""
    (w1a, w1b, b1, w2, b2, w3, b3, w4, b4) = params
    bf = jnp.bfloat16
    f32 = jnp.float32
    lm_flat = lm.reshape(w.shape[0], -1)
    h = jnp.dot(w.astype(bf), w1a.astype(bf), preferred_element_type=f32)
    h = h + jnp.dot(lm_flat.astype(bf), w1b.astype(bf), preferred_element_type=f32)
    h = jnp.maximum(h + b1, 0.0)
    h = jnp.maximum(jnp.dot(h.astype(bf), w2.astype(bf), preferred_element_type=f32) + b2, 0.0)
    h = jnp.maximum(jnp.dot(h.astype(bf), w3.astype(bf), preferred_element_type=f32) + b3, 0.0)
    out = jnp.dot(h.astype(bf), w4.astype(bf), preferred_element_type=f32) + b4
    return w + out


if __name__ == "__main__":
    key = jax.random.PRNGKey(0)
    k_p, k_w, k_lm = jax.random.split(key, 3)

    B = 8
    params = init_params(k_p)                       # f32 master weights (PyTorch parity)
    kparams = prepare_kernel_params(params)         # bf16 + padded + packed biases, done once

    w = jax.random.normal(k_w, (B, W_DIM), jnp.float32)
    lm = jax.random.normal(k_lm, (B, 68, 2), jnp.float32)

    fwd = jax.jit(transfer_decoder_blink_forward)
    out = jax.block_until_ready(fwd(w, lm, kparams))

    assert out.shape == (B, OUT)
    assert out.dtype == jnp.float32

    # Exact-numerics check against a reference that mirrors the kernel's bf16 dots.
    ref_bf16 = jax.block_until_ready(_reference_bf16(w, lm, params))
    assert jnp.allclose(out, ref_bf16, atol=2e-3, rtol=2e-3), "mismatch vs bf16-mirror reference"

    # Sanity check against the original f32 PyTorch semantics (loose tolerance:
    # bf16 weight/activation quantization is the intended perf trade-off).
    ref_f32 = jax.block_until_ready(_reference_f32(w, lm, params))
    assert jnp.allclose(out, ref_f32, atol=1e-1, rtol=1e-1), "mismatch vs f32 reference"

    # Exercise the multi-tile / batch-padding path (B not a multiple of the tile,
    # forces >= 2 grid steps) to make sure tiling + slicing is correct.
    B2 = 20
    w2 = jax.random.normal(jax.random.PRNGKey(1), (B2, W_DIM), jnp.float32)
    lm2 = jax.random.normal(jax.random.PRNGKey(2), (B2, 68, 2), jnp.float32)
    out2 = jax.block_until_ready(fwd(w2, lm2, kparams))
    ref2 = jax.block_until_ready(_reference_bf16(w2, lm2, params))
    assert out2.shape == (B2, OUT)
    assert jnp.allclose(out2, ref2, atol=2e-3, rtol=2e-3), "mismatch on multi-tile path"

    print("KERNEL_OK")
</pallas_src>

<mosaic_0001>
module attributes {stable_mosaic.version = 11 : i64} {
  func.func @_mlp_kernel(%arg0: i32, %arg1: memref<8x512xf32, #tpu.memory_space<vmem>>, %arg2: memref<8x256xbf16, #tpu.memory_space<vmem>>, %arg3: memref<512x512xbf16, #tpu.memory_space<vmem>>, %arg4: memref<256x512xbf16, #tpu.memory_space<vmem>>, %arg5: memref<512x512xbf16, #tpu.memory_space<vmem>>, %arg6: memref<512x512xbf16, #tpu.memory_space<vmem>>, %arg7: memref<512x512xbf16, #tpu.memory_space<vmem>>, %arg8: memref<4x512xf32, #tpu.memory_space<vmem>>, %arg9: memref<8x512xf32, #tpu.memory_space<vmem>>) attributes {dimension_semantics = [#tpu.dimension_semantics<parallel>], iteration_bounds = array<i64: 1>, scalar_prefetch = 0 : i64, scratch_operands = 0 : i64, tpu.core_type = #tpu.core_type<tc>, window_params = [{transform_indices = @transform_0, window_bounds = array<i64: 8, 512>}, {transform_indices = @transform_1, window_bounds = array<i64: 8, 256>}, {pipeline_mode = #tpu.pipeline_mode<synchronous>, transform_indices = @transform_2, window_bounds = array<i64: 512, 512>}, {pipeline_mode = #tpu.pipeline_mode<synchronous>, transform_indices = @transform_3, window_bounds = array<i64: 256, 512>}, {pipeline_mode = #tpu.pipeline_mode<synchronous>, transform_indices = @transform_4, window_bounds = array<i64: 512, 512>}, {pipeline_mode = #tpu.pipeline_mode<synchronous>, transform_indices = @transform_5, window_bounds = array<i64: 512, 512>}, {pipeline_mode = #tpu.pipeline_mode<synchronous>, transform_indices = @transform_6, window_bounds = array<i64: 512, 512>}, {pipeline_mode = #tpu.pipeline_mode<synchronous>, transform_indices = @transform_7, window_bounds = array<i64: 4, 512>}, {transform_indices = @transform_8, window_bounds = array<i64: 8, 512>}]} {
    %c0 = arith.constant 0 : index
    %c0_0 = arith.constant 0 : index
    %0 = vector.load %arg1[%c0, %c0_0] : memref<8x512xf32, #tpu.memory_space<vmem>>, vector<8x512xf32>
    %1 = arith.truncf %0 : vector<8x512xf32> to vector<8x512xbf16>
    %c0_1 = arith.constant 0 : index
    %c0_2 = arith.constant 0 : index
    %2 = vector.load %arg3[%c0_1, %c0_2] : memref<512x512xbf16, #tpu.memory_space<vmem>>, vector<512x512xbf16>
    %cst = arith.constant dense<0.000000e+00> : vector<8x512xf32>
    %3 = tpu.matmul %1, %2, %cst {dimension_numbers = #tpu.dot_dimension_numbers<[1], [0], [0], [1], [0, 0, 1, 1], [], []>} : vector<8x512xbf16>, vector<512x512xbf16>, vector<8x512xf32> -> vector<8x512xf32>
    %c0_3 = arith.constant 0 : index
    %c0_4 = arith.constant 0 : index
    %4 = vector.load %arg2[%c0_3, %c0_4] : memref<8x256xbf16, #tpu.memory_space<vmem>>, vector<8x256xbf16>
    %c0_5 = arith.constant 0 : index
    %c0_6 = arith.constant 0 : index
    %5 = vector.load %arg4[%c0_5, %c0_6] : memref<256x512xbf16, #tpu.memory_space<vmem>>, vector<256x512xbf16>
    %cst_7 = arith.constant dense<0.000000e+00> : vector<8x512xf32>
    %6 = tpu.matmul %4, %5, %cst_7 {dimension_numbers = #tpu.dot_dimension_numbers<[1], [0], [0], [1], [0, 0, 1, 1], [], []>} : vector<8x256xbf16>, vector<256x512xbf16>, vector<8x512xf32> -> vector<8x512xf32>
    %7 = arith.addf %3, %6 : vector<8x512xf32>
    %c0_8 = arith.constant 0 : index
    %c0_9 = arith.constant 0 : index
    %8 = vector.load %arg8[%c0_8, %c0_9] : memref<4x512xf32, #tpu.memory_space<vmem>>, vector<1x512xf32>
    %9 = vector.shape_cast %8 : vector<1x512xf32> to vector<512xf32>
    %10 = vector.shape_cast %9 : vector<512xf32> to vector<1x512xf32>
    %11 = vector.broadcast %10 : vector<1x512xf32> to vector<8x512xf32>
    %12 = arith.addf %7, %11 : vector<8x512xf32>
    %cst_10 = arith.constant 0.000000e+00 : f32
    %13 = vector.broadcast %cst_10 : f32 to vector<8x512xf32>
    %14 = arith.maximumf %12, %13 : vector<8x512xf32>
    %15 = arith.truncf %14 : vector<8x512xf32> to vector<8x512xbf16>
    %c0_11 = arith.constant 0 : index
    %c0_12 = arith.constant 0 : index
    %16 = vector.load %arg5[%c0_11, %c0_12] : memref<512x512xbf16, #tpu.memory_space<vmem>>, vector<512x512xbf16>
    %cst_13 = arith.constant dense<0.000000e+00> : vector<8x512xf32>
    %17 = tpu.matmul %15, %16, %cst_13 {dimension_numbers = #tpu.dot_dimension_numbers<[1], [0], [0], [1], [0, 0, 1, 1], [], []>} : vector<8x512xbf16>, vector<512x512xbf16>, vector<8x512xf32> -> vector<8x512xf32>
    %c1 = arith.constant 1 : index
    %c0_14 = arith.constant 0 : index
    %18 = vector.load %arg8[%c1, %c0_14] : memref<4x512xf32, #tpu.memory_space<vmem>>, vector<1x512xf32>
    %19 = vector.shape_cast %18 : vector<1x512xf32> to vector<512xf32>
    %20 = vector.shape_cast %19 : vector<512xf32> to vector<1x512xf32>
    %21 = vector.broadcast %20 : vector<1x512xf32> to vector<8x512xf32>
    %22 = arith.addf %17, %21 : vector<8x512xf32>
    %cst_15 = arith.constant 0.000000e+00 : f32
    %23 = vector.broadcast %cst_15 : f32 to vector<8x512xf32>
    %24 = arith.maximumf %22, %23 : vector<8x512xf32>
    %25 = arith.truncf %24 : vector<8x512xf32> to vector<8x512xbf16>
    %c0_16 = arith.constant 0 : index
    %c0_17 = arith.constant 0 : index
    %26 = vector.load %arg6[%c0_16, %c0_17] : memref<512x512xbf16, #tpu.memory_space<vmem>>, vector<512x512xbf16>
    %cst_18 = arith.constant dense<0.000000e+00> : vector<8x512xf32>
    %27 = tpu.matmul %25, %26, %cst_18 {dimension_numbers = #tpu.dot_dimension_numbers<[1], [0], [0], [1], [0, 0, 1, 1], [], []>} : vector<8x512xbf16>, vector<512x512xbf16>, vector<8x512xf32> -> vector<8x512xf32>
    %c2 = arith.constant 2 : index
    %c0_19 = arith.constant 0 : index
    %28 = vector.load %arg8[%c2, %c0_19] : memref<4x512xf32, #tpu.memory_space<vmem>>, vector<1x512xf32>
    %29 = vector.shape_cast %28 : vector<1x512xf32> to vector<512xf32>
    %30 = vector.shape_cast %29 : vector<512xf32> to vector<1x512xf32>
    %31 = vector.broadcast %30 : vector<1x512xf32> to vector<8x512xf32>
    %32 = arith.addf %27, %31 : vector<8x512xf32>
    %cst_20 = arith.constant 0.000000e+00 : f32
    %33 = vector.broadcast %cst_20 : f32 to vector<8x512xf32>
    %34 = arith.maximumf %32, %33 : vector<8x512xf32>
    %35 = arith.truncf %34 : vector<8x512xf32> to vector<8x512xbf16>
    %c0_21 = arith.constant 0 : index
    %c0_22 = arith.constant 0 : index
    %36 = vector.load %arg7[%c0_21, %c0_22] : memref<512x512xbf16, #tpu.memory_space<vmem>>, vector<512x512xbf16>
    %cst_23 = arith.constant dense<0.000000e+00> : vector<8x512xf32>
    %37 = tpu.matmul %35, %36, %cst_23 {dimension_numbers = #tpu.dot_dimension_numbers<[1], [0], [0], [1], [0, 0, 1, 1], [], []>} : vector<8x512xbf16>, vector<512x512xbf16>, vector<8x512xf32> -> vector<8x512xf32>
    %c0_24 = arith.constant 0 : index
    %c0_25 = arith.constant 0 : index
    %38 = vector.load %arg1[%c0_24, %c0_25] : memref<8x512xf32, #tpu.memory_space<vmem>>, vector<8x512xf32>
    %c3 = arith.constant 3 : index
    %c0_26 = arith.constant 0 : index
    %39 = vector.load %arg8[%c3, %c0_26] : memref<4x512xf32, #tpu.memory_space<vmem>>, vector<1x512xf32>
    %40 = vector.shape_cast %39 : vector<1x512xf32> to vector<512xf32>
    %41 = vector.shape_cast %40 : vector<512xf32> to vector<1x512xf32>
    %42 = vector.broadcast %41 : vector<1x512xf32> to vector<8x512xf32>
    %43 = arith.addf %37, %42 : vector<8x512xf32>
    %44 = arith.addf %38, %43 : vector<8x512xf32>
    %c0_27 = arith.constant 0 : index
    %c0_28 = arith.constant 0 : index
    %45 = vector.load %arg9[%c0_27, %c0_28] : memref<8x512xf32, #tpu.memory_space<vmem>>, vector<8x512xf32>
    tpu.vector_store %arg9[%c0_27, %c0_28], %44 {strides = array<i32>} : memref<8x512xf32, #tpu.memory_space<vmem>>, vector<8x512xf32>,
    return
  }
  func.func @transform_0(%arg0: i32) -> (i32, i32) {
    %c0_i32 = arith.constant 0 : i32
    %c0_i32_0 = arith.constant 0 : i32
    return %arg0, %c0_i32 : i32, i32
  }
  func.func @transform_1(%arg0: i32) -> (i32, i32) {
    %c0_i32 = arith.constant 0 : i32
    %c0_i32_0 = arith.constant 0 : i32
    return %arg0, %c0_i32 : i32, i32
  }
  func.func @transform_2(%arg0: i32) -> (i32, i32) {
    %c0_i32 = arith.constant 0 : i32
    %c0_i32_0 = arith.constant 0 : i32
    %c0_i32_1 = arith.constant 0 : i32
    return %c0_i32, %c0_i32_0 : i32, i32
  }
  func.func @transform_3(%arg0: i32) -> (i32, i32) {
    %c0_i32 = arith.constant 0 : i32
    %c0_i32_0 = arith.constant 0 : i32
    %c0_i32_1 = arith.constant 0 : i32
    return %c0_i32, %c0_i32_0 : i32, i32
  }
  func.func @transform_4(%arg0: i32) -> (i32, i32) {
    %c0_i32 = arith.constant 0 : i32
    %c0_i32_0 = arith.constant 0 : i32
    %c0_i32_1 = arith.constant 0 : i32
    return %c0_i32, %c0_i32_0 : i32, i32
  }
  func.func @transform_5(%arg0: i32) -> (i32, i32) {
    %c0_i32 = arith.constant 0 : i32
    %c0_i32_0 = arith.constant 0 : i32
    %c0_i32_1 = arith.constant 0 : i32
    return %c0_i32, %c0_i32_0 : i32, i32
  }
  func.func @transform_6(%arg0: i32) -> (i32, i32) {
    %c0_i32 = arith.constant 0 : i32
    %c0_i32_0 = arith.constant 0 : i32
    %c0_i32_1 = arith.constant 0 : i32
    return %c0_i32, %c0_i32_0 : i32, i32
  }
  func.func @transform_7(%arg0: i32) -> (i32, i32) {
    %c0_i32 = arith.constant 0 : i32
    %c0_i32_0 = arith.constant 0 : i32
    %c0_i32_1 = arith.constant 0 : i32
    return %c0_i32, %c0_i32_0 : i32, i32
  }
  func.func @transform_8(%arg0: i32) -> (i32, i32) {
    %c0_i32 = arith.constant 0 : i32
    %c0_i32_0 = arith.constant 0 : i32
    return %arg0, %c0_i32 : i32, i32
  }
}

</mosaic_0001>

<llo_original>
// kernel: transfer_decoder_blink_forward.1
$region0: #{transfer_decoder_blink_forward.1}
  #allocation0 [shape = 'u32[]', space=smem, size = 0x4, offset = 0x4, fixed_abs, tag = 'smem constant byte address 0x4 - core index']
  #allocation1 [shape = 'u32[72,128]{1,0:T(1,128)}', space=vmem, size = 0x9000, scoped, tag = 'internal scratch']
  %s0 = inlined_call_operand.vmem [shape: f32[8,512], index: 0, kind: input, shape index: {}]
  %s1 = inlined_call_operand.vmem [shape: bf16[8,256], index: 1, kind: input, shape index: {}]
  %s2 = inlined_call_operand.hbm [shape: bf16[512,512], index: 2, kind: input, shape index: {}]
  %s3 = inlined_call_operand.hbm [shape: bf16[256,512], index: 3, kind: input, shape index: {}]
  %s4 = inlined_call_operand.hbm [shape: bf16[512,512], index: 4, kind: input, shape index: {}]
  %s5 = inlined_call_operand.hbm [shape: bf16[512,512], index: 5, kind: input, shape index: {}]
  %s6 = inlined_call_operand.hbm [shape: bf16[512,512], index: 6, kind: input, shape index: {}]
  %s7 = inlined_call_operand.vmem [shape: f32[4,512], index: 7, kind: input, shape index: {}]
  %s8 = inlined_call_operand.hbm [shape: f32[8,512], index: 8, kind: output, shape index: {}]
  %s9 = sld [smem:[#allocation0]]
  $region62: #{transfer_decoder_blink_forward.1} parent=0
    _
  %s11 = ssub.s32 1, %s9
  %s12 = scalar_select 0, %s11, %s9
  $region1: #{transfer_decoder_blink_forward.1} parent=0
    #allocation2 [shape = 'u8[524288]{0}', space=vmem, size = 0x80000, scoped, tag = 'input window, operand 2, single buffered']
    #allocation3 [shape = 's32[1]{0}', space=sflag, size = 0x4, scoped, tag = 'scoped memory for transfer_decoder_blink_forward.1']
    #allocation4 [shape = 's32[1]{0}', space=sflag, size = 0x4, scoped, tag = 'scoped memory for transfer_decoder_blink_forward.1']
    #allocation5 [shape = 'u8[262144]{0}', space=vmem, size = 0x40000, scoped, tag = 'input window, operand 3, single buffered']
    #allocation6 [shape = 's32[1]{0}', space=sflag, size = 0x4, scoped, tag = 'scoped memory for transfer_decoder_blink_forward.1']
    #allocation7 [shape = 'u8[524288]{0}', space=vmem, size = 0x80000, scoped, tag = 'input window, operand 4, single buffered']
    #allocation8 [shape = 'u8[524288]{0}', space=vmem, size = 0x80000, scoped, tag = 'input window, operand 5, single buffered']
    #allocation9 [shape = 's32[1]{0}', space=sflag, size = 0x4, scoped, tag = 'scoped memory for transfer_decoder_blink_forward.1']
    #allocation10 [shape = 'u8[524288]{0}', space=vmem, size = 0x80000, scoped, tag = 'input window, operand 6, single buffered']
    #allocation11 [shape = 'u8[16384]{0}', space=vmem, size = 0x4000, scoped, tag = 'output window, operand 0, single buffered']
    %13 = vsyncpa [#allocation3], 0
    %14 = vsyncpa [#allocation6], 0
    %15 = vsyncpa [#allocation9], 0
    %16 = vsyncpa [#allocation4], 0
    // Predicated region
    $region2: #{transfer_decoder_blink_forward.1} parent=1 // pred_check
      _
    $region3: #{transfer_decoder_blink_forward.1} parent=1 // pred_check_branch
      %18 = sbr.rel (0) target = $region5
    $region4: #{transfer_decoder_blink_forward.1} parent=1 // pred_region
      _
    $region5: #{transfer_decoder_blink_forward.1} parent=1 // pred_fallthru
      _
    // Predicated region
    $region6: #{transfer_decoder_blink_forward.1} parent=1 // pred_check
      _
    $region7: #{transfer_decoder_blink_forward.1} parent=1 // pred_check_branch
      %20 = sbr.rel (0) target = $region9
    $region8: #{transfer_decoder_blink_forward.1} parent=1 // pred_region
      _
    $region9: #{transfer_decoder_blink_forward.1} parent=1 // pred_fallthru
      _
    // Predicated region
    $region10: #{transfer_decoder_blink_forward.1} parent=1 // pred_check
      _
    $region11: #{transfer_decoder_blink_forward.1} parent=1 // pred_check_branch
      %22 = sbr.rel (0) target = $region13
    $region12: #{transfer_decoder_blink_forward.1} parent=1 // pred_region
      %24 = vsyncadd [#allocation3], 0
      %s25 = sshll.u32 %s2, 4
      %s26 = int_to_ptr.hbm [resolvable:$true] %s25
      %s27 = sshll.u32 [#allocation2], 4
      %s28 = int_to_ptr.vmem [resolvable:$true] %s27
      %33 = dma.hbm_to_vmem [thread:$0]  %s26, 16384, %s28, [#allocation3], 256, 256, 16
    $region13: #{transfer_decoder_blink_forward.1} parent=1 // pred_fallthru
      _
    // Predicated region
    $region14: #{transfer_decoder_blink_forward.1} parent=1 // pred_check
      _
    $region15: #{transfer_decoder_blink_forward.1} parent=1 // pred_check_branch
      %35 = sbr.rel (0) target = $region17
    $region16: #{transfer_decoder_blink_forward.1} parent=1 // pred_region
      %37 = vsyncadd [#allocation6], 0
      %s38 = sshll.u32 %s3, 4
      %s39 = int_to_ptr.hbm [resolvable:$true] %s38
      %s40 = sshll.u32 [#allocation5], 4
      %s41 = int_to_ptr.vmem [resolvable:$true] %s40
      %46 = dma.hbm_to_vmem [thread:$0]  %s39, 8192, %s41, [#allocation6], 256, 256, 16
    $region17: #{transfer_decoder_blink_forward.1} parent=1 // pred_fallthru
      _
    // Predicated region
    $region18: #{transfer_decoder_blink_forward.1} parent=1 // pred_check
      _
    $region19: #{transfer_decoder_blink_forward.1} parent=1 // pred_check_branch
      %48 = sbr.rel (0) target = $region21
    $region20: #{transfer_decoder_blink_forward.1} parent=1 // pred_region
      %50 = vsyncadd [#allocation6], 0
      %s51 = sshll.u32 %s4, 4
      %s52 = int_to_ptr.hbm [resolvable:$true] %s51
      %s53 = sshll.u32 [#allocation7], 4
      %s54 = int_to_ptr.vmem [resolvable:$true] %s53
      %59 = dma.hbm_to_vmem [thread:$0]  %s52, 16384, %s54, [#allocation6], 256, 256, 16
    $region21: #{transfer_decoder_blink_forward.1} parent=1 // pred_fallthru
      _
    // Predicated region
    $region22: #{transfer_decoder_blink_forward.1} parent=1 // pred_check
      _
    $region23: #{transfer_decoder_blink_forward.1} parent=1 // pred_check_branch
      %61 = sbr.rel (0) target = $region25
    $region24: #{transfer_decoder_blink_forward.1} parent=1 // pred_region
      %63 = vsyncadd [#allocation9], 0
      %s64 = sshll.u32 %s5, 4
      %s65 = int_to_ptr.hbm [resolvable:$true] %s64
      %s66 = sshll.u32 [#allocation8], 4
      %s67 = int_to_ptr.vmem [resolvable:$true] %s66
      %72 = dma.hbm_to_vmem [thread:$0]  %s65, 16384, %s67, [#allocation9], 256, 256, 16
    $region25: #{transfer_decoder_blink_forward.1} parent=1 // pred_fallthru
      _
    // Predicated region
    $region26: #{transfer_decoder_blink_forward.1} parent=1 // pred_check
      _
    $region27: #{transfer_decoder_blink_forward.1} parent=1 // pred_check_branch
      %74 = sbr.rel (0) target = $region29
    $region28: #{transfer_decoder_blink_forward.1} parent=1 // pred_region
      %76 = vsyncadd [#allocation9], 0
      %s77 = sshll.u32 %s6, 4
      %s78 = int_to_ptr.hbm [resolvable:$true] %s77
      %s79 = sshll.u32 [#allocation10], 4
      %s80 = int_to_ptr.vmem [resolvable:$true] %s79
      %85 = dma.hbm_to_vmem [thread:$0]  %s78, 16384, %s80, [#allocation9], 256, 256, 16
    $region29: #{transfer_decoder_blink_forward.1} parent=1 // pred_fallthru
      _
    // Predicated region
    $region30: #{transfer_decoder_blink_forward.1} parent=1 // pred_check
      _
    $region31: #{transfer_decoder_blink_forward.1} parent=1 // pred_check_branch
      %87 = sbr.rel (0) target = $region33
    $region32: #{transfer_decoder_blink_forward.1} parent=1 // pred_region
      _
    $region33: #{transfer_decoder_blink_forward.1} parent=1 // pred_fallthru
      _
    // Predicated region
    $region34: #{transfer_decoder_blink_forward.1} parent=1 // pred_check
      _
    $region35: #{transfer_decoder_blink_forward.1} parent=1 // pred_check_branch
      %89 = sbr.rel (0) target = $region37
    $region36: #{transfer_decoder_blink_forward.1} parent=1 // pred_region
      %91 = dma.done [#allocation3], 16384
    $region37: #{transfer_decoder_blink_forward.1} parent=1 // pred_fallthru
      _
    // Predicated region
    $region38: #{transfer_decoder_blink_forward.1} parent=1 // pred_check
      _
    $region39: #{transfer_decoder_blink_forward.1} parent=1 // pred_check_branch
      %93 = sbr.rel (0) target = $region41
    $region40: #{transfer_decoder_blink_forward.1} parent=1 // pred_region
      %95 = dma.done [#allocation6], 8192
    $region41: #{transfer_decoder_blink_forward.1} parent=1 // pred_fallthru
      _
    // Predicated region
    $region42: #{transfer_decoder_blink_forward.1} parent=1 // pred_check
      _
    $region43: #{transfer_decoder_blink_forward.1} parent=1 // pred_check_branch
      %97 = sbr.rel (0) target = $region45
    $region44: #{transfer_decoder_blink_forward.1} parent=1 // pred_region
      %99 = dma.done [#allocation6], 16384
    $region45: #{transfer_decoder_blink_forward.1} parent=1 // pred_fallthru
      _
    // Predicated region
    $region46: #{transfer_decoder_blink_forward.1} parent=1 // pred_check
      _
    $region47: #{transfer_decoder_blink_forward.1} parent=1 // pred_check_branch
      %101 = sbr.rel (0) target = $region49
    $region48: #{transfer_decoder_blink_forward.1} parent=1 // pred_region
      %103 = dma.done [#allocation9], 16384
    $region49: #{transfer_decoder_blink_forward.1} parent=1 // pred_fallthru
      _
    // Predicated region
    $region50: #{transfer_decoder_blink_forward.1} parent=1 // pred_check
      _
    $region51: #{transfer_decoder_blink_forward.1} parent=1 // pred_check_branch
      %105 = sbr.rel (0) target = $region53
    $region52: #{transfer_decoder_blink_forward.1} parent=1 // pred_region
      %107 = dma.done [#allocation9], 16384
    $region53: #{transfer_decoder_blink_forward.1} parent=1 // pred_fallthru
      _
    %v108 = vld [vmem:[%s0] sm:$0xff]
    %v109 = vld [vmem:[%s0 + $0x8] sm:$0xff]
    %v110 = vld [vmem:[%s0 + $0x10] sm:$0xff]
    %v111 = vld [vmem:[%s0 + $0x18] sm:$0xff]
    %v112 = vpack.c.bf16 %v108, %v108
    %v113 = vpack.c.bf16 %v109, %v109
    %v114 = vpack.c.bf16 %v110, %v110
    %v115 = vpack.c.bf16 %v111, %v111
    %v116 = vld [vmem:[#allocation2] sm:$0xff]
    %v117 = vld [vmem:[#allocation2 + $0x8] sm:$0xff]
    %v118 = vld [vmem:[#allocation2 + $0x10] sm:$0xff]
    %v119 = vld [vmem:[#allocation2 + $0x18] sm:$0xff]
    %v120 = vld [vmem:[#allocation2 + $0x20] sm:$0xff]
    %v121 = vld [vmem:[#allocation2 + $0x28] sm:$0xff]
    %v122 = vld [vmem:[#allocation2 + $0x30] sm:$0xff]
    %v123 = vld [vmem:[#allocation2 + $0x38] sm:$0xff]
    %v124 = vld [vmem:[#allocation2 + $0x40] sm:$0xff]
    %v125 = vld [vmem:[#allocation2 + $0x48] sm:$0xff]
    %v126 = vld [vmem:[#allocation2 + $0x50] sm:$0xff]
    %v127 = vld [vmem:[#allocation2 + $0x58] sm:$0xff]
    %v128 = vld [vmem:[#allocation2 + $0x60] sm:$0xff]
    %v129 = vld [vmem:[#allocation2 + $0x68] sm:$0xff]
    %v130 = vld [vmem:[#allocation2 + $0x70] sm:$0xff]
    %v131 = vld [vmem:[#allocation2 + $0x78] sm:$0xff]
    %v132 = vld [vmem:[#allocation2 + $0x80] sm:$0xff]
    %v133 = vld [vmem:[#allocation2 + $0x88] sm:$0xff]
    %v134 = vld [vmem:[#allocation2 + $0x90] sm:$0xff]
    %v135 = vld [vmem:[#allocation2 + $0x98] sm:$0xff]
    %v136 = vld [vmem:[#allocation2 + $0xa0] sm:$0xff]
    %v137 = vld [vmem:[#allocation2 + $0xa8] sm:$0xff]
    %v138 = vld [vmem:[#allocation2 + $0xb0] sm:$0xff]
    %v139 = vld [vmem:[#allocation2 + $0xb8] sm:$0xff]
    %v140 = vld [vmem:[#allocation2 + $0xc0] sm:$0xff]
    %v141 = vld [vmem:[#allocation2 + $0xc8] sm:$0xff]
    %v142 = vld [vmem:[#allocation2 + $0xd0] sm:$0xff]
    %v143 = vld [vmem:[#allocation2 + $0xd8] sm:$0xff]
    %v144 = vld [vmem:[#allocation2 + $0xe0] sm:$0xff]
    %v145 = vld [vmem:[#allocation2 + $0xe8] sm:$0xff]
    %v146 = vld [vmem:[#allocation2 + $0xf0] sm:$0xff]
    %v147 = vld [vmem:[#allocation2 + $0xf8] sm:$0xff]
    %v148 = vld [vmem:[#allocation2 + $0x100] sm:$0xff]
    %v149 = vld [vmem:[#allocation2 + $0x108] sm:$0xff]
    %v150 = vld [vmem:[#allocation2 + $0x110] sm:$0xff]
    %v151 = vld [vmem:[#allocation2 + $0x118] sm:$0xff]
    %v152 = vld [vmem:[#allocation2 + $0x120] sm:$0xff]
    %v153 = vld [vmem:[#allocation2 + $0x128] sm:$0xff]
    %v154 = vld [vmem:[#allocation2 + $0x130] sm:$0xff]
    %v155 = vld [vmem:[#allocation2 + $0x138] sm:$0xff]
    %v156 = vld [vmem:[#allocation2 + $0x140] sm:$0xff]
    %v157 = vld [vmem:[#allocation2 + $0x148] sm:$0xff]
    %v158 = vld [vmem:[#allocation2 + $0x150] sm:$0xff]
    %v159 = vld [vmem:[#allocation2 + $0x158] sm:$0xff]
    %v160 = vld [vmem:[#allocation2 + $0x160] sm:$0xff]
    %v161 = vld [vmem:[#allocation2 + $0x168] sm:$0xff]
    %v162 = vld [vmem:[#allocation2 + $0x170] sm:$0xff]
    %v163 = vld [vmem:[#allocation2 + $0x178] sm:$0xff]
    %v164 = vld [vmem:[#allocation2 + $0x180] sm:$0xff]
    %v165 = vld [vmem:[#allocation2 + $0x188] sm:$0xff]
    %v166 = vld [vmem:[#allocation2 + $0x190] sm:$0xff]
    %v167 = vld [vmem:[#allocation2 + $0x198] sm:$0xff]
    %v168 = vld [vmem:[#allocation2 + $0x1a0] sm:$0xff]
    %v169 = vld [vmem:[#allocation2 + $0x1a8] sm:$0xff]
    %v170 = vld [vmem:[#allocation2 + $0x1b0] sm:$0xff]
    %v171 = vld [vmem:[#allocation2 + $0x1b8] sm:$0xff]
    %v172 = vld [vmem:[#allocation2 + $0x1c0] sm:$0xff]
    %v173 = vld [vmem:[#allocation2 + $0x1c8] sm:$0xff]
    %v174 = vld [vmem:[#allocation2 + $0x1d0] sm:$0xff]
    %v175 = vld [vmem:[#allocation2 + $0x1d8] sm:$0xff]
    %v176 = vld [vmem:[#allocation2 + $0x1e0] sm:$0xff]
    %v177 = vld [vmem:[#allocation2 + $0x1e8] sm:$0xff]
    %v178 = vld [vmem:[#allocation2 + $0x1f0] sm:$0xff]
    %v179 = vld [vmem:[#allocation2 + $0x1f8] sm:$0xff]
    %v180 = vld [vmem:[#allocation2 + $0x200] sm:$0xff]
    %v181 = vld [vmem:[#allocation2 + $0x208] sm:$0xff]
    %v182 = vld [vmem:[#allocation2 + $0x210] sm:$0xff]
    %v183 = vld [vmem:[#allocation2 + $0x218] sm:$0xff]
    %v184 = vld [vmem:[#allocation2 + $0x220] sm:$0xff]
    %v185 = vld [vmem:[#allocation2 + $0x228] sm:$0xff]
    %v186 = vld [vmem:[#allocation2 + $0x230] sm:$0xff]
    %v187 = vld [vmem:[#allocation2 + $0x238] sm:$0xff]
    %v188 = vld [vmem:[#allocation2 + $0x240] sm:$0xff]
    %v189 = vld [vmem:[#allocation2 + $0x248] sm:$0xff]
    %v190 = vld [vmem:[#allocation2 + $0x250] sm:$0xff]
    %v191 = vld [vmem:[#allocation2 + $0x258] sm:$0xff]
    %v192 = vld [vmem:[#allocation2 + $0x260] sm:$0xff]
    %v193 = vld [vmem:[#allocation2 + $0x268] sm:$0xff]
    %v194 = vld [vmem:[#allocation2 + $0x270] sm:$0xff]
    %v195 = vld [vmem:[#allocation2 + $0x278] sm:$0xff]
    %v196 = vld [vmem:[#allocation2 + $0x280] sm:$0xff]
    %v197 = vld [vmem:[#allocation2 + $0x288] sm:$0xff]
    %v198 = vld [vmem:[#allocation2 + $0x290] sm:$0xff]
    %v199 = vld [vmem:[#allocation2 + $0x298] sm:$0xff]
    %v200 = vld [vmem:[#allocation2 + $0x2a0] sm:$0xff]
    %v201 = vld [vmem:[#allocation2 + $0x2a8] sm:$0xff]
    %v202 = vld [vmem:[#allocation2 + $0x2b0] sm:$0xff]
    %v203 = vld [vmem:[#allocation2 + $0x2b8] sm:$0xff]
    %v204 = vld [vmem:[#allocation2 + $0x2c0] sm:$0xff]
    %v205 = vld [vmem:[#allocation2 + $0x2c8] sm:$0xff]
    %v206 = vld [vmem:[#allocation2 + $0x2d0] sm:$0xff]
    %v207 = vld [vmem:[#allocation2 + $0x2d8] sm:$0xff]
    %v208 = vld [vmem:[#allocation2 + $0x2e0] sm:$0xff]
    %v209 = vld [vmem:[#allocation2 + $0x2e8] sm:$0xff]
    %v210 = vld [vmem:[#allocation2 + $0x2f0] sm:$0xff]
    %v211 = vld [vmem:[#allocation2 + $0x2f8] sm:$0xff]
    %v212 = vld [vmem:[#allocation2 + $0x300] sm:$0xff]
    %v213 = vld [vmem:[#allocation2 + $0x308] sm:$0xff]
    %v214 = vld [vmem:[#allocation2 + $0x310] sm:$0xff]
    %v215 = vld [vmem:[#allocation2 + $0x318] sm:$0xff]
    %v216 = vld [vmem:[#allocation2 + $0x320] sm:$0xff]
    %v217 = vld [vmem:[#allocation2 + $0x328] sm:$0xff]
    %v218 = vld [vmem:[#allocation2 + $0x330] sm:$0xff]
    %v219 = vld [vmem:[#allocation2 + $0x338] sm:$0xff]
    %v220 = vld [vmem:[#allocation2 + $0x340] sm:$0xff]
    %v221 = vld [vmem:[#allocation2 + $0x348] sm:$0xff]
    %v222 = vld [vmem:[#allocation2 + $0x350] sm:$0xff]
    %v223 = vld [vmem:[#allocation2 + $0x358] sm:$0xff]
    %v224 = vld [vmem:[#allocation2 + $0x360] sm:$0xff]
    %v225 = vld [vmem:[#allocation2 + $0x368] sm:$0xff]
    %v226 = vld [vmem:[#allocation2 + $0x370] sm:$0xff]
    %v227 = vld [vmem:[#allocation2 + $0x378] sm:$0xff]
    %v228 = vld [vmem:[#allocation2 + $0x380] sm:$0xff]
    %v229 = vld [vmem:[#allocation2 + $0x388] sm:$0xff]
    %v230 = vld [vmem:[#allocation2 + $0x390] sm:$0xff]
    %v231 = vld [vmem:[#allocation2 + $0x398] sm:$0xff]
    %v232 = vld [vmem:[#allocation2 + $0x3a0] sm:$0xff]
    %v233 = vld [vmem:[#allocation2 + $0x3a8] sm:$0xff]
    %v234 = vld [vmem:[#allocation2 + $0x3b0] sm:$0xff]
    %v235 = vld [vmem:[#allocation2 + $0x3b8] sm:$0xff]
    %v236 = vld [vmem:[#allocation2 + $0x3c0] sm:$0xff]
    %v237 = vld [vmem:[#allocation2 + $0x3c8] sm:$0xff]
    %v238 = vld [vmem:[#allocation2 + $0x3d0] sm:$0xff]
    %v239 = vld [vmem:[#allocation2 + $0x3d8] sm:$0xff]
    %v240 = vld [vmem:[#allocation2 + $0x3e0] sm:$0xff]
    %v241 = vld [vmem:[#allocation2 + $0x3e8] sm:$0xff]
    %v242 = vld [vmem:[#allocation2 + $0x3f0] sm:$0xff]
    %v243 = vld [vmem:[#allocation2 + $0x3f8] sm:$0xff]
    %v244 = vld [vmem:[%s1] sm:$0xff]
    %v245 = vld [vmem:[#allocation5] sm:$0xff]
    %v246 = vld [vmem:[#allocation5 + $0x8] sm:$0xff]
    %v247 = vld [vmem:[#allocation5 + $0x10] sm:$0xff]
    %v248 = vld [vmem:[#allocation5 + $0x18] sm:$0xff]
    %v249 = vld [vmem:[#allocation5 + $0x20] sm:$0xff]
    %v250 = vld [vmem:[#allocation5 + $0x28] sm:$0xff]
    %v251 = vld [vmem:[#allocation5 + $0x30] sm:$0xff]
    %v252 = vld [vmem:[#allocation5 + $0x38] sm:$0xff]
    %v253 = vld [vmem:[#allocation5 + $0x40] sm:$0xff]
    %v254 = vld [vmem:[#allocation5 + $0x48] sm:$0xff]
    %v255 = vld [vmem:[#allocation5 + $0x50] sm:$0xff]
    %v256 = vld [vmem:[#allocation5 + $0x58] sm:$0xff]
    %v257 = vld [vmem:[#allocation5 + $0x60] sm:$0xff]
    %v258 = vld [vmem:[#allocation5 + $0x68] sm:$0xff]
    %v259 = vld [vmem:[#allocation5 + $0x70] sm:$0xff]
    %v260 = vld [vmem:[#allocation5 + $0x78] sm:$0xff]
    %v261 = vld [vmem:[#allocation5 + $0x80] sm:$0xff]
    %v262 = vld [vmem:[#allocation5 + $0x88] sm:$0xff]
    %v263 = vld [vmem:[#allocation5 + $0x90] sm:$0xff]
    %v264 = vld [vmem:[#allocation5 + $0x98] sm:$0xff]
    %v265 = vld [vmem:[#allocation5 + $0xa0] sm:$0xff]
    %v266 = vld [vmem:[#allocation5 + $0xa8] sm:$0xff]
    %v267 = vld [vmem:[#allocation5 + $0xb0] sm:$0xff]
    %v268 = vld [vmem:[#allocation5 + $0xb8] sm:$0xff]
    %v269 = vld [vmem:[#allocation5 + $0xc0] sm:$0xff]
    %v270 = vld [vmem:[#allocation5 + $0xc8] sm:$0xff]
    %v271 = vld [vmem:[#allocation5 + $0xd0] sm:$0xff]
    %v272 = vld [vmem:[#allocation5 + $0xd8] sm:$0xff]
    %v273 = vld [vmem:[#allocation5 + $0xe0] sm:$0xff]
    %v274 = vld [vmem:[#allocation5 + $0xe8] sm:$0xff]
    %v275 = vld [vmem:[#allocation5 + $0xf0] sm:$0xff]
    %v276 = vld [vmem:[#allocation5 + $0xf8] sm:$0xff]
    %v277 = vld [vmem:[#allocation5 + $0x100] sm:$0xff]
    %v278 = vld [vmem:[#allocation5 + $0x108] sm:$0xff]
    %v279 = vld [vmem:[#allocation5 + $0x110] sm:$0xff]
    %v280 = vld [vmem:[#allocation5 + $0x118] sm:$0xff]
    %v281 = vld [vmem:[#allocation5 + $0x120] sm:$0xff]
    %v282 = vld [vmem:[#allocation5 + $0x128] sm:$0xff]
    %v283 = vld [vmem:[#allocation5 + $0x130] sm:$0xff]
    %v284 = vld [vmem:[#allocation5 + $0x138] sm:$0xff]
    %v285 = vld [vmem:[#allocation5 + $0x140] sm:$0xff]
    %v286 = vld [vmem:[#allocation5 + $0x148] sm:$0xff]
    %v287 = vld [vmem:[#allocation5 + $0x150] sm:$0xff]
    %v288 = vld [vmem:[#allocation5 + $0x158] sm:$0xff]
    %v289 = vld [vmem:[#allocation5 + $0x160] sm:$0xff]
    %v290 = vld [vmem:[#allocation5 + $0x168] sm:$0xff]
    %v291 = vld [vmem:[#allocation5 + $0x170] sm:$0xff]
    %v292 = vld [vmem:[#allocation5 + $0x178] sm:$0xff]
    %v293 = vld [vmem:[#allocation5 + $0x180] sm:$0xff]
    %v294 = vld [vmem:[#allocation5 + $0x188] sm:$0xff]
    %v295 = vld [vmem:[#allocation5 + $0x190] sm:$0xff]
    %v296 = vld [vmem:[#allocation5 + $0x198] sm:$0xff]
    %v297 = vld [vmem:[#allocation5 + $0x1a0] sm:$0xff]
    %v298 = vld [vmem:[#allocation5 + $0x1a8] sm:$0xff]
    %v299 = vld [vmem:[#allocation5 + $0x1b0] sm:$0xff]
    %v300 = vld [vmem:[#allocation5 + $0x1b8] sm:$0xff]
    %v301 = vld [vmem:[#allocation5 + $0x1c0] sm:$0xff]
    %v302 = vld [vmem:[#allocation5 + $0x1c8] sm:$0xff]
    %v303 = vld [vmem:[#allocation5 + $0x1d0] sm:$0xff]
    %v304 = vld [vmem:[#allocation5 + $0x1d8] sm:$0xff]
    %v305 = vld [vmem:[#allocation5 + $0x1e0] sm:$0xff]
    %v306 = vld [vmem:[#allocation5 + $0x1e8] sm:$0xff]
    %v307 = vld [vmem:[#allocation5 + $0x1f0] sm:$0xff]
    %v308 = vld [vmem:[#allocation5 + $0x1f8] sm:$0xff]
    %v310 = vunpack.c.l.b16 %v244
    %v311 = vunpack.c.h.b16 %v244
    %v312 = vpack.c.b16 %v310, %v310
    %v313 = vpack.c.b16 %v311, %v311
    %v380 = vunpack.c.l.b16 %v245
    %v381 = vunpack.c.h.b16 %v245
    %v382 = vunpack.c.l.b16 %v246
    %v383 = vunpack.c.h.b16 %v246
    %v384 = vunpack.c.l.b16 %v247
    %v385 = vunpack.c.h.b16 %v247
    %v386 = vunpack.c.l.b16 %v248
    %v387 = vunpack.c.h.b16 %v248
    %v388 = vunpack.c.l.b16 %v249
    %v389 = vunpack.c.h.b16 %v249
    %v390 = vunpack.c.l.b16 %v250
    %v391 = vunpack.c.h.b16 %v250
    %v392 = vunpack.c.l.b16 %v251
    %v393 = vunpack.c.h.b16 %v251
    %v394 = vunpack.c.l.b16 %v252
    %v395 = vunpack.c.h.b16 %v252
    %v396 = vunpack.c.l.b16 %v253
    %v397 = vunpack.c.h.b16 %v253
    %v398 = vunpack.c.l.b16 %v254
    %v399 = vunpack.c.h.b16 %v254
    %v400 = vunpack.c.l.b16 %v255
    %v401 = vunpack.c.h.b16 %v255
    %v402 = vunpack.c.l.b16 %v256
    %v403 = vunpack.c.h.b16 %v256
    %v404 = vunpack.c.l.b16 %v257
    %v405 = vunpack.c.h.b16 %v257
    %v406 = vunpack.c.l.b16 %v258
    %v407 = vunpack.c.h.b16 %v258
    %v408 = vunpack.c.l.b16 %v259
    %v409 = vunpack.c.h.b16 %v259
    %v410 = vunpack.c.l.b16 %v260
    %v411 = vunpack.c.h.b16 %v260
    %v412 = vunpack.c.l.b16 %v261
    %v413 = vunpack.c.h.b16 %v261
    %v414 = vunpack.c.l.b16 %v262
    %v415 = vunpack.c.h.b16 %v262
    %v416 = vunpack.c.l.b16 %v263
    %v417 = vunpack.c.h.b16 %v263
    %v418 = vunpack.c.l.b16 %v264
    %v419 = vunpack.c.h.b16 %v264
    %v420 = vunpack.c.l.b16 %v265
    %v421 = vunpack.c.h.b16 %v265
    %v422 = vunpack.c.l.b16 %v266
    %v423 = vunpack.c.h.b16 %v266
    %v424 = vunpack.c.l.b16 %v267
    %v425 = vunpack.c.h.b16 %v267
    %v426 = vunpack.c.l.b16 %v268
    %v427 = vunpack.c.h.b16 %v268
    %v428 = vunpack.c.l.b16 %v269
    %v429 = vunpack.c.h.b16 %v269
    %v430 = vunpack.c.l.b16 %v270
    %v431 = vunpack.c.h.b16 %v270
    %v432 = vunpack.c.l.b16 %v271
    %v433 = vunpack.c.h.b16 %v271
    %v434 = vunpack.c.l.b16 %v272
    %v435 = vunpack.c.h.b16 %v272
    %v436 = vunpack.c.l.b16 %v273
    %v437 = vunpack.c.h.b16 %v273
    %v438 = vunpack.c.l.b16 %v274
    %v439 = vunpack.c.h.b16 %v274
    %v440 = vunpack.c.l.b16 %v275
    %v441 = vunpack.c.h.b16 %v275
    %v442 = vunpack.c.l.b16 %v276
    %v443 = vunpack.c.h.b16 %v276
    %v444 = vunpack.c.l.b16 %v277
    %v445 = vunpack.c.h.b16 %v277
    %v446 = vunpack.c.l.b16 %v278
    %v447 = vunpack.c.h.b16 %v278
    %v448 = vunpack.c.l.b16 %v279
    %v449 = vunpack.c.h.b16 %v279
    %v450 = vunpack.c.l.b16 %v280
    %v451 = vunpack.c.h.b16 %v280
    %v452 = vunpack.c.l.b16 %v281
    %v453 = vunpack.c.h.b16 %v281
    %v454 = vunpack.c.l.b16 %v282
    %v455 = vunpack.c.h.b16 %v282
    %v456 = vunpack.c.l.b16 %v283
    %v457 = vunpack.c.h.b16 %v283
    %v458 = vunpack.c.l.b16 %v284
    %v459 = vunpack.c.h.b16 %v284
    %v460 = vunpack.c.l.b16 %v285
    %v461 = vunpack.c.h.b16 %v285
    %v462 = vunpack.c.l.b16 %v286
    %v463 = vunpack.c.h.b16 %v286
    %v464 = vunpack.c.l.b16 %v287
    %v465 = vunpack.c.h.b16 %v287
    %v466 = vunpack.c.l.b16 %v288
    %v467 = vunpack.c.h.b16 %v288
    %v468 = vunpack.c.l.b16 %v289
    %v469 = vunpack.c.h.b16 %v289
    %v470 = vunpack.c.l.b16 %v290
    %v471 = vunpack.c.h.b16 %v290
    %v472 = vunpack.c.l.b16 %v291
    %v473 = vunpack.c.h.b16 %v291
    %v474 = vunpack.c.l.b16 %v292
    %v475 = vunpack.c.h.b16 %v292
    %v476 = vunpack.c.l.b16 %v293
    %v477 = vunpack.c.h.b16 %v293
    %v478 = vunpack.c.l.b16 %v294
    %v479 = vunpack.c.h.b16 %v294
    %v480 = vunpack.c.l.b16 %v295
    %v481 = vunpack.c.h.b16 %v295
    %v482 = vunpack.c.l.b16 %v296
    %v483 = vunpack.c.h.b16 %v296
    %v484 = vunpack.c.l.b16 %v297
    %v485 = vunpack.c.h.b16 %v297
    %v486 = vunpack.c.l.b16 %v298
    %v487 = vunpack.c.h.b16 %v298
    %v488 = vunpack.c.l.b16 %v299
    %v489 = vunpack.c.h.b16 %v299
    %v490 = vunpack.c.l.b16 %v300
    %v491 = vunpack.c.h.b16 %v300
    %v492 = vunpack.c.l.b16 %v301
    %v493 = vunpack.c.h.b16 %v301
    %v494 = vunpack.c.l.b16 %v302
    %v495 = vunpack.c.h.b16 %v302
    %v496 = vunpack.c.l.b16 %v303
    %v497 = vunpack.c.h.b16 %v303
    %v498 = vunpack.c.l.b16 %v304
    %v499 = vunpack.c.h.b16 %v304
    %v500 = vunpack.c.l.b16 %v305
    %v501 = vunpack.c.h.b16 %v305
    %v502 = vunpack.c.l.b16 %v306
    %v503 = vunpack.c.h.b16 %v306
    %v504 = vunpack.c.l.b16 %v307
    %v505 = vunpack.c.h.b16 %v307
    %v506 = vunpack.c.l.b16 %v308
    %v507 = vunpack.c.h.b16 %v308
    %v508 = vpack.c.b16 %v384, %v380
    %v509 = vpack.c.b16 %v385, %v381
    %v510 = vpack.c.b16 %v386, %v382
    %v511 = vpack.c.b16 %v387, %v383
    %v512 = vpack.c.b16 %v392, %v388
    %v513 = vpack.c.b16 %v393, %v389
    %v514 = vpack.c.b16 %v394, %v390
    %v515 = vpack.c.b16 %v395, %v391
    %v516 = vpack.c.b16 %v400, %v396
    %v517 = vpack.c.b16 %v401, %v397
    %v518 = vpack.c.b16 %v402, %v398
    %v519 = vpack.c.b16 %v403, %v399
    %v520 = vpack.c.b16 %v408, %v404
    %v521 = vpack.c.b16 %v409, %v405
    %v522 = vpack.c.b16 %v410, %v406
    %v523 = vpack.c.b16 %v411, %v407
    %v524 = vpack.c.b16 %v416, %v412
    %v525 = vpack.c.b16 %v417, %v413
    %v526 = vpack.c.b16 %v418, %v414
    %v527 = vpack.c.b16 %v419, %v415
    %v528 = vpack.c.b16 %v424, %v420
    %v529 = vpack.c.b16 %v425, %v421
    %v530 = vpack.c.b16 %v426, %v422
    %v531 = vpack.c.b16 %v427, %v423
    %v532 = vpack.c.b16 %v432, %v428
    %v533 = vpack.c.b16 %v433, %v429
    %v534 = vpack.c.b16 %v434, %v430
    %v535 = vpack.c.b16 %v435, %v431
    %v536 = vpack.c.b16 %v440, %v436
    %v537 = vpack.c.b16 %v441, %v437
    %v538 = vpack.c.b16 %v442, %v438
    %v539 = vpack.c.b16 %v443, %v439
    %v540 = vpack.c.b16 %v448, %v444
    %v541 = vpack.c.b16 %v449, %v445
    %v542 = vpack.c.b16 %v450, %v446
    %v543 = vpack.c.b16 %v451, %v447
    %v544 = vpack.c.b16 %v456, %v452
    %v545 = vpack.c.b16 %v457, %v453
    %v546 = vpack.c.b16 %v458, %v454
    %v547 = vpack.c.b16 %v459, %v455
    %v548 = vpack.c.b16 %v464, %v460
    %v549 = vpack.c.b16 %v465, %v461
    %v550 = vpack.c.b16 %v466, %v462
    %v551 = vpack.c.b16 %v467, %v463
    %v552 = vpack.c.b16 %v472, %v468
    %v553 = vpack.c.b16 %v473, %v469
    %v554 = vpack.c.b16 %v474, %v470
    %v555 = vpack.c.b16 %v475, %v471
    %v556 = vpack.c.b16 %v480, %v476
    %v557 = vpack.c.b16 %v481, %v477
    %v558 = vpack.c.b16 %v482, %v478
    %v559 = vpack.c.b16 %v483, %v479
    %v560 = vpack.c.b16 %v488, %v484
    %v561 = vpack.c.b16 %v489, %v485
    %v562 = vpack.c.b16 %v490, %v486
    %v563 = vpack.c.b16 %v491, %v487
    %v564 = vpack.c.b16 %v496, %v492
    %v565 = vpack.c.b16 %v497, %v493
    %v566 = vpack.c.b16 %v498, %v494
    %v567 = vpack.c.b16 %v499, %v495
    %v568 = vpack.c.b16 %v504, %v500
    %v569 = vpack.c.b16 %v505, %v501
    %v570 = vpack.c.b16 %v506, %v502
    %v571 = vpack.c.b16 %v507, %v503
    %636 = vmatpush.bf16.msra.mxu0 %v536
    %637 = vmatpush.bf16.msra.mxu0 %v532
    %638 = vmatpush.bf16.msra.mxu0 %v528
    %639 = vmatpush.bf16.msra.mxu0 %v524
    %640 = vmatpush.bf16.msra.mxu0 %v520
    %641 = vmatpush.bf16.msra.mxu0 %v516
    %642 = vmatpush.bf16.msra.mxu0 %v512
    %643 = vmatpush.bf16.msra.mxu0 %v508
    %644 = vmatmul.bf16.gmra.mxu0 %v312
    %v645 = vpop.f32.mrf.mxu0
    %v646 = vadd.f32 0.0, %v645
    %v647 = vpop.f32.mrf.mxu0
    %648 = vdwg.mxu0
    %649 = vmatpush.bf16.msra.mxu0 %v568
    %650 = vmatpush.bf16.msra.mxu0 %v564
    %651 = vmatpush.bf16.msra.mxu0 %v560
    %652 = vmatpush.bf16.msra.mxu0 %v556
    %653 = vmatpush.bf16.msra.mxu0 %v552
    %654 = vmatpush.bf16.msra.mxu0 %v548
    %655 = vmatpush.bf16.msra.mxu0 %v544
    %656 = vmatpush.bf16.msra.mxu0 %v540
    %657 = vmatmul.bf16.gmra.mxu0 %v313
    %v658 = vpop.f32.mrf.mxu0
    %v659 = vadd.f32 %v646, %v658
    %v660 = vpop.f32.mrf.mxu0
    %661 = vdwg.mxu0
    %662 = vmatpush.bf16.msra.mxu0 %v537
    %663 = vmatpush.bf16.msra.mxu0 %v533
    %664 = vmatpush.bf16.msra.mxu0 %v529
    %665 = vmatpush.bf16.msra.mxu0 %v525
    %666 = vmatpush.bf16.msra.mxu0 %v521
    %667 = vmatpush.bf16.msra.mxu0 %v517
    %668 = vmatpush.bf16.msra.mxu0 %v513
    %669 = vmatpush.bf16.msra.mxu0 %v509
    %670 = vmatmul.bf16.gmra.mxu0 %v312
    %v671 = vpop.f32.mrf.mxu0
    %v672 = vadd.f32 0.0, %v671
    %v673 = vpop.f32.mrf.mxu0
    %674 = vdwg.mxu0
    %675 = vmatpush.bf16.msra.mxu0 %v569
    %676 = vmatpush.bf16.msra.mxu0 %v565
    %677 = vmatpush.bf16.msra.mxu0 %v561
    %678 = vmatpush.bf16.msra.mxu0 %v557
    %679 = vmatpush.bf16.msra.mxu0 %v553
    %680 = vmatpush.bf16.msra.mxu0 %v549
    %681 = vmatpush.bf16.msra.mxu0 %v545
    %682 = vmatpush.bf16.msra.mxu0 %v541
    %683 = vmatmul.bf16.gmra.mxu0 %v313
    %v684 = vpop.f32.mrf.mxu0
    %v685 = vadd.f32 %v672, %v684
    %v686 = vpop.f32.mrf.mxu0
    %687 = vdwg.mxu0
    %688 = vmatpush.bf16.msra.mxu0 %v538
    %689 = vmatpush.bf16.msra.mxu0 %v534
    %690 = vmatpush.bf16.msra.mxu0 %v530
    %691 = vmatpush.bf16.msra.mxu0 %v526
    %692 = vmatpush.bf16.msra.mxu0 %v522
    %693 = vmatpush.bf16.msra.mxu0 %v518
    %694 = vmatpush.bf16.msra.mxu0 %v514
    %695 = vmatpush.bf16.msra.mxu0 %v510
    %696 = vmatmul.bf16.gmra.mxu0 %v312
    %v697 = vpop.f32.mrf.mxu0
    %v698 = vadd.f32 0.0, %v697
    %v699 = vpop.f32.mrf.mxu0
    %700 = vdwg.mxu0
    %701 = vmatpush.bf16.msra.mxu0 %v570
    %702 = vmatpush.bf16.msra.mxu0 %v566
    %703 = vmatpush.bf16.msra.mxu0 %v562
    %704 = vmatpush.bf16.msra.mxu0 %v558
    %705 = vmatpush.bf16.msra.mxu0 %v554
    %706 = vmatpush.bf16.msra.mxu0 %v550
    %707 = vmatpush.bf16.msra.mxu0 %v546
    %708 = vmatpush.bf16.msra.mxu0 %v542
    %709 = vmatmul.bf16.gmra.mxu0 %v313
    %v710 = vpop.f32.mrf.mxu0
    %v711 = vadd.f32 %v698, %v710
    %v712 = vpop.f32.mrf.mxu0
    %713 = vdwg.mxu0
    %714 = vmatpush.bf16.msra.mxu0 %v539
    %715 = vmatpush.bf16.msra.mxu0 %v535
    %716 = vmatpush.bf16.msra.mxu0 %v531
    %717 = vmatpush.bf16.msra.mxu0 %v527
    %718 = vmatpush.bf16.msra.mxu0 %v523
    %719 = vmatpush.bf16.msra.mxu0 %v519
    %720 = vmatpush.bf16.msra.mxu0 %v515
    %721 = vmatpush.bf16.msra.mxu0 %v511
    %722 = vmatmul.bf16.gmra.mxu0 %v312
    %v723 = vpop.f32.mrf.mxu0
    %v724 = vadd.f32 0.0, %v723
    %v725 = vpop.f32.mrf.mxu0
    %726 = vdwg.mxu0
    %727 = vmatpush.bf16.msra.mxu0 %v571
    %728 = vmatpush.bf16.msra.mxu0 %v567
    %729 = vmatpush.bf16.msra.mxu0 %v563
    %730 = vmatpush.bf16.msra.mxu0 %v559
    %731 = vmatpush.bf16.msra.mxu0 %v555
    %732 = vmatpush.bf16.msra.mxu0 %v551
    %733 = vmatpush.bf16.msra.mxu0 %v547
    %734 = vmatpush.bf16.msra.mxu0 %v543
    %735 = vmatmul.bf16.gmra.mxu0 %v313
    %v736 = vpop.f32.mrf.mxu0
    %v737 = vadd.f32 %v724, %v736
    %v738 = vpop.f32.mrf.mxu0
    %739 = vdwg.mxu0
    %v868 = vunpack.c.l.b16 %v116
    %v869 = vunpack.c.h.b16 %v116
    %v870 = vunpack.c.l.b16 %v117
    %v871 = vunpack.c.h.b16 %v117
    %v872 = vunpack.c.l.b16 %v118
    %v873 = vunpack.c.h.b16 %v118
    %v874 = vunpack.c.l.b16 %v119
    %v875 = vunpack.c.h.b16 %v119
    %v876 = vunpack.c.l.b16 %v120
    %v877 = vunpack.c.h.b16 %v120
    %v878 = vunpack.c.l.b16 %v121
    %v879 = vunpack.c.h.b16 %v121
    %v880 = vunpack.c.l.b16 %v122
    %v881 = vunpack.c.h.b16 %v122
    %v882 = vunpack.c.l.b16 %v123
    %v883 = vunpack.c.h.b16 %v123
    %v884 = vunpack.c.l.b16 %v124
    %v885 = vunpack.c.h.b16 %v124
    %v886 = vunpack.c.l.b16 %v125
    %v887 = vunpack.c.h.b16 %v125
    %v888 = vunpack.c.l.b16 %v126
    %v889 = vunpack.c.h.b16 %v126
    %v890 = vunpack.c.l.b16 %v127
    %v891 = vunpack.c.h.b16 %v127
    %v892 = vunpack.c.l.b16 %v128
    %v893 = vunpack.c.h.b16 %v128
    %v894 = vunpack.c.l.b16 %v129
    %v895 = vunpack.c.h.b16 %v129
    %v896 = vunpack.c.l.b16 %v130
    %v897 = vunpack.c.h.b16 %v130
    %v898 = vunpack.c.l.b16 %v131
    %v899 = vunpack.c.h.b16 %v131
    %v900 = vunpack.c.l.b16 %v132
    %v901 = vunpack.c.h.b16 %v132
    %v902 = vunpack.c.l.b16 %v133
    %v903 = vunpack.c.h.b16 %v133
    %v904 = vunpack.c.l.b16 %v134
    %v905 = vunpack.c.h.b16 %v134
    %v906 = vunpack.c.l.b16 %v135
    %v907 = vunpack.c.h.b16 %v135
    %v908 = vunpack.c.l.b16 %v136
    %v909 = vunpack.c.h.b16 %v136
    %v910 = vunpack.c.l.b16 %v137
    %v911 = vunpack.c.h.b16 %v137
    %v912 = vunpack.c.l.b16 %v138
    %v913 = vunpack.c.h.b16 %v138
    %v914 = vunpack.c.l.b16 %v139
    %v915 = vunpack.c.h.b16 %v139
    %v916 = vunpack.c.l.b16 %v140
    %v917 = vunpack.c.h.b16 %v140
    %v918 = vunpack.c.l.b16 %v141
    %v919 = vunpack.c.h.b16 %v141
    %v920 = vunpack.c.l.b16 %v142
    %v921 = vunpack.c.h.b16 %v142
    %v922 = vunpack.c.l.b16 %v143
    %v923 = vunpack.c.h.b16 %v143
    %v924 = vunpack.c.l.b16 %v144
    %v925 = vunpack.c.h.b16 %v144
    %v926 = vunpack.c.l.b16 %v145
    %v927 = vunpack.c.h.b16 %v145
    %v928 = vunpack.c.l.b16 %v146
    %v929 = vunpack.c.h.b16 %v146
    %v930 = vunpack.c.l.b16 %v147
    %v931 = vunpack.c.h.b16 %v147
    %v932 = vunpack.c.l.b16 %v148
    %v933 = vunpack.c.h.b16 %v148
    %v934 = vunpack.c.l.b16 %v149
    %v935 = vunpack.c.h.b16 %v149
    %v936 = vunpack.c.l.b16 %v150
    %v937 = vunpack.c.h.b16 %v150
    %v938 = vunpack.c.l.b16 %v151
    %v939 = vunpack.c.h.b16 %v151
    %v940 = vunpack.c.l.b16 %v152
    %v941 = vunpack.c.h.b16 %v152
    %v942 = vunpack.c.l.b16 %v153
    %v943 = vunpack.c.h.b16 %v153
    %v944 = vunpack.c.l.b16 %v154
    %v945 = vunpack.c.h.b16 %v154
    %v946 = vunpack.c.l.b16 %v155
    %v947 = vunpack.c.h.b16 %v155
    %v948 = vunpack.c.l.b16 %v156
    %v949 = vunpack.c.h.b16 %v156
    %v950 = vunpack.c.l.b16 %v157
    %v951 = vunpack.c.h.b16 %v157
    %v952 = vunpack.c.l.b16 %v158
    %v953 = vunpack.c.h.b16 %v158
    %v954 = vunpack.c.l.b16 %v159
    %v955 = vunpack.c.h.b16 %v159
    %v956 = vunpack.c.l.b16 %v160
    %v957 = vunpack.c.h.b16 %v160
    %v958 = vunpack.c.l.b16 %v161
    %v959 = vunpack.c.h.b16 %v161
    %v960 = vunpack.c.l.b16 %v162
    %v961 = vunpack.c.h.b16 %v162
    %v962 = vunpack.c.l.b16 %v163
    %v963 = vunpack.c.h.b16 %v163
    %v964 = vunpack.c.l.b16 %v164
    %v965 = vunpack.c.h.b16 %v164
    %v966 = vunpack.c.l.b16 %v165
    %v967 = vunpack.c.h.b16 %v165
    %v968 = vunpack.c.l.b16 %v166
    %v969 = vunpack.c.h.b16 %v166
    %v970 = vunpack.c.l.b16 %v167
    %v971 = vunpack.c.h.b16 %v167
    %v972 = vunpack.c.l.b16 %v168
    %v973 = vunpack.c.h.b16 %v168
    %v974 = vunpack.c.l.b16 %v169
    %v975 = vunpack.c.h.b16 %v169
    %v976 = vunpack.c.l.b16 %v170
    %v977 = vunpack.c.h.b16 %v170
    %v978 = vunpack.c.l.b16 %v171
    %v979 = vunpack.c.h.b16 %v171
    %v980 = vunpack.c.l.b16 %v172
    %v981 = vunpack.c.h.b16 %v172
    %v982 = vunpack.c.l.b16 %v173
    %v983 = vunpack.c.h.b16 %v173
    %v984 = vunpack.c.l.b16 %v174
    %v985 = vunpack.c.h.b16 %v174
    %v986 = vunpack.c.l.b16 %v175
    %v987 = vunpack.c.h.b16 %v175
    %v988 = vunpack.c.l.b16 %v176
    %v989 = vunpack.c.h.b16 %v176
    %v990 = vunpack.c.l.b16 %v177
    %v991 = vunpack.c.h.b16 %v177
    %v992 = vunpack.c.l.b16 %v178
    %v993 = vunpack.c.h.b16 %v178
    %v994 = vunpack.c.l.b16 %v179
    %v995 = vunpack.c.h.b16 %v179
    %v996 = vunpack.c.l.b16 %v180
    %v997 = vunpack.c.h.b16 %v180
    %v998 = vunpack.c.l.b16 %v181
    %v999 = vunpack.c.h.b16 %v181
    %v1000 = vunpack.c.l.b16 %v182
    %v1001 = vunpack.c.h.b16 %v182
    %v1002 = vunpack.c.l.b16 %v183
    %v1003 = vunpack.c.h.b16 %v183
    %v1004 = vunpack.c.l.b16 %v184
    %v1005 = vunpack.c.h.b16 %v184
    %v1006 = vunpack.c.l.b16 %v185
    %v1007 = vunpack.c.h.b16 %v185
    %v1008 = vunpack.c.l.b16 %v186
    %v1009 = vunpack.c.h.b16 %v186
    %v1010 = vunpack.c.l.b16 %v187
    %v1011 = vunpack.c.h.b16 %v187
    %v1012 = vunpack.c.l.b16 %v188
    %v1013 = vunpack.c.h.b16 %v188
    %v1014 = vunpack.c.l.b16 %v189
    %v1015 = vunpack.c.h.b16 %v189
    %v1016 = vunpack.c.l.b16 %v190
    %v1017 = vunpack.c.h.b16 %v190
    %v1018 = vunpack.c.l.b16 %v191
    %v1019 = vunpack.c.h.b16 %v191
    %v1020 = vunpack.c.l.b16 %v192
    %v1021 = vunpack.c.h.b16 %v192
    %v1022 = vunpack.c.l.b16 %v193
    %v1023 = vunpack.c.h.b16 %v193
    %v1024 = vunpack.c.l.b16 %v194
    %v1025 = vunpack.c.h.b16 %v194
    %v1026 = vunpack.c.l.b16 %v195
    %v1027 = vunpack.c.h.b16 %v195
    %v1028 = vunpack.c.l.b16 %v196
    %v1029 = vunpack.c.h.b16 %v196
    %v1030 = vunpack.c.l.b16 %v197
    %v1031 = vunpack.c.h.b16 %v197
    %v1032 = vunpack.c.l.b16 %v198
    %v1033 = vunpack.c.h.b16 %v198
    %v1034 = vunpack.c.l.b16 %v199
    %v1035 = vunpack.c.h.b16 %v199
    %v1036 = vunpack.c.l.b16 %v200
    %v1037 = vunpack.c.h.b16 %v200
    %v1038 = vunpack.c.l.b16 %v201
    %v1039 = vunpack.c.h.b16 %v201
    %v1040 = vunpack.c.l.b16 %v202
    %v1041 = vunpack.c.h.b16 %v202
    %v1042 = vunpack.c.l.b16 %v203
    %v1043 = vunpack.c.h.b16 %v203
    %v1044 = vunpack.c.l.b16 %v204
    %v1045 = vunpack.c.h.b16 %v204
    %v1046 = vunpack.c.l.b16 %v205
    %v1047 = vunpack.c.h.b16 %v205
    %v1048 = vunpack.c.l.b16 %v206
    %v1049 = vunpack.c.h.b16 %v206
    %v1050 = vunpack.c.l.b16 %v207
    %v1051 = vunpack.c.h.b16 %v207
    %v1052 = vunpack.c.l.b16 %v208
    %v1053 = vunpack.c.h.b16 %v208
    %v1054 = vunpack.c.l.b16 %v209
    %v1055 = vunpack.c.h.b16 %v209
    %v1056 = vunpack.c.l.b16 %v210
    %v1057 = vunpack.c.h.b16 %v210
    %v1058 = vunpack.c.l.b16 %v211
    %v1059 = vunpack.c.h.b16 %v211
    %v1060 = vunpack.c.l.b16 %v212
    %v1061 = vunpack.c.h.b16 %v212
    %v1062 = vunpack.c.l.b16 %v213
    %v1063 = vunpack.c.h.b16 %v213
    %v1064 = vunpack.c.l.b16 %v214
    %v1065 = vunpack.c.h.b16 %v214
    %v1066 = vunpack.c.l.b16 %v215
    %v1067 = vunpack.c.h.b16 %v215
    %v1068 = vunpack.c.l.b16 %v216
    %v1069 = vunpack.c.h.b16 %v216
    %v1070 = vunpack.c.l.b16 %v217
    %v1071 = vunpack.c.h.b16 %v217
    %v1072 = vunpack.c.l.b16 %v218
    %v1073 = vunpack.c.h.b16 %v218
    %v1074 = vunpack.c.l.b16 %v219
    %v1075 = vunpack.c.h.b16 %v219
    %v1076 = vunpack.c.l.b16 %v220
    %v1077 = vunpack.c.h.b16 %v220
    %v1078 = vunpack.c.l.b16 %v221
    %v1079 = vunpack.c.h.b16 %v221
    %v1080 = vunpack.c.l.b16 %v222
    %v1081 = vunpack.c.h.b16 %v222
    %v1082 = vunpack.c.l.b16 %v223
    %v1083 = vunpack.c.h.b16 %v223
    %v1084 = vunpack.c.l.b16 %v224
    %v1085 = vunpack.c.h.b16 %v224
    %v1086 = vunpack.c.l.b16 %v225
    %v1087 = vunpack.c.h.b16 %v225
    %v1088 = vunpack.c.l.b16 %v226
    %v1089 = vunpack.c.h.b16 %v226
    %v1090 = vunpack.c.l.b16 %v227
    %v1091 = vunpack.c.h.b16 %v227
    %v1092 = vunpack.c.l.b16 %v228
    %v1093 = vunpack.c.h.b16 %v228
    %v1094 = vunpack.c.l.b16 %v229
    %v1095 = vunpack.c.h.b16 %v229
    %v1096 = vunpack.c.l.b16 %v230
    %v1097 = vunpack.c.h.b16 %v230
    %v1098 = vunpack.c.l.b16 %v231
    %v1099 = vunpack.c.h.b16 %v231
    %v1100 = vunpack.c.l.b16 %v232
    %v1101 = vunpack.c.h.b16 %v232
    %v1102 = vunpack.c.l.b16 %v233
    %v1103 = vunpack.c.h.b16 %v233
    %v1104 = vunpack.c.l.b16 %v234
    %v1105 = vunpack.c.h.b16 %v234
    %v1106 = vunpack.c.l.b16 %v235
    %v1107 = vunpack.c.h.b16 %v235
    %v1108 = vunpack.c.l.b16 %v236
    %v1109 = vunpack.c.h.b16 %v236
    %v1110 = vunpack.c.l.b16 %v237
    %v1111 = vunpack.c.h.b16 %v237
    %v1112 = vunpack.c.l.b16 %v238
    %v1113 = vunpack.c.h.b16 %v238
    %v1114 = vunpack.c.l.b16 %v239
    %v1115 = vunpack.c.h.b16 %v239
    %v1116 = vunpack.c.l.b16 %v240
    %v1117 = vunpack.c.h.b16 %v240
    %v1118 = vunpack.c.l.b16 %v241
    %v1119 = vunpack.c.h.b16 %v241
    %v1120 = vunpack.c.l.b16 %v242
    %v1121 = vunpack.c.h.b16 %v242
    %v1122 = vunpack.c.l.b16 %v243
    %v1123 = vunpack.c.h.b16 %v243
    %v1124 = vpack.c.b16 %v872, %v868
    %v1125 = vpack.c.b16 %v873, %v869
    %v1126 = vpack.c.b16 %v874, %v870
    %v1127 = vpack.c.b16 %v875, %v871
    %v1128 = vpack.c.b16 %v880, %v876
    %v1129 = vpack.c.b16 %v881, %v877
    %v1130 = vpack.c.b16 %v882, %v878
    %v1131 = vpack.c.b16 %v883, %v879
    %v1132 = vpack.c.b16 %v888, %v884
    %v1133 = vpack.c.b16 %v889, %v885
    %v1134 = vpack.c.b16 %v890, %v886
    %v1135 = vpack.c.b16 %v891, %v887
    %v1136 = vpack.c.b16 %v896, %v892
    %v1137 = vpack.c.b16 %v897, %v893
    %v1138 = vpack.c.b16 %v898, %v894
    %v1139 = vpack.c.b16 %v899, %v895
    %v1140 = vpack.c.b16 %v904, %v900
    %v1141 = vpack.c.b16 %v905, %v901
    %v1142 = vpack.c.b16 %v906, %v902
    %v1143 = vpack.c.b16 %v907, %v903
    %v1144 = vpack.c.b16 %v912, %v908
    %v1145 = vpack.c.b16 %v913, %v909
    %v1146 = vpack.c.b16 %v914, %v910
    %v1147 = vpack.c.b16 %v915, %v911
    %v1148 = vpack.c.b16 %v920, %v916
    %v1149 = vpack.c.b16 %v921, %v917
    %v1150 = vpack.c.b16 %v922, %v918
    %v1151 = vpack.c.b16 %v923, %v919
    %v1152 = vpack.c.b16 %v928, %v924
    %v1153 = vpack.c.b16 %v929, %v925
    %v1154 = vpack.c.b16 %v930, %v926
    %v1155 = vpack.c.b16 %v931, %v927
    %v1156 = vpack.c.b16 %v936, %v932
    %v1157 = vpack.c.b16 %v937, %v933
    %v1158 = vpack.c.b16 %v938, %v934
    %v1159 = vpack.c.b16 %v939, %v935
    %v1160 = vpack.c.b16 %v944, %v940
    %v1161 = vpack.c.b16 %v945, %v941
    %v1162 = vpack.c.b16 %v946, %v942
    %v1163 = vpack.c.b16 %v947, %v943
    %v1164 = vpack.c.b16 %v952, %v948
    %v1165 = vpack.c.b16 %v953, %v949
    %v1166 = vpack.c.b16 %v954, %v950
    %v1167 = vpack.c.b16 %v955, %v951
    %v1168 = vpack.c.b16 %v960, %v956
    %v1169 = vpack.c.b16 %v961, %v957
    %v1170 = vpack.c.b16 %v962, %v958
    %v1171 = vpack.c.b16 %v963, %v959
    %v1172 = vpack.c.b16 %v968, %v964
    %v1173 = vpack.c.b16 %v969, %v965
    %v1174 = vpack.c.b16 %v970, %v966
    %v1175 = vpack.c.b16 %v971, %v967
    %v1176 = vpack.c.b16 %v976, %v972
    %v1177 = vpack.c.b16 %v977, %v973
    %v1178 = vpack.c.b16 %v978, %v974
    %v1179 = vpack.c.b16 %v979, %v975
    %v1180 = vpack.c.b16 %v984, %v980
    %v1181 = vpack.c.b16 %v985, %v981
    %v1182 = vpack.c.b16 %v986, %v982
    %v1183 = vpack.c.b16 %v987, %v983
    %v1184 = vpack.c.b16 %v992, %v988
    %v1185 = vpack.c.b16 %v993, %v989
    %v1186 = vpack.c.b16 %v994, %v990
    %v1187 = vpack.c.b16 %v995, %v991
    %v1188 = vpack.c.b16 %v1000, %v996
    %v1189 = vpack.c.b16 %v1001, %v997
    %v1190 = vpack.c.b16 %v1002, %v998
    %v1191 = vpack.c.b16 %v1003, %v999
    %v1192 = vpack.c.b16 %v1008, %v1004
    %v1193 = vpack.c.b16 %v1009, %v1005
    %v1194 = vpack.c.b16 %v1010, %v1006
    %v1195 = vpack.c.b16 %v1011, %v1007
    %v1196 = vpack.c.b16 %v1016, %v1012
    %v1197 = vpack.c.b16 %v1017, %v1013
    %v1198 = vpack.c.b16 %v1018, %v1014
    %v1199 = vpack.c.b16 %v1019, %v1015
    %v1200 = vpack.c.b16 %v1024, %v1020
    %v1201 = vpack.c.b16 %v1025, %v1021
    %v1202 = vpack.c.b16 %v1026, %v1022
    %v1203 = vpack.c.b16 %v1027, %v1023
    %v1204 = vpack.c.b16 %v1032, %v1028
    %v1205 = vpack.c.b16 %v1033, %v1029
    %v1206 = vpack.c.b16 %v1034, %v1030
    %v1207 = vpack.c.b16 %v1035, %v1031
    %v1208 = vpack.c.b16 %v1040, %v1036
    %v1209 = vpack.c.b16 %v1041, %v1037
    %v1210 = vpack.c.b16 %v1042, %v1038
    %v1211 = vpack.c.b16 %v1043, %v1039
    %v1212 = vpack.c.b16 %v1048, %v1044
    %v1213 = vpack.c.b16 %v1049, %v1045
    %v1214 = vpack.c.b16 %v1050, %v1046
    %v1215 = vpack.c.b16 %v1051, %v1047
    %v1216 = vpack.c.b16 %v1056, %v1052
    %v1217 = vpack.c.b16 %v1057, %v1053
    %v1218 = vpack.c.b16 %v1058, %v1054
    %v1219 = vpack.c.b16 %v1059, %v1055
    %v1220 = vpack.c.b16 %v1064, %v1060
    %v1221 = vpack.c.b16 %v1065, %v1061
    %v1222 = vpack.c.b16 %v1066, %v1062
    %v1223 = vpack.c.b16 %v1067, %v1063
    %v1224 = vpack.c.b16 %v1072, %v1068
    %v1225 = vpack.c.b16 %v1073, %v1069
    %v1226 = vpack.c.b16 %v1074, %v1070
    %v1227 = vpack.c.b16 %v1075, %v1071
    %v1228 = vpack.c.b16 %v1080, %v1076
    %v1229 = vpack.c.b16 %v1081, %v1077
    %v1230 = vpack.c.b16 %v1082, %v1078
    %v1231 = vpack.c.b16 %v1083, %v1079
    %v1232 = vpack.c.b16 %v1088, %v1084
    %v1233 = vpack.c.b16 %v1089, %v1085
    %v1234 = vpack.c.b16 %v1090, %v1086
    %v1235 = vpack.c.b16 %v1091, %v1087
    %v1236 = vpack.c.b16 %v1096, %v1092
    %v1237 = vpack.c.b16 %v1097, %v1093
    %v1238 = vpack.c.b16 %v1098, %v1094
    %v1239 = vpack.c.b16 %v1099, %v1095
    %v1240 = vpack.c.b16 %v1104, %v1100
    %v1241 = vpack.c.b16 %v1105, %v1101
    %v1242 = vpack.c.b16 %v1106, %v1102
    %v1243 = vpack.c.b16 %v1107, %v1103
    %v1244 = vpack.c.b16 %v1112, %v1108
    %v1245 = vpack.c.b16 %v1113, %v1109
    %v1246 = vpack.c.b16 %v1114, %v1110
    %v1247 = vpack.c.b16 %v1115, %v1111
    %v1248 = vpack.c.b16 %v1120, %v1116
    %v1249 = vpack.c.b16 %v1121, %v1117
    %v1250 = vpack.c.b16 %v1122, %v1118
    %v1251 = vpack.c.b16 %v1123, %v1119
    %1380 = vmatpush.bf16.msra.mxu0 %v1152
    %1381 = vmatpush.bf16.msra.mxu0 %v1148
    %1382 = vmatpush.bf16.msra.mxu0 %v1144
    %1383 = vmatpush.bf16.msra.mxu0 %v1140
    %1384 = vmatpush.bf16.msra.mxu0 %v1136
    %1385 = vmatpush.bf16.msra.mxu0 %v1132
    %1386 = vmatpush.bf16.msra.mxu0 %v1128
    %1387 = vmatpush.bf16.msra.mxu0 %v1124
    %1388 = vmatmul.bf16.gmra.mxu0 %v112
    %v1389 = vpop.f32.mrf.mxu0
    %v1390 = vadd.f32 %v659, %v1389
    %v1391 = vpop.f32.mrf.mxu0
    %1392 = vdwg.mxu0
    %1393 = vmatpush.bf16.msra.mxu0 %v1184
    %1394 = vmatpush.bf16.msra.mxu0 %v1180
    %1395 = vmatpush.bf16.msra.mxu0 %v1176
    %1396 = vmatpush.bf16.msra.mxu0 %v1172
    %1397 = vmatpush.bf16.msra.mxu0 %v1168
    %1398 = vmatpush.bf16.msra.mxu0 %v1164
    %1399 = vmatpush.bf16.msra.mxu0 %v1160
    %1400 = vmatpush.bf16.msra.mxu0 %v1156
    %1401 = vmatmul.bf16.gmra.mxu0 %v113
    %v1402 = vpop.f32.mrf.mxu0
    %v1403 = vadd.f32 %v1390, %v1402
    %v1404 = vpop.f32.mrf.mxu0
    %1405 = vdwg.mxu0
    %1406 = vmatpush.bf16.msra.mxu0 %v1216
    %1407 = vmatpush.bf16.msra.mxu0 %v1212
    %1408 = vmatpush.bf16.msra.mxu0 %v1208
    %1409 = vmatpush.bf16.msra.mxu0 %v1204
    %1410 = vmatpush.bf16.msra.mxu0 %v1200
    %1411 = vmatpush.bf16.msra.mxu0 %v1196
    %1412 = vmatpush.bf16.msra.mxu0 %v1192
    %1413 = vmatpush.bf16.msra.mxu0 %v1188
    %1414 = vmatmul.bf16.gmra.mxu0 %v114
    %v1415 = vpop.f32.mrf.mxu0
    %v1416 = vadd.f32 %v1403, %v1415
    %v1417 = vpop.f32.mrf.mxu0
    %1418 = vdwg.mxu0
    %1419 = vmatpush.bf16.msra.mxu0 %v1248
    %1420 = vmatpush.bf16.msra.mxu0 %v1244
    %1421 = vmatpush.bf16.msra.mxu0 %v1240
    %1422 = vmatpush.bf16.msra.mxu0 %v1236
    %1423 = vmatpush.bf16.msra.mxu0 %v1232
    %1424 = vmatpush.bf16.msra.mxu0 %v1228
    %1425 = vmatpush.bf16.msra.mxu0 %v1224
    %1426 = vmatpush.bf16.msra.mxu0 %v1220
    %1427 = vmatmul.bf16.gmra.mxu0 %v115
    %v1428 = vpop.f32.mrf.mxu0
    %v1429 = vadd.f32 %v1416, %v1428
    %v1430 = vpop.f32.mrf.mxu0
    %1431 = vdwg.mxu0
    %1432 = vmatpush.bf16.msra.mxu0 %v1153
    %1433 = vmatpush.bf16.msra.mxu0 %v1149
    %1434 = vmatpush.bf16.msra.mxu0 %v1145
    %1435 = vmatpush.bf16.msra.mxu0 %v1141
    %1436 = vmatpush.bf16.msra.mxu0 %v1137
    %1437 = vmatpush.bf16.msra.mxu0 %v1133
    %1438 = vmatpush.bf16.msra.mxu0 %v1129
    %1439 = vmatpush.bf16.msra.mxu0 %v1125
    %1440 = vmatmul.bf16.gmra.mxu0 %v112
    %v1441 = vpop.f32.mrf.mxu0
    %v1442 = vadd.f32 %v685, %v1441
    %v1443 = vpop.f32.mrf.mxu0
    %1444 = vdwg.mxu0
    %1445 = vmatpush.bf16.msra.mxu0 %v1185
    %1446 = vmatpush.bf16.msra.mxu0 %v1181
    %1447 = vmatpush.bf16.msra.mxu0 %v1177
    %1448 = vmatpush.bf16.msra.mxu0 %v1173
    %1449 = vmatpush.bf16.msra.mxu0 %v1169
    %1450 = vmatpush.bf16.msra.mxu0 %v1165
    %1451 = vmatpush.bf16.msra.mxu0 %v1161
    %1452 = vmatpush.bf16.msra.mxu0 %v1157
    %1453 = vmatmul.bf16.gmra.mxu0 %v113
    %v1454 = vpop.f32.mrf.mxu0
    %v1455 = vadd.f32 %v1442, %v1454
    %v1456 = vpop.f32.mrf.mxu0
    %1457 = vdwg.mxu0
    %1458 = vmatpush.bf16.msra.mxu0 %v1217
    %1459 = vmatpush.bf16.msra.mxu0 %v1213
    %1460 = vmatpush.bf16.msra.mxu0 %v1209
    %1461 = vmatpush.bf16.msra.mxu0 %v1205
    %1462 = vmatpush.bf16.msra.mxu0 %v1201
    %1463 = vmatpush.bf16.msra.mxu0 %v1197
    %1464 = vmatpush.bf16.msra.mxu0 %v1193
    %1465 = vmatpush.bf16.msra.mxu0 %v1189
    %1466 = vmatmul.bf16.gmra.mxu0 %v114
    %v1467 = vpop.f32.mrf.mxu0
    %v1468 = vadd.f32 %v1455, %v1467
    %v1469 = vpop.f32.mrf.mxu0
    %1470 = vdwg.mxu0
    %1471 = vmatpush.bf16.msra.mxu0 %v1249
    %1472 = vmatpush.bf16.msra.mxu0 %v1245
    %1473 = vmatpush.bf16.msra.mxu0 %v1241
    %1474 = vmatpush.bf16.msra.mxu0 %v1237
    %1475 = vmatpush.bf16.msra.mxu0 %v1233
    %1476 = vmatpush.bf16.msra.mxu0 %v1229
    %1477 = vmatpush.bf16.msra.mxu0 %v1225
    %1478 = vmatpush.bf16.msra.mxu0 %v1221
    %1479 = vmatmul.bf16.gmra.mxu0 %v115
    %v1480 = vpop.f32.mrf.mxu0
    %v1481 = vadd.f32 %v1468, %v1480
    %v1482 = vpop.f32.mrf.mxu0
    %1483 = vdwg.mxu0
    %1484 = vmatpush.bf16.msra.mxu0 %v1154
    %1485 = vmatpush.bf16.msra.mxu0 %v1150
    %1486 = vmatpush.bf16.msra.mxu0 %v1146
    %1487 = vmatpush.bf16.msra.mxu0 %v1142
    %1488 = vmatpush.bf16.msra.mxu0 %v1138
    %1489 = vmatpush.bf16.msra.mxu0 %v1134
    %1490 = vmatpush.bf16.msra.mxu0 %v1130
    %1491 = vmatpush.bf16.msra.mxu0 %v1126
    %1492 = vmatmul.bf16.gmra.mxu0 %v112
    %v1493 = vpop.f32.mrf.mxu0
    %v1494 = vadd.f32 %v711, %v1493
    %v1495 = vpop.f32.mrf.mxu0
    %1496 = vdwg.mxu0
    %1497 = vmatpush.bf16.msra.mxu0 %v1186
    %1498 = vmatpush.bf16.msra.mxu0 %v1182
    %1499 = vmatpush.bf16.msra.mxu0 %v1178
    %1500 = vmatpush.bf16.msra.mxu0 %v1174
    %1501 = vmatpush.bf16.msra.mxu0 %v1170
    %1502 = vmatpush.bf16.msra.mxu0 %v1166
    %1503 = vmatpush.bf16.msra.mxu0 %v1162
    %1504 = vmatpush.bf16.msra.mxu0 %v1158
    %1505 = vmatmul.bf16.gmra.mxu0 %v113
    %v1506 = vpop.f32.mrf.mxu0
    %v1507 = vadd.f32 %v1494, %v1506
    %v1508 = vpop.f32.mrf.mxu0
    %1509 = vdwg.mxu0
    %1510 = vmatpush.bf16.msra.mxu0 %v1218
    %1511 = vmatpush.bf16.msra.mxu0 %v1214
    %1512 = vmatpush.bf16.msra.mxu0 %v1210
    %1513 = vmatpush.bf16.msra.mxu0 %v1206
    %1514 = vmatpush.bf16.msra.mxu0 %v1202
    %1515 = vmatpush.bf16.msra.mxu0 %v1198
    %1516 = vmatpush.bf16.msra.mxu0 %v1194
    %1517 = vmatpush.bf16.msra.mxu0 %v1190
    %1518 = vmatmul.bf16.gmra.mxu0 %v114
    %v1519 = vpop.f32.mrf.mxu0
    %v1520 = vadd.f32 %v1507, %v1519
    %v1521 = vpop.f32.mrf.mxu0
    %1522 = vdwg.mxu0
    %1523 = vmatpush.bf16.msra.mxu0 %v1250
    %1524 = vmatpush.bf16.msra.mxu0 %v1246
    %1525 = vmatpush.bf16.msra.mxu0 %v1242
    %1526 = vmatpush.bf16.msra.mxu0 %v1238
    %1527 = vmatpush.bf16.msra.mxu0 %v1234
    %1528 = vmatpush.bf16.msra.mxu0 %v1230
    %1529 = vmatpush.bf16.msra.mxu0 %v1226
    %1530 = vmatpush.bf16.msra.mxu0 %v1222
    %1531 = vmatmul.bf16.gmra.mxu0 %v115
    %v1532 = vpop.f32.mrf.mxu0
    %v1533 = vadd.f32 %v1520, %v1532
    %v1534 = vpop.f32.mrf.mxu0
    %1535 = vdwg.mxu0
    %1536 = vmatpush.bf16.msra.mxu0 %v1155
    %1537 = vmatpush.bf16.msra.mxu0 %v1151
    %1538 = vmatpush.bf16.msra.mxu0 %v1147
    %1539 = vmatpush.bf16.msra.mxu0 %v1143
    %1540 = vmatpush.bf16.msra.mxu0 %v1139
    %1541 = vmatpush.bf16.msra.mxu0 %v1135
    %1542 = vmatpush.bf16.msra.mxu0 %v1131
    %1543 = vmatpush.bf16.msra.mxu0 %v1127
    %1544 = vmatmul.bf16.gmra.mxu0 %v112
    %v1545 = vpop.f32.mrf.mxu0
    %v1546 = vadd.f32 %v737, %v1545
    %v1547 = vpop.f32.mrf.mxu0
    %1548 = vdwg.mxu0
    %1549 = vmatpush.bf16.msra.mxu0 %v1187
    %1550 = vmatpush.bf16.msra.mxu0 %v1183
    %1551 = vmatpush.bf16.msra.mxu0 %v1179
    %1552 = vmatpush.bf16.msra.mxu0 %v1175
    %1553 = vmatpush.bf16.msra.mxu0 %v1171
    %1554 = vmatpush.bf16.msra.mxu0 %v1167
    %1555 = vmatpush.bf16.msra.mxu0 %v1163
    %1556 = vmatpush.bf16.msra.mxu0 %v1159
    %1557 = vmatmul.bf16.gmra.mxu0 %v113
    %v1558 = vpop.f32.mrf.mxu0
    %v1559 = vadd.f32 %v1546, %v1558
    %v1560 = vpop.f32.mrf.mxu0
    %1561 = vdwg.mxu0
    %1562 = vmatpush.bf16.msra.mxu0 %v1219
    %1563 = vmatpush.bf16.msra.mxu0 %v1215
    %1564 = vmatpush.bf16.msra.mxu0 %v1211
    %1565 = vmatpush.bf16.msra.mxu0 %v1207
    %1566 = vmatpush.bf16.msra.mxu0 %v1203
    %1567 = vmatpush.bf16.msra.mxu0 %v1199
    %1568 = vmatpush.bf16.msra.mxu0 %v1195
    %1569 = vmatpush.bf16.msra.mxu0 %v1191
    %1570 = vmatmul.bf16.gmra.mxu0 %v114
    %v1571 = vpop.f32.mrf.mxu0
    %v1572 = vadd.f32 %v1559, %v1571
    %v1573 = vpop.f32.mrf.mxu0
    %1574 = vdwg.mxu0
    %1575 = vmatpush.bf16.msra.mxu0 %v1251
    %1576 = vmatpush.bf16.msra.mxu0 %v1247
    %1577 = vmatpush.bf16.msra.mxu0 %v1243
    %1578 = vmatpush.bf16.msra.mxu0 %v1239
    %1579 = vmatpush.bf16.msra.mxu0 %v1235
    %1580 = vmatpush.bf16.msra.mxu0 %v1231
    %1581 = vmatpush.bf16.msra.mxu0 %v1227
    %1582 = vmatpush.bf16.msra.mxu0 %v1223
    %1583 = vmatmul.bf16.gmra.mxu0 %v115
    %v1584 = vpop.f32.mrf.mxu0
    %v1585 = vadd.f32 %v1572, %v1584
    %v1586 = vpop.f32.mrf.mxu0
    %1587 = vdwg.mxu0
    %v1588 = vld [vmem:[%s7] ss:$4 sm:$0xf]
    %v1590 = vperm.slane %v1588, 0
    %v1591 = vperm.slane %v1588, 1
    %v1592 = vperm.slane %v1588, 2
    %v1593 = vperm.slane %v1588, 3
    %v1598 = vadd.f32 %v1429, %v1590
    %v1599 = vadd.f32 %v1481, %v1591
    %v1600 = vadd.f32 %v1533, %v1592
    %v1601 = vadd.f32 %v1585, %v1593
    %v1602 = vmax.f32 %v1598, 0.0
    %v1603 = vmax.f32 %v1599, 0.0
    %v1604 = vmax.f32 %v1600, 0.0
    %v1605 = vmax.f32 %v1601, 0.0
    %v1606 = vpack.c.bf16 %v1602, %v1602
    %v1607 = vpack.c.bf16 %v1603, %v1603
    %v1608 = vpack.c.bf16 %v1604, %v1604
    %v1609 = vpack.c.bf16 %v1605, %v1605
    %v1610 = vld [vmem:[#allocation7] sm:$0xff]
    %v1611 = vld [vmem:[#allocation7 + $0x8] sm:$0xff]
    %v1612 = vld [vmem:[#allocation7 + $0x10] sm:$0xff]
    %v1613 = vld [vmem:[#allocation7 + $0x18] sm:$0xff]
    %v1614 = vld [vmem:[#allocation7 + $0x20] sm:$0xff]
    %v1615 = vld [vmem:[#allocation7 + $0x28] sm:$0xff]
    %v1616 = vld [vmem:[#allocation7 + $0x30] sm:$0xff]
    %v1617 = vld [vmem:[#allocation7 + $0x38] sm:$0xff]
    %v1618 = vld [vmem:[#allocation7 + $0x40] sm:$0xff]
    %v1619 = vld [vmem:[#allocation7 + $0x48] sm:$0xff]
    %v1620 = vld [vmem:[#allocation7 + $0x50] sm:$0xff]
    %v1621 = vld [vmem:[#allocation7 + $0x58] sm:$0xff]
    %v1622 = vld [vmem:[#allocation7 + $0x60] sm:$0xff]
    %v1623 = vld [vmem:[#allocation7 + $0x68] sm:$0xff]
    %v1624 = vld [vmem:[#allocation7 + $0x70] sm:$0xff]
    %v1625 = vld [vmem:[#allocation7 + $0x78] sm:$0xff]
    %v1626 = vld [vmem:[#allocation7 + $0x80] sm:$0xff]
    %v1627 = vld [vmem:[#allocation7 + $0x88] sm:$0xff]
    %v1628 = vld [vmem:[#allocation7 + $0x90] sm:$0xff]
    %v1629 = vld [vmem:[#allocation7 + $0x98] sm:$0xff]
    %v1630 = vld [vmem:[#allocation7 + $0xa0] sm:$0xff]
    %v1631 = vld [vmem:[#allocation7 + $0xa8] sm:$0xff]
    %v1632 = vld [vmem:[#allocation7 + $0xb0] sm:$0xff]
    %v1633 = vld [vmem:[#allocation7 + $0xb8] sm:$0xff]
    %v1634 = vld [vmem:[#allocation7 + $0xc0] sm:$0xff]
    %v1635 = vld [vmem:[#allocation7 + $0xc8] sm:$0xff]
    %v1636 = vld [vmem:[#allocation7 + $0xd0] sm:$0xff]
    %v1637 = vld [vmem:[#allocation7 + $0xd8] sm:$0xff]
    %v1638 = vld [vmem:[#allocation7 + $0xe0] sm:$0xff]
    %v1639 = vld [vmem:[#allocation7 + $0xe8] sm:$0xff]
    %v1640 = vld [vmem:[#allocation7 + $0xf0] sm:$0xff]
    %v1641 = vld [vmem:[#allocation7 + $0xf8] sm:$0xff]
    %v1642 = vld [vmem:[#allocation7 + $0x100] sm:$0xff]
    %v1643 = vld [vmem:[#allocation7 + $0x108] sm:$0xff]
    %v1644 = vld [vmem:[#allocation7 + $0x110] sm:$0xff]
    %v1645 = vld [vmem:[#allocation7 + $0x118] sm:$0xff]
    %v1646 = vld [vmem:[#allocation7 + $0x120] sm:$0xff]
    %v1647 = vld [vmem:[#allocation7 + $0x128] sm:$0xff]
    %v1648 = vld [vmem:[#allocation7 + $0x130] sm:$0xff]
    %v1649 = vld [vmem:[#allocation7 + $0x138] sm:$0xff]
    %v1650 = vld [vmem:[#allocation7 + $0x140] sm:$0xff]
    %v1651 = vld [vmem:[#allocation7 + $0x148] sm:$0xff]
    %v1652 = vld [vmem:[#allocation7 + $0x150] sm:$0xff]
    %v1653 = vld [vmem:[#allocation7 + $0x158] sm:$0xff]
    %v1654 = vld [vmem:[#allocation7 + $0x160] sm:$0xff]
    %v1655 = vld [vmem:[#allocation7 + $0x168] sm:$0xff]
    %v1656 = vld [vmem:[#allocation7 + $0x170] sm:$0xff]
    %v1657 = vld [vmem:[#allocation7 + $0x178] sm:$0xff]
    %v1658 = vld [vmem:[#allocation7 + $0x180] sm:$0xff]
    %v1659 = vld [vmem:[#allocation7 + $0x188] sm:$0xff]
    %v1660 = vld [vmem:[#allocation7 + $0x190] sm:$0xff]
    %v1661 = vld [vmem:[#allocation7 + $0x198] sm:$0xff]
    %v1662 = vld [vmem:[#allocation7 + $0x1a0] sm:$0xff]
    %v1663 = vld [vmem:[#allocation7 + $0x1a8] sm:$0xff]
    %v1664 = vld [vmem:[#allocation7 + $0x1b0] sm:$0xff]
    %v1665 = vld [vmem:[#allocation7 + $0x1b8] sm:$0xff]
    %v1666 = vld [vmem:[#allocation7 + $0x1c0] sm:$0xff]
    %v1667 = vld [vmem:[#allocation7 + $0x1c8] sm:$0xff]
    %v1668 = vld [vmem:[#allocation7 + $0x1d0] sm:$0xff]
    %v1669 = vld [vmem:[#allocation7 + $0x1d8] sm:$0xff]
    %v1670 = vld [vmem:[#allocation7 + $0x1e0] sm:$0xff]
    %v1671 = vld [vmem:[#allocation7 + $0x1e8] sm:$0xff]
    %v1672 = vld [vmem:[#allocation7 + $0x1f0] sm:$0xff]
    %v1673 = vld [vmem:[#allocation7 + $0x1f8] sm:$0xff]
    %v1674 = vld [vmem:[#allocation7 + $0x200] sm:$0xff]
    %v1675 = vld [vmem:[#allocation7 + $0x208] sm:$0xff]
    %v1676 = vld [vmem:[#allocation7 + $0x210] sm:$0xff]
    %v1677 = vld [vmem:[#allocation7 + $0x218] sm:$0xff]
    %v1678 = vld [vmem:[#allocation7 + $0x220] sm:$0xff]
    %v1679 = vld [vmem:[#allocation7 + $0x228] sm:$0xff]
    %v1680 = vld [vmem:[#allocation7 + $0x230] sm:$0xff]
    %v1681 = vld [vmem:[#allocation7 + $0x238] sm:$0xff]
    %v1682 = vld [vmem:[#allocation7 + $0x240] sm:$0xff]
    %v1683 = vld [vmem:[#allocation7 + $0x248] sm:$0xff]
    %v1684 = vld [vmem:[#allocation7 + $0x250] sm:$0xff]
    %v1685 = vld [vmem:[#allocation7 + $0x258] sm:$0xff]
    %v1686 = vld [vmem:[#allocation7 + $0x260] sm:$0xff]
    %v1687 = vld [vmem:[#allocation7 + $0x268] sm:$0xff]
    %v1688 = vld [vmem:[#allocation7 + $0x270] sm:$0xff]
    %v1689 = vld [vmem:[#allocation7 + $0x278] sm:$0xff]
    %v1690 = vld [vmem:[#allocation7 + $0x280] sm:$0xff]
    %v1691 = vld [vmem:[#allocation7 + $0x288] sm:$0xff]
    %v1692 = vld [vmem:[#allocation7 + $0x290] sm:$0xff]
    %v1693 = vld [vmem:[#allocation7 + $0x298] sm:$0xff]
    %v1694 = vld [vmem:[#allocation7 + $0x2a0] sm:$0xff]
    %v1695 = vld [vmem:[#allocation7 + $0x2a8] sm:$0xff]
    %v1696 = vld [vmem:[#allocation7 + $0x2b0] sm:$0xff]
    %v1697 = vld [vmem:[#allocation7 + $0x2b8] sm:$0xff]
    %v1698 = vld [vmem:[#allocation7 + $0x2c0] sm:$0xff]
    %v1699 = vld [vmem:[#allocation7 + $0x2c8] sm:$0xff]
    %v1700 = vld [vmem:[#allocation7 + $0x2d0] sm:$0xff]
    %v1701 = vld [vmem:[#allocation7 + $0x2d8] sm:$0xff]
    %v1702 = vld [vmem:[#allocation7 + $0x2e0] sm:$0xff]
    %v1703 = vld [vmem:[#allocation7 + $0x2e8] sm:$0xff]
    %v1704 = vld [vmem:[#allocation7 + $0x2f0] sm:$0xff]
    %v1705 = vld [vmem:[#allocation7 + $0x2f8] sm:$0xff]
    %v1706 = vld [vmem:[#allocation7 + $0x300] sm:$0xff]
    %v1707 = vld [vmem:[#allocation7 + $0x308] sm:$0xff]
    %v1708 = vld [vmem:[#allocation7 + $0x310] sm:$0xff]
    %v1709 = vld [vmem:[#allocation7 + $0x318] sm:$0xff]
    %v1710 = vld [vmem:[#allocation7 + $0x320] sm:$0xff]
    %v1711 = vld [vmem:[#allocation7 + $0x328] sm:$0xff]
    %v1712 = vld [vmem:[#allocation7 + $0x330] sm:$0xff]
    %v1713 = vld [vmem:[#allocation7 + $0x338] sm:$0xff]
    %v1714 = vld [vmem:[#allocation7 + $0x340] sm:$0xff]
    %v1715 = vld [vmem:[#allocation7 + $0x348] sm:$0xff]
    %v1716 = vld [vmem:[#allocation7 + $0x350] sm:$0xff]
    %v1717 = vld [vmem:[#allocation7 + $0x358] sm:$0xff]
    %v1718 = vld [vmem:[#allocation7 + $0x360] sm:$0xff]
    %v1719 = vld [vmem:[#allocation7 + $0x368] sm:$0xff]
    %v1720 = vld [vmem:[#allocation7 + $0x370] sm:$0xff]
    %v1721 = vld [vmem:[#allocation7 + $0x378] sm:$0xff]
    %v1722 = vld [vmem:[#allocation7 + $0x380] sm:$0xff]
    %v1723 = vld [vmem:[#allocation7 + $0x388] sm:$0xff]
    %v1724 = vld [vmem:[#allocation7 + $0x390] sm:$0xff]
    %v1725 = vld [vmem:[#allocation7 + $0x398] sm:$0xff]
    %v1726 = vld [vmem:[#allocation7 + $0x3a0] sm:$0xff]
    %v1727 = vld [vmem:[#allocation7 + $0x3a8] sm:$0xff]
    %v1728 = vld [vmem:[#allocation7 + $0x3b0] sm:$0xff]
    %v1729 = vld [vmem:[#allocation7 + $0x3b8] sm:$0xff]
    %v1730 = vld [vmem:[#allocation7 + $0x3c0] sm:$0xff]
    %v1731 = vld [vmem:[#allocation7 + $0x3c8] sm:$0xff]
    %v1732 = vld [vmem:[#allocation7 + $0x3d0] sm:$0xff]
    %v1733 = vld [vmem:[#allocation7 + $0x3d8] sm:$0xff]
    %v1734 = vld [vmem:[#allocation7 + $0x3e0] sm:$0xff]
    %v1735 = vld [vmem:[#allocation7 + $0x3e8] sm:$0xff]
    %v1736 = vld [vmem:[#allocation7 + $0x3f0] sm:$0xff]
    %v1737 = vld [vmem:[#allocation7 + $0x3f8] sm:$0xff]
    %s1738 = scalar_lea.vmem %s7, 1
    %v1739 = vld [vmem:[%s1738] ss:$4 sm:$0xf]
    %v1741 = vperm.slane %v1739, 0
    %v1742 = vperm.slane %v1739, 1
    %v1743 = vperm.slane %v1739, 2
    %v1744 = vperm.slane %v1739, 3
    %v1877 = vunpack.c.l.b16 %v1610
    %v1878 = vunpack.c.h.b16 %v1610
    %v1879 = vunpack.c.l.b16 %v1611
    %v1880 = vunpack.c.h.b16 %v1611
    %v1881 = vunpack.c.l.b16 %v1612
    %v1882 = vunpack.c.h.b16 %v1612
    %v1883 = vunpack.c.l.b16 %v1613
    %v1884 = vunpack.c.h.b16 %v1613
    %v1885 = vunpack.c.l.b16 %v1614
    %v1886 = vunpack.c.h.b16 %v1614
    %v1887 = vunpack.c.l.b16 %v1615
    %v1888 = vunpack.c.h.b16 %v1615
    %v1889 = vunpack.c.l.b16 %v1616
    %v1890 = vunpack.c.h.b16 %v1616
    %v1891 = vunpack.c.l.b16 %v1617
    %v1892 = vunpack.c.h.b16 %v1617
    %v1893 = vunpack.c.l.b16 %v1618
    %v1894 = vunpack.c.h.b16 %v1618
    %v1895 = vunpack.c.l.b16 %v1619
    %v1896 = vunpack.c.h.b16 %v1619
    %v1897 = vunpack.c.l.b16 %v1620
    %v1898 = vunpack.c.h.b16 %v1620
    %v1899 = vunpack.c.l.b16 %v1621
    %v1900 = vunpack.c.h.b16 %v1621
    %v1901 = vunpack.c.l.b16 %v1622
    %v1902 = vunpack.c.h.b16 %v1622
    %v1903 = vunpack.c.l.b16 %v1623
    %v1904 = vunpack.c.h.b16 %v1623
    %v1905 = vunpack.c.l.b16 %v1624
    %v1906 = vunpack.c.h.b16 %v1624
    %v1907 = vunpack.c.l.b16 %v1625
    %v1908 = vunpack.c.h.b16 %v1625
    %v1909 = vunpack.c.l.b16 %v1626
    %v1910 = vunpack.c.h.b16 %v1626
    %v1911 = vunpack.c.l.b16 %v1627
    %v1912 = vunpack.c.h.b16 %v1627
    %v1913 = vunpack.c.l.b16 %v1628
    %v1914 = vunpack.c.h.b16 %v1628
    %v1915 = vunpack.c.l.b16 %v1629
    %v1916 = vunpack.c.h.b16 %v1629
    %v1917 = vunpack.c.l.b16 %v1630
    %v1918 = vunpack.c.h.b16 %v1630
    %v1919 = vunpack.c.l.b16 %v1631
    %v1920 = vunpack.c.h.b16 %v1631
    %v1921 = vunpack.c.l.b16 %v1632
    %v1922 = vunpack.c.h.b16 %v1632
    %v1923 = vunpack.c.l.b16 %v1633
    %v1924 = vunpack.c.h.b16 %v1633
    %v1925 = vunpack.c.l.b16 %v1634
    %v1926 = vunpack.c.h.b16 %v1634
    %v1927 = vunpack.c.l.b16 %v1635
    %v1928 = vunpack.c.h.b16 %v1635
    %v1929 = vunpack.c.l.b16 %v1636
    %v1930 = vunpack.c.h.b16 %v1636
    %v1931 = vunpack.c.l.b16 %v1637
    %v1932 = vunpack.c.h.b16 %v1637
    %v1933 = vunpack.c.l.b16 %v1638
    %v1934 = vunpack.c.h.b16 %v1638
    %v1935 = vunpack.c.l.b16 %v1639
    %v1936 = vunpack.c.h.b16 %v1639
    %v1937 = vunpack.c.l.b16 %v1640
    %v1938 = vunpack.c.h.b16 %v1640
    %v1939 = vunpack.c.l.b16 %v1641
    %v1940 = vunpack.c.h.b16 %v1641
    %v1941 = vunpack.c.l.b16 %v1642
    %v1942 = vunpack.c.h.b16 %v1642
    %v1943 = vunpack.c.l.b16 %v1643
    %v1944 = vunpack.c.h.b16 %v1643
    %v1945 = vunpack.c.l.b16 %v1644
    %v1946 = vunpack.c.h.b16 %v1644
    %v1947 = vunpack.c.l.b16 %v1645
    %v1948 = vunpack.c.h.b16 %v1645
    %v1949 = vunpack.c.l.b16 %v1646
    %v1950 = vunpack.c.h.b16 %v1646
    %v1951 = vunpack.c.l.b16 %v1647
    %v1952 = vunpack.c.h.b16 %v1647
    %v1953 = vunpack.c.l.b16 %v1648
    %v1954 = vunpack.c.h.b16 %v1648
    %v1955 = vunpack.c.l.b16 %v1649
    %v1956 = vunpack.c.h.b16 %v1649
    %v1957 = vunpack.c.l.b16 %v1650
    %v1958 = vunpack.c.h.b16 %v1650
    %v1959 = vunpack.c.l.b16 %v1651
    %v1960 = vunpack.c.h.b16 %v1651
    %v1961 = vunpack.c.l.b16 %v1652
    %v1962 = vunpack.c.h.b16 %v1652
    %v1963 = vunpack.c.l.b16 %v1653
    %v1964 = vunpack.c.h.b16 %v1653
    %v1965 = vunpack.c.l.b16 %v1654
    %v1966 = vunpack.c.h.b16 %v1654
    %v1967 = vunpack.c.l.b16 %v1655
    %v1968 = vunpack.c.h.b16 %v1655
    %v1969 = vunpack.c.l.b16 %v1656
    %v1970 = vunpack.c.h.b16 %v1656
    %v1971 = vunpack.c.l.b16 %v1657
    %v1972 = vunpack.c.h.b16 %v1657
    %v1973 = vunpack.c.l.b16 %v1658
    %v1974 = vunpack.c.h.b16 %v1658
    %v1975 = vunpack.c.l.b16 %v1659
    %v1976 = vunpack.c.h.b16 %v1659
    %v1977 = vunpack.c.l.b16 %v1660
    %v1978 = vunpack.c.h.b16 %v1660
    %v1979 = vunpack.c.l.b16 %v1661
    %v1980 = vunpack.c.h.b16 %v1661
    %v1981 = vunpack.c.l.b16 %v1662
    %v1982 = vunpack.c.h.b16 %v1662
    %v1983 = vunpack.c.l.b16 %v1663
    %v1984 = vunpack.c.h.b16 %v1663
    %v1985 = vunpack.c.l.b16 %v1664
    %v1986 = vunpack.c.h.b16 %v1664
    %v1987 = vunpack.c.l.b16 %v1665
    %v1988 = vunpack.c.h.b16 %v1665
    %v1989 = vunpack.c.l.b16 %v1666
    %v1990 = vunpack.c.h.b16 %v1666
    %v1991 = vunpack.c.l.b16 %v1667
    %v1992 = vunpack.c.h.b16 %v1667
    %v1993 = vunpack.c.l.b16 %v1668
    %v1994 = vunpack.c.h.b16 %v1668
    %v1995 = vunpack.c.l.b16 %v1669
    %v1996 = vunpack.c.h.b16 %v1669
    %v1997 = vunpack.c.l.b16 %v1670
    %v1998 = vunpack.c.h.b16 %v1670
    %v1999 = vunpack.c.l.b16 %v1671
    %v2000 = vunpack.c.h.b16 %v1671
    %v2001 = vunpack.c.l.b16 %v1672
    %v2002 = vunpack.c.h.b16 %v1672
    %v2003 = vunpack.c.l.b16 %v1673
    %v2004 = vunpack.c.h.b16 %v1673
    %v2005 = vunpack.c.l.b16 %v1674
    %v2006 = vunpack.c.h.b16 %v1674
    %v2007 = vunpack.c.l.b16 %v1675
    %v2008 = vunpack.c.h.b16 %v1675
    %v2009 = vunpack.c.l.b16 %v1676
    %v2010 = vunpack.c.h.b16 %v1676
    %v2011 = vunpack.c.l.b16 %v1677
    %v2012 = vunpack.c.h.b16 %v1677
    %v2013 = vunpack.c.l.b16 %v1678
    %v2014 = vunpack.c.h.b16 %v1678
    %v2015 = vunpack.c.l.b16 %v1679
    %v2016 = vunpack.c.h.b16 %v1679
    %v2017 = vunpack.c.l.b16 %v1680
    %v2018 = vunpack.c.h.b16 %v1680
    %v2019 = vunpack.c.l.b16 %v1681
    %v2020 = vunpack.c.h.b16 %v1681
    %v2021 = vunpack.c.l.b16 %v1682
    %v2022 = vunpack.c.h.b16 %v1682
    %v2023 = vunpack.c.l.b16 %v1683
    %v2024 = vunpack.c.h.b16 %v1683
    %v2025 = vunpack.c.l.b16 %v1684
    %v2026 = vunpack.c.h.b16 %v1684
    %v2027 = vunpack.c.l.b16 %v1685
    %v2028 = vunpack.c.h.b16 %v1685
    %v2029 = vunpack.c.l.b16 %v1686
    %v2030 = vunpack.c.h.b16 %v1686
    %v2031 = vunpack.c.l.b16 %v1687
    %v2032 = vunpack.c.h.b16 %v1687
    %v2033 = vunpack.c.l.b16 %v1688
    %v2034 = vunpack.c.h.b16 %v1688
    %v2035 = vunpack.c.l.b16 %v1689
    %v2036 = vunpack.c.h.b16 %v1689
    %v2037 = vunpack.c.l.b16 %v1690
    %v2038 = vunpack.c.h.b16 %v1690
    %v2039 = vunpack.c.l.b16 %v1691
    %v2040 = vunpack.c.h.b16 %v1691
    %v2041 = vunpack.c.l.b16 %v1692
    %v2042 = vunpack.c.h.b16 %v1692
    %v2043 = vunpack.c.l.b16 %v1693
    %v2044 = vunpack.c.h.b16 %v1693
    %v2045 = vunpack.c.l.b16 %v1694
    %v2046 = vunpack.c.h.b16 %v1694
    %v2047 = vunpack.c.l.b16 %v1695
    %v2048 = vunpack.c.h.b16 %v1695
    %v2049 = vunpack.c.l.b16 %v1696
    %v2050 = vunpack.c.h.b16 %v1696
    %v2051 = vunpack.c.l.b16 %v1697
    %v2052 = vunpack.c.h.b16 %v1697
    %v2053 = vunpack.c.l.b16 %v1698
    %v2054 = vunpack.c.h.b16 %v1698
    %v2055 = vunpack.c.l.b16 %v1699
    %v2056 = vunpack.c.h.b16 %v1699
    %v2057 = vunpack.c.l.b16 %v1700
    %v2058 = vunpack.c.h.b16 %v1700
    %v2059 = vunpack.c.l.b16 %v1701
    %v2060 = vunpack.c.h.b16 %v1701
    %v2061 = vunpack.c.l.b16 %v1702
    %v2062 = vunpack.c.h.b16 %v1702
    %v2063 = vunpack.c.l.b16 %v1703
    %v2064 = vunpack.c.h.b16 %v1703
    %v2065 = vunpack.c.l.b16 %v1704
    %v2066 = vunpack.c.h.b16 %v1704
    %v2067 = vunpack.c.l.b16 %v1705
    %v2068 = vunpack.c.h.b16 %v1705
    %v2069 = vunpack.c.l.b16 %v1706
    %v2070 = vunpack.c.h.b16 %v1706
    %v2071 = vunpack.c.l.b16 %v1707
    %v2072 = vunpack.c.h.b16 %v1707
    %v2073 = vunpack.c.l.b16 %v1708
    %v2074 = vunpack.c.h.b16 %v1708
    %v2075 = vunpack.c.l.b16 %v1709
    %v2076 = vunpack.c.h.b16 %v1709
    %v2077 = vunpack.c.l.b16 %v1710
    %v2078 = vunpack.c.h.b16 %v1710
    %v2079 = vunpack.c.l.b16 %v1711
    %v2080 = vunpack.c.h.b16 %v1711
    %v2081 = vunpack.c.l.b16 %v1712
    %v2082 = vunpack.c.h.b16 %v1712
    %v2083 = vunpack.c.l.b16 %v1713
    %v2084 = vunpack.c.h.b16 %v1713
    %v2085 = vunpack.c.l.b16 %v1714
    %v2086 = vunpack.c.h.b16 %v1714
    %v2087 = vunpack.c.l.b16 %v1715
    %v2088 = vunpack.c.h.b16 %v1715
    %v2089 = vunpack.c.l.b16 %v1716
    %v2090 = vunpack.c.h.b16 %v1716
    %v2091 = vunpack.c.l.b16 %v1717
    %v2092 = vunpack.c.h.b16 %v1717
    %v2093 = vunpack.c.l.b16 %v1718
    %v2094 = vunpack.c.h.b16 %v1718
    %v2095 = vunpack.c.l.b16 %v1719
    %v2096 = vunpack.c.h.b16 %v1719
    %v2097 = vunpack.c.l.b16 %v1720
    %v2098 = vunpack.c.h.b16 %v1720
    %v2099 = vunpack.c.l.b16 %v1721
    %v2100 = vunpack.c.h.b16 %v1721
    %v2101 = vunpack.c.l.b16 %v1722
    %v2102 = vunpack.c.h.b16 %v1722
    %v2103 = vunpack.c.l.b16 %v1723
    %v2104 = vunpack.c.h.b16 %v1723
    %v2105 = vunpack.c.l.b16 %v1724
    %v2106 = vunpack.c.h.b16 %v1724
    %v2107 = vunpack.c.l.b16 %v1725
    %v2108 = vunpack.c.h.b16 %v1725
    %v2109 = vunpack.c.l.b16 %v1726
    %v2110 = vunpack.c.h.b16 %v1726
    %v2111 = vunpack.c.l.b16 %v1727
    %v2112 = vunpack.c.h.b16 %v1727
    %v2113 = vunpack.c.l.b16 %v1728
    %v2114 = vunpack.c.h.b16 %v1728
    %v2115 = vunpack.c.l.b16 %v1729
    %v2116 = vunpack.c.h.b16 %v1729
    %v2117 = vunpack.c.l.b16 %v1730
    %v2118 = vunpack.c.h.b16 %v1730
    %v2119 = vunpack.c.l.b16 %v1731
    %v2120 = vunpack.c.h.b16 %v1731
    %v2121 = vunpack.c.l.b16 %v1732
    %v2122 = vunpack.c.h.b16 %v1732
    %v2123 = vunpack.c.l.b16 %v1733
    %v2124 = vunpack.c.h.b16 %v1733
    %v2125 = vunpack.c.l.b16 %v1734
    %v2126 = vunpack.c.h.b16 %v1734
    %v2127 = vunpack.c.l.b16 %v1735
    %v2128 = vunpack.c.h.b16 %v1735
    %v2129 = vunpack.c.l.b16 %v1736
    %v2130 = vunpack.c.h.b16 %v1736
    %v2131 = vunpack.c.l.b16 %v1737
    %v2132 = vunpack.c.h.b16 %v1737
    %v2133 = vpack.c.b16 %v1881, %v1877
    %v2134 = vpack.c.b16 %v1882, %v1878
    %v2135 = vpack.c.b16 %v1883, %v1879
    %v2136 = vpack.c.b16 %v1884, %v1880
    %v2137 = vpack.c.b16 %v1889, %v1885
    %v2138 = vpack.c.b16 %v1890, %v1886
    %v2139 = vpack.c.b16 %v1891, %v1887
    %v2140 = vpack.c.b16 %v1892, %v1888
    %v2141 = vpack.c.b16 %v1897, %v1893
    %v2142 = vpack.c.b16 %v1898, %v1894
    %v2143 = vpack.c.b16 %v1899, %v1895
    %v2144 = vpack.c.b16 %v1900, %v1896
    %v2145 = vpack.c.b16 %v1905, %v1901
    %v2146 = vpack.c.b16 %v1906, %v1902
    %v2147 = vpack.c.b16 %v1907, %v1903
    %v2148 = vpack.c.b16 %v1908, %v1904
    %v2149 = vpack.c.b16 %v1913, %v1909
    %v2150 = vpack.c.b16 %v1914, %v1910
    %v2151 = vpack.c.b16 %v1915, %v1911
    %v2152 = vpack.c.b16 %v1916, %v1912
    %v2153 = vpack.c.b16 %v1921, %v1917
    %v2154 = vpack.c.b16 %v1922, %v1918
    %v2155 = vpack.c.b16 %v1923, %v1919
    %v2156 = vpack.c.b16 %v1924, %v1920
    %v2157 = vpack.c.b16 %v1929, %v1925
    %v2158 = vpack.c.b16 %v1930, %v1926
    %v2159 = vpack.c.b16 %v1931, %v1927
    %v2160 = vpack.c.b16 %v1932, %v1928
    %v2161 = vpack.c.b16 %v1937, %v1933
    %v2162 = vpack.c.b16 %v1938, %v1934
    %v2163 = vpack.c.b16 %v1939, %v1935
    %v2164 = vpack.c.b16 %v1940, %v1936
    %v2165 = vpack.c.b16 %v1945, %v1941
    %v2166 = vpack.c.b16 %v1946, %v1942
    %v2167 = vpack.c.b16 %v1947, %v1943
    %v2168 = vpack.c.b16 %v1948, %v1944
    %v2169 = vpack.c.b16 %v1953, %v1949
    %v2170 = vpack.c.b16 %v1954, %v1950
    %v2171 = vpack.c.b16 %v1955, %v1951
    %v2172 = vpack.c.b16 %v1956, %v1952
    %v2173 = vpack.c.b16 %v1961, %v1957
    %v2174 = vpack.c.b16 %v1962, %v1958
    %v2175 = vpack.c.b16 %v1963, %v1959
    %v2176 = vpack.c.b16 %v1964, %v1960
    %v2177 = vpack.c.b16 %v1969, %v1965
    %v2178 = vpack.c.b16 %v1970, %v1966
    %v2179 = vpack.c.b16 %v1971, %v1967
    %v2180 = vpack.c.b16 %v1972, %v1968
    %v2181 = vpack.c.b16 %v1977, %v1973
    %v2182 = vpack.c.b16 %v1978, %v1974
    %v2183 = vpack.c.b16 %v1979, %v1975
    %v2184 = vpack.c.b16 %v1980, %v1976
    %v2185 = vpack.c.b16 %v1985, %v1981
    %v2186 = vpack.c.b16 %v1986, %v1982
    %v2187 = vpack.c.b16 %v1987, %v1983
    %v2188 = vpack.c.b16 %v1988, %v1984
    %v2189 = vpack.c.b16 %v1993, %v1989
    %v2190 = vpack.c.b16 %v1994, %v1990
    %v2191 = vpack.c.b16 %v1995, %v1991
    %v2192 = vpack.c.b16 %v1996, %v1992
    %v2193 = vpack.c.b16 %v2001, %v1997
    %v2194 = vpack.c.b16 %v2002, %v1998
    %v2195 = vpack.c.b16 %v2003, %v1999
    %v2196 = vpack.c.b16 %v2004, %v2000
    %v2197 = vpack.c.b16 %v2009, %v2005
    %v2198 = vpack.c.b16 %v2010, %v2006
    %v2199 = vpack.c.b16 %v2011, %v2007
    %v2200 = vpack.c.b16 %v2012, %v2008
    %v2201 = vpack.c.b16 %v2017, %v2013
    %v2202 = vpack.c.b16 %v2018, %v2014
    %v2203 = vpack.c.b16 %v2019, %v2015
    %v2204 = vpack.c.b16 %v2020, %v2016
    %v2205 = vpack.c.b16 %v2025, %v2021
    %v2206 = vpack.c.b16 %v2026, %v2022
    %v2207 = vpack.c.b16 %v2027, %v2023
    %v2208 = vpack.c.b16 %v2028, %v2024
    %v2209 = vpack.c.b16 %v2033, %v2029
    %v2210 = vpack.c.b16 %v2034, %v2030
    %v2211 = vpack.c.b16 %v2035, %v2031
    %v2212 = vpack.c.b16 %v2036, %v2032
    %v2213 = vpack.c.b16 %v2041, %v2037
    %v2214 = vpack.c.b16 %v2042, %v2038
    %v2215 = vpack.c.b16 %v2043, %v2039
    %v2216 = vpack.c.b16 %v2044, %v2040
    %v2217 = vpack.c.b16 %v2049, %v2045
    %v2218 = vpack.c.b16 %v2050, %v2046
    %v2219 = vpack.c.b16 %v2051, %v2047
    %v2220 = vpack.c.b16 %v2052, %v2048
    %v2221 = vpack.c.b16 %v2057, %v2053
    %v2222 = vpack.c.b16 %v2058, %v2054
    %v2223 = vpack.c.b16 %v2059, %v2055
    %v2224 = vpack.c.b16 %v2060, %v2056
    %v2225 = vpack.c.b16 %v2065, %v2061
    %v2226 = vpack.c.b16 %v2066, %v2062
    %v2227 = vpack.c.b16 %v2067, %v2063
    %v2228 = vpack.c.b16 %v2068, %v2064
    %v2229 = vpack.c.b16 %v2073, %v2069
    %v2230 = vpack.c.b16 %v2074, %v2070
    %v2231 = vpack.c.b16 %v2075, %v2071
    %v2232 = vpack.c.b16 %v2076, %v2072
    %v2233 = vpack.c.b16 %v2081, %v2077
    %v2234 = vpack.c.b16 %v2082, %v2078
    %v2235 = vpack.c.b16 %v2083, %v2079
    %v2236 = vpack.c.b16 %v2084, %v2080
    %v2237 = vpack.c.b16 %v2089, %v2085
    %v2238 = vpack.c.b16 %v2090, %v2086
    %v2239 = vpack.c.b16 %v2091, %v2087
    %v2240 = vpack.c.b16 %v2092, %v2088
    %v2241 = vpack.c.b16 %v2097, %v2093
    %v2242 = vpack.c.b16 %v2098, %v2094
    %v2243 = vpack.c.b16 %v2099, %v2095
    %v2244 = vpack.c.b16 %v2100, %v2096
    %v2245 = vpack.c.b16 %v2105, %v2101
    %v2246 = vpack.c.b16 %v2106, %v2102
    %v2247 = vpack.c.b16 %v2107, %v2103
    %v2248 = vpack.c.b16 %v2108, %v2104
    %v2249 = vpack.c.b16 %v2113, %v2109
    %v2250 = vpack.c.b16 %v2114, %v2110
    %v2251 = vpack.c.b16 %v2115, %v2111
    %v2252 = vpack.c.b16 %v2116, %v2112
    %v2253 = vpack.c.b16 %v2121, %v2117
    %v2254 = vpack.c.b16 %v2122, %v2118
    %v2255 = vpack.c.b16 %v2123, %v2119
    %v2256 = vpack.c.b16 %v2124, %v2120
    %v2257 = vpack.c.b16 %v2129, %v2125
    %v2258 = vpack.c.b16 %v2130, %v2126
    %v2259 = vpack.c.b16 %v2131, %v2127
    %v2260 = vpack.c.b16 %v2132, %v2128
    %2389 = vmatpush.bf16.msra.mxu0 %v2161
    %2390 = vmatpush.bf16.msra.mxu0 %v2157
    %2391 = vmatpush.bf16.msra.mxu0 %v2153
    %2392 = vmatpush.bf16.msra.mxu0 %v2149
    %2393 = vmatpush.bf16.msra.mxu0 %v2145
    %2394 = vmatpush.bf16.msra.mxu0 %v2141
    %2395 = vmatpush.bf16.msra.mxu0 %v2137
    %2396 = vmatpush.bf16.msra.mxu0 %v2133
    %2397 = vmatmul.bf16.gmra.mxu0 %v1606
    %v2398 = vpop.f32.mrf.mxu0
    %v2399 = vadd.f32 %v1741, %v2398
    %v2400 = vpop.f32.mrf.mxu0
    %2401 = vdwg.mxu0
    %2402 = vmatpush.bf16.msra.mxu0 %v2193
    %2403 = vmatpush.bf16.msra.mxu0 %v2189
    %2404 = vmatpush.bf16.msra.mxu0 %v2185
    %2405 = vmatpush.bf16.msra.mxu0 %v2181
    %2406 = vmatpush.bf16.msra.mxu0 %v2177
    %2407 = vmatpush.bf16.msra.mxu0 %v2173
    %2408 = vmatpush.bf16.msra.mxu0 %v2169
    %2409 = vmatpush.bf16.msra.mxu0 %v2165
    %2410 = vmatmul.bf16.gmra.mxu0 %v1607
    %v2411 = vpop.f32.mrf.mxu0
    %v2412 = vadd.f32 %v2399, %v2411
    %v2413 = vpop.f32.mrf.mxu0
    %2414 = vdwg.mxu0
    %2415 = vmatpush.bf16.msra.mxu0 %v2225
    %2416 = vmatpush.bf16.msra.mxu0 %v2221
    %2417 = vmatpush.bf16.msra.mxu0 %v2217
    %2418 = vmatpush.bf16.msra.mxu0 %v2213
    %2419 = vmatpush.bf16.msra.mxu0 %v2209
    %2420 = vmatpush.bf16.msra.mxu0 %v2205
    %2421 = vmatpush.bf16.msra.mxu0 %v2201
    %2422 = vmatpush.bf16.msra.mxu0 %v2197
    %2423 = vmatmul.bf16.gmra.mxu0 %v1608
    %v2424 = vpop.f32.mrf.mxu0
    %v2425 = vadd.f32 %v2412, %v2424
    %v2426 = vpop.f32.mrf.mxu0
    %2427 = vdwg.mxu0
    %2428 = vmatpush.bf16.msra.mxu0 %v2257
    %2429 = vmatpush.bf16.msra.mxu0 %v2253
    %2430 = vmatpush.bf16.msra.mxu0 %v2249
    %2431 = vmatpush.bf16.msra.mxu0 %v2245
    %2432 = vmatpush.bf16.msra.mxu0 %v2241
    %2433 = vmatpush.bf16.msra.mxu0 %v2237
    %2434 = vmatpush.bf16.msra.mxu0 %v2233
    %2435 = vmatpush.bf16.msra.mxu0 %v2229
    %2436 = vmatmul.bf16.gmra.mxu0 %v1609
    %v2437 = vpop.f32.mrf.mxu0
    %v2438 = vadd.f32 %v2425, %v2437
    %v2439 = vpop.f32.mrf.mxu0
    %2440 = vdwg.mxu0
    %2441 = vmatpush.bf16.msra.mxu0 %v2162
    %2442 = vmatpush.bf16.msra.mxu0 %v2158
    %2443 = vmatpush.bf16.msra.mxu0 %v2154
    %2444 = vmatpush.bf16.msra.mxu0 %v2150
    %2445 = vmatpush.bf16.msra.mxu0 %v2146
    %2446 = vmatpush.bf16.msra.mxu0 %v2142
    %2447 = vmatpush.bf16.msra.mxu0 %v2138
    %2448 = vmatpush.bf16.msra.mxu0 %v2134
    %2449 = vmatmul.bf16.gmra.mxu0 %v1606
    %v2450 = vpop.f32.mrf.mxu0
    %v2451 = vadd.f32 %v1742, %v2450
    %v2452 = vpop.f32.mrf.mxu0
    %2453 = vdwg.mxu0
    %2454 = vmatpush.bf16.msra.mxu0 %v2194
    %2455 = vmatpush.bf16.msra.mxu0 %v2190
    %2456 = vmatpush.bf16.msra.mxu0 %v2186
    %2457 = vmatpush.bf16.msra.mxu0 %v2182
    %2458 = vmatpush.bf16.msra.mxu0 %v2178
    %2459 = vmatpush.bf16.msra.mxu0 %v2174
    %2460 = vmatpush.bf16.msra.mxu0 %v2170
    %2461 = vmatpush.bf16.msra.mxu0 %v2166
    %2462 = vmatmul.bf16.gmra.mxu0 %v1607
    %v2463 = vpop.f32.mrf.mxu0
    %v2464 = vadd.f32 %v2451, %v2463
    %v2465 = vpop.f32.mrf.mxu0
    %2466 = vdwg.mxu0
    %2467 = vmatpush.bf16.msra.mxu0 %v2226
    %2468 = vmatpush.bf16.msra.mxu0 %v2222
    %2469 = vmatpush.bf16.msra.mxu0 %v2218
    %2470 = vmatpush.bf16.msra.mxu0 %v2214
    %2471 = vmatpush.bf16.msra.mxu0 %v2210
    %2472 = vmatpush.bf16.msra.mxu0 %v2206
    %2473 = vmatpush.bf16.msra.mxu0 %v2202
    %2474 = vmatpush.bf16.msra.mxu0 %v2198
    %2475 = vmatmul.bf16.gmra.mxu0 %v1608
    %v2476 = vpop.f32.mrf.mxu0
    %v2477 = vadd.f32 %v2464, %v2476
    %v2478 = vpop.f32.mrf.mxu0
    %2479 = vdwg.mxu0
    %2480 = vmatpush.bf16.msra.mxu0 %v2258
    %2481 = vmatpush.bf16.msra.mxu0 %v2254
    %2482 = vmatpush.bf16.msra.mxu0 %v2250
    %2483 = vmatpush.bf16.msra.mxu0 %v2246
    %2484 = vmatpush.bf16.msra.mxu0 %v2242
    %2485 = vmatpush.bf16.msra.mxu0 %v2238
    %2486 = vmatpush.bf16.msra.mxu0 %v2234
    %2487 = vmatpush.bf16.msra.mxu0 %v2230
    %2488 = vmatmul.bf16.gmra.mxu0 %v1609
    %v2489 = vpop.f32.mrf.mxu0
    %v2490 = vadd.f32 %v2477, %v2489
    %v2491 = vpop.f32.mrf.mxu0
    %2492 = vdwg.mxu0
    %2493 = vmatpush.bf16.msra.mxu0 %v2163
    %2494 = vmatpush.bf16.msra.mxu0 %v2159
    %2495 = vmatpush.bf16.msra.mxu0 %v2155
    %2496 = vmatpush.bf16.msra.mxu0 %v2151
    %2497 = vmatpush.bf16.msra.mxu0 %v2147
    %2498 = vmatpush.bf16.msra.mxu0 %v2143
    %2499 = vmatpush.bf16.msra.mxu0 %v2139
    %2500 = vmatpush.bf16.msra.mxu0 %v2135
    %2501 = vmatmul.bf16.gmra.mxu0 %v1606
    %v2502 = vpop.f32.mrf.mxu0
    %v2503 = vadd.f32 %v1743, %v2502
    %v2504 = vpop.f32.mrf.mxu0
    %2505 = vdwg.mxu0
    %2506 = vmatpush.bf16.msra.mxu0 %v2195
    %2507 = vmatpush.bf16.msra.mxu0 %v2191
    %2508 = vmatpush.bf16.msra.mxu0 %v2187
    %2509 = vmatpush.bf16.msra.mxu0 %v2183
    %2510 = vmatpush.bf16.msra.mxu0 %v2179
    %2511 = vmatpush.bf16.msra.mxu0 %v2175
    %2512 = vmatpush.bf16.msra.mxu0 %v2171
    %2513 = vmatpush.bf16.msra.mxu0 %v2167
    %2514 = vmatmul.bf16.gmra.mxu0 %v1607
    %v2515 = vpop.f32.mrf.mxu0
    %v2516 = vadd.f32 %v2503, %v2515
    %v2517 = vpop.f32.mrf.mxu0
    %2518 = vdwg.mxu0
    %2519 = vmatpush.bf16.msra.mxu0 %v2227
    %2520 = vmatpush.bf16.msra.mxu0 %v2223
    %2521 = vmatpush.bf16.msra.mxu0 %v2219
    %2522 = vmatpush.bf16.msra.mxu0 %v2215
    %2523 = vmatpush.bf16.msra.mxu0 %v2211
    %2524 = vmatpush.bf16.msra.mxu0 %v2207
    %2525 = vmatpush.bf16.msra.mxu0 %v2203
    %2526 = vmatpush.bf16.msra.mxu0 %v2199
    %2527 = vmatmul.bf16.gmra.mxu0 %v1608
    %v2528 = vpop.f32.mrf.mxu0
    %v2529 = vadd.f32 %v2516, %v2528
    %v2530 = vpop.f32.mrf.mxu0
    %2531 = vdwg.mxu0
    %2532 = vmatpush.bf16.msra.mxu0 %v2259
    %2533 = vmatpush.bf16.msra.mxu0 %v2255
    %2534 = vmatpush.bf16.msra.mxu0 %v2251
    %2535 = vmatpush.bf16.msra.mxu0 %v2247
    %2536 = vmatpush.bf16.msra.mxu0 %v2243
    %2537 = vmatpush.bf16.msra.mxu0 %v2239
    %2538 = vmatpush.bf16.msra.mxu0 %v2235
    %2539 = vmatpush.bf16.msra.mxu0 %v2231
    %2540 = vmatmul.bf16.gmra.mxu0 %v1609
    %v2541 = vpop.f32.mrf.mxu0
    %v2542 = vadd.f32 %v2529, %v2541
    %v2543 = vpop.f32.mrf.mxu0
    %2544 = vdwg.mxu0
    %2545 = vmatpush.bf16.msra.mxu0 %v2164
    %2546 = vmatpush.bf16.msra.mxu0 %v2160
    %2547 = vmatpush.bf16.msra.mxu0 %v2156
    %2548 = vmatpush.bf16.msra.mxu0 %v2152
    %2549 = vmatpush.bf16.msra.mxu0 %v2148
    %2550 = vmatpush.bf16.msra.mxu0 %v2144
    %2551 = vmatpush.bf16.msra.mxu0 %v2140
    %2552 = vmatpush.bf16.msra.mxu0 %v2136
    %2553 = vmatmul.bf16.gmra.mxu0 %v1606
    %v2554 = vpop.f32.mrf.mxu0
    %v2555 = vadd.f32 %v1744, %v2554
    %v2556 = vpop.f32.mrf.mxu0
    %2557 = vdwg.mxu0
    %2558 = vmatpush.bf16.msra.mxu0 %v2196
    %2559 = vmatpush.bf16.msra.mxu0 %v2192
    %2560 = vmatpush.bf16.msra.mxu0 %v2188
    %2561 = vmatpush.bf16.msra.mxu0 %v2184
    %2562 = vmatpush.bf16.msra.mxu0 %v2180
    %2563 = vmatpush.bf16.msra.mxu0 %v2176
    %2564 = vmatpush.bf16.msra.mxu0 %v2172
    %2565 = vmatpush.bf16.msra.mxu0 %v2168
    %2566 = vmatmul.bf16.gmra.mxu0 %v1607
    %v2567 = vpop.f32.mrf.mxu0
    %v2568 = vadd.f32 %v2555, %v2567
    %v2569 = vpop.f32.mrf.mxu0
    %2570 = vdwg.mxu0
    %2571 = vmatpush.bf16.msra.mxu0 %v2228
    %2572 = vmatpush.bf16.msra.mxu0 %v2224
    %2573 = vmatpush.bf16.msra.mxu0 %v2220
    %2574 = vmatpush.bf16.msra.mxu0 %v2216
    %2575 = vmatpush.bf16.msra.mxu0 %v2212
    %2576 = vmatpush.bf16.msra.mxu0 %v2208
    %2577 = vmatpush.bf16.msra.mxu0 %v2204
    %2578 = vmatpush.bf16.msra.mxu0 %v2200
    %2579 = vmatmul.bf16.gmra.mxu0 %v1608
    %v2580 = vpop.f32.mrf.mxu0
    %v2581 = vadd.f32 %v2568, %v2580
    %v2582 = vpop.f32.mrf.mxu0
    %2583 = vdwg.mxu0
    %2584 = vmatpush.bf16.msra.mxu0 %v2260
    %2585 = vmatpush.bf16.msra.mxu0 %v2256
    %2586 = vmatpush.bf16.msra.mxu0 %v2252
    %2587 = vmatpush.bf16.msra.mxu0 %v2248
    %2588 = vmatpush.bf16.msra.mxu0 %v2244
    %2589 = vmatpush.bf16.msra.mxu0 %v2240
    %2590 = vmatpush.bf16.msra.mxu0 %v2236
    %2591 = vmatpush.bf16.msra.mxu0 %v2232
    %2592 = vmatmul.bf16.gmra.mxu0 %v1609
    %v2593 = vpop.f32.mrf.mxu0
    %v2594 = vadd.f32 %v2581, %v2593
    %v2595 = vpop.f32.mrf.mxu0
    %2596 = vdwg.mxu0
    %v2597 = vmax.f32 %v2438, 0.0
    %v2598 = vmax.f32 %v2490, 0.0
    %v2599 = vmax.f32 %v2542, 0.0
    %v2600 = vmax.f32 %v2594, 0.0
    %v2601 = vpack.c.bf16 %v2597, %v2597
    %v2602 = vpack.c.bf16 %v2598, %v2598
    %v2603 = vpack.c.bf16 %v2599, %v2599
    %v2604 = vpack.c.bf16 %v2600, %v2600
    %v2605 = vld [vmem:[#allocation8] sm:$0xff]
    %v2606 = vld [vmem:[#allocation8 + $0x8] sm:$0xff]
    %v2607 = vld [vmem:[#allocation8 + $0x10] sm:$0xff]
    %v2608 = vld [vmem:[#allocation8 + $0x18] sm:$0xff]
    %v2609 = vld [vmem:[#allocation8 + $0x20] sm:$0xff]
    %v2610 = vld [vmem:[#allocation8 + $0x28] sm:$0xff]
    %v2611 = vld [vmem:[#allocation8 + $0x30] sm:$0xff]
    %v2612 = vld [vmem:[#allocation8 + $0x38] sm:$0xff]
    %v2613 = vld [vmem:[#allocation8 + $0x40] sm:$0xff]
    %v2614 = vld [vmem:[#allocation8 + $0x48] sm:$0xff]
    %v2615 = vld [vmem:[#allocation8 + $0x50] sm:$0xff]
    %v2616 = vld [vmem:[#allocation8 + $0x58] sm:$0xff]
    %v2617 = vld [vmem:[#allocation8 + $0x60] sm:$0xff]
    %v2618 = vld [vmem:[#allocation8 + $0x68] sm:$0xff]
    %v2619 = vld [vmem:[#allocation8 + $0x70] sm:$0xff]
    %v2620 = vld [vmem:[#allocation8 + $0x78] sm:$0xff]
    %v2621 = vld [vmem:[#allocation8 + $0x80] sm:$0xff]
    %v2622 = vld [vmem:[#allocation8 + $0x88] sm:$0xff]
    %v2623 = vld [vmem:[#allocation8 + $0x90] sm:$0xff]
    %v2624 = vld [vmem:[#allocation8 + $0x98] sm:$0xff]
    %v2625 = vld [vmem:[#allocation8 + $0xa0] sm:$0xff]
    %v2626 = vld [vmem:[#allocation8 + $0xa8] sm:$0xff]
    %v2627 = vld [vmem:[#allocation8 + $0xb0] sm:$0xff]
    %v2628 = vld [vmem:[#allocation8 + $0xb8] sm:$0xff]
    %v2629 = vld [vmem:[#allocation8 + $0xc0] sm:$0xff]
    %v2630 = vld [vmem:[#allocation8 + $0xc8] sm:$0xff]
    %v2631 = vld [vmem:[#allocation8 + $0xd0] sm:$0xff]
    %v2632 = vld [vmem:[#allocation8 + $0xd8] sm:$0xff]
    %v2633 = vld [vmem:[#allocation8 + $0xe0] sm:$0xff]
    %v2634 = vld [vmem:[#allocation8 + $0xe8] sm:$0xff]
    %v2635 = vld [vmem:[#allocation8 + $0xf0] sm:$0xff]
    %v2636 = vld [vmem:[#allocation8 + $0xf8] sm:$0xff]
    %v2637 = vld [vmem:[#allocation8 + $0x100] sm:$0xff]
    %v2638 = vld [vmem:[#allocation8 + $0x108] sm:$0xff]
    %v2639 = vld [vmem:[#allocation8 + $0x110] sm:$0xff]
    %v2640 = vld [vmem:[#allocation8 + $0x118] sm:$0xff]
    %v2641 = vld [vmem:[#allocation8 + $0x120] sm:$0xff]
    %v2642 = vld [vmem:[#allocation8 + $0x128] sm:$0xff]
    %v2643 = vld [vmem:[#allocation8 + $0x130] sm:$0xff]
    %v2644 = vld [vmem:[#allocation8 + $0x138] sm:$0xff]
    %v2645 = vld [vmem:[#allocation8 + $0x140] sm:$0xff]
    %v2646 = vld [vmem:[#allocation8 + $0x148] sm:$0xff]
    %v2647 = vld [vmem:[#allocation8 + $0x150] sm:$0xff]
    %v2648 = vld [vmem:[#allocation8 + $0x158] sm:$0xff]
    %v2649 = vld [vmem:[#allocation8 + $0x160] sm:$0xff]
    %v2650 = vld [vmem:[#allocation8 + $0x168] sm:$0xff]
    %v2651 = vld [vmem:[#allocation8 + $0x170] sm:$0xff]
    %v2652 = vld [vmem:[#allocation8 + $0x178] sm:$0xff]
    %v2653 = vld [vmem:[#allocation8 + $0x180] sm:$0xff]
    %v2654 = vld [vmem:[#allocation8 + $0x188] sm:$0xff]
    %v2655 = vld [vmem:[#allocation8 + $0x190] sm:$0xff]
    %v2656 = vld [vmem:[#allocation8 + $0x198] sm:$0xff]
    %v2657 = vld [vmem:[#allocation8 + $0x1a0] sm:$0xff]
    %v2658 = vld [vmem:[#allocation8 + $0x1a8] sm:$0xff]
    %v2659 = vld [vmem:[#allocation8 + $0x1b0] sm:$0xff]
    %v2660 = vld [vmem:[#allocation8 + $0x1b8] sm:$0xff]
    %v2661 = vld [vmem:[#allocation8 + $0x1c0] sm:$0xff]
    %v2662 = vld [vmem:[#allocation8 + $0x1c8] sm:$0xff]
    %v2663 = vld [vmem:[#allocation8 + $0x1d0] sm:$0xff]
    %v2664 = vld [vmem:[#allocation8 + $0x1d8] sm:$0xff]
    %v2665 = vld [vmem:[#allocation8 + $0x1e0] sm:$0xff]
    %v2666 = vld [vmem:[#allocation8 + $0x1e8] sm:$0xff]
    %v2667 = vld [vmem:[#allocation8 + $0x1f0] sm:$0xff]
    %v2668 = vld [vmem:[#allocation8 + $0x1f8] sm:$0xff]
    %v2669 = vld [vmem:[#allocation8 + $0x200] sm:$0xff]
    %v2670 = vld [vmem:[#allocation8 + $0x208] sm:$0xff]
    %v2671 = vld [vmem:[#allocation8 + $0x210] sm:$0xff]
    %v2672 = vld [vmem:[#allocation8 + $0x218] sm:$0xff]
    %v2673 = vld [vmem:[#allocation8 + $0x220] sm:$0xff]
    %v2674 = vld [vmem:[#allocation8 + $0x228] sm:$0xff]
    %v2675 = vld [vmem:[#allocation8 + $0x230] sm:$0xff]
    %v2676 = vld [vmem:[#allocation8 + $0x238] sm:$0xff]
    %v2677 = vld [vmem:[#allocation8 + $0x240] sm:$0xff]
    %v2678 = vld [vmem:[#allocation8 + $0x248] sm:$0xff]
    %v2679 = vld [vmem:[#allocation8 + $0x250] sm:$0xff]
    %v2680 = vld [vmem:[#allocation8 + $0x258] sm:$0xff]
    %v2681 = vld [vmem:[#allocation8 + $0x260] sm:$0xff]
    %v2682 = vld [vmem:[#allocation8 + $0x268] sm:$0xff]
    %v2683 = vld [vmem:[#allocation8 + $0x270] sm:$0xff]
    %v2684 = vld [vmem:[#allocation8 + $0x278] sm:$0xff]
    %v2685 = vld [vmem:[#allocation8 + $0x280] sm:$0xff]
    %v2686 = vld [vmem:[#allocation8 + $0x288] sm:$0xff]
    %v2687 = vld [vmem:[#allocation8 + $0x290] sm:$0xff]
    %v2688 = vld [vmem:[#allocation8 + $0x298] sm:$0xff]
    %v2689 = vld [vmem:[#allocation8 + $0x2a0] sm:$0xff]
    %v2690 = vld [vmem:[#allocation8 + $0x2a8] sm:$0xff]
    %v2691 = vld [vmem:[#allocation8 + $0x2b0] sm:$0xff]
    %v2692 = vld [vmem:[#allocation8 + $0x2b8] sm:$0xff]
    %v2693 = vld [vmem:[#allocation8 + $0x2c0] sm:$0xff]
    %v2694 = vld [vmem:[#allocation8 + $0x2c8] sm:$0xff]
    %v2695 = vld [vmem:[#allocation8 + $0x2d0] sm:$0xff]
    %v2696 = vld [vmem:[#allocation8 + $0x2d8] sm:$0xff]
    %v2697 = vld [vmem:[#allocation8 + $0x2e0] sm:$0xff]
    %v2698 = vld [vmem:[#allocation8 + $0x2e8] sm:$0xff]
    %v2699 = vld [vmem:[#allocation8 + $0x2f0] sm:$0xff]
    %v2700 = vld [vmem:[#allocation8 + $0x2f8] sm:$0xff]
    %v2701 = vld [vmem:[#allocation8 + $0x300] sm:$0xff]
    %v2702 = vld [vmem:[#allocation8 + $0x308] sm:$0xff]
    %v2703 = vld [vmem:[#allocation8 + $0x310] sm:$0xff]
    %v2704 = vld [vmem:[#allocation8 + $0x318] sm:$0xff]
    %v2705 = vld [vmem:[#allocation8 + $0x320] sm:$0xff]
    %v2706 = vld [vmem:[#allocation8 + $0x328] sm:$0xff]
    %v2707 = vld [vmem:[#allocation8 + $0x330] sm:$0xff]
    %v2708 = vld [vmem:[#allocation8 + $0x338] sm:$0xff]
    %v2709 = vld [vmem:[#allocation8 + $0x340] sm:$0xff]
    %v2710 = vld [vmem:[#allocation8 + $0x348] sm:$0xff]
    %v2711 = vld [vmem:[#allocation8 + $0x350] sm:$0xff]
    %v2712 = vld [vmem:[#allocation8 + $0x358] sm:$0xff]
    %v2713 = vld [vmem:[#allocation8 + $0x360] sm:$0xff]
    %v2714 = vld [vmem:[#allocation8 + $0x368] sm:$0xff]
    %v2715 = vld [vmem:[#allocation8 + $0x370] sm:$0xff]
    %v2716 = vld [vmem:[#allocation8 + $0x378] sm:$0xff]
    %v2717 = vld [vmem:[#allocation8 + $0x380] sm:$0xff]
    %v2718 = vld [vmem:[#allocation8 + $0x388] sm:$0xff]
    %v2719 = vld [vmem:[#allocation8 + $0x390] sm:$0xff]
    %v2720 = vld [vmem:[#allocation8 + $0x398] sm:$0xff]
    %v2721 = vld [vmem:[#allocation8 + $0x3a0] sm:$0xff]
    %v2722 = vld [vmem:[#allocation8 + $0x3a8] sm:$0xff]
    %v2723 = vld [vmem:[#allocation8 + $0x3b0] sm:$0xff]
    %v2724 = vld [vmem:[#allocation8 + $0x3b8] sm:$0xff]
    %v2725 = vld [vmem:[#allocation8 + $0x3c0] sm:$0xff]
    %v2726 = vld [vmem:[#allocation8 + $0x3c8] sm:$0xff]
    %v2727 = vld [vmem:[#allocation8 + $0x3d0] sm:$0xff]
    %v2728 = vld [vmem:[#allocation8 + $0x3d8] sm:$0xff]
    %v2729 = vld [vmem:[#allocation8 + $0x3e0] sm:$0xff]
    %v2730 = vld [vmem:[#allocation8 + $0x3e8] sm:$0xff]
    %v2731 = vld [vmem:[#allocation8 + $0x3f0] sm:$0xff]
    %v2732 = vld [vmem:[#allocation8 + $0x3f8] sm:$0xff]
    %s2733 = scalar_lea.vmem %s7, 2
    %v2734 = vld [vmem:[%s2733] ss:$4 sm:$0xf]
    %v2736 = vperm.slane %v2734, 0
    %v2737 = vperm.slane %v2734, 1
    %v2738 = vperm.slane %v2734, 2
    %v2739 = vperm.slane %v2734, 3
    %v2872 = vunpack.c.l.b16 %v2605
    %v2873 = vunpack.c.h.b16 %v2605
    %v2874 = vunpack.c.l.b16 %v2606
    %v2875 = vunpack.c.h.b16 %v2606
    %v2876 = vunpack.c.l.b16 %v2607
    %v2877 = vunpack.c.h.b16 %v2607
    %v2878 = vunpack.c.l.b16 %v2608
    %v2879 = vunpack.c.h.b16 %v2608
    %v2880 = vunpack.c.l.b16 %v2609
    %v2881 = vunpack.c.h.b16 %v2609
    %v2882 = vunpack.c.l.b16 %v2610
    %v2883 = vunpack.c.h.b16 %v2610
    %v2884 = vunpack.c.l.b16 %v2611
    %v2885 = vunpack.c.h.b16 %v2611
    %v2886 = vunpack.c.l.b16 %v2612
    %v2887 = vunpack.c.h.b16 %v2612
    %v2888 = vunpack.c.l.b16 %v2613
    %v2889 = vunpack.c.h.b16 %v2613
    %v2890 = vunpack.c.l.b16 %v2614
    %v2891 = vunpack.c.h.b16 %v2614
    %v2892 = vunpack.c.l.b16 %v2615
    %v2893 = vunpack.c.h.b16 %v2615
    %v2894 = vunpack.c.l.b16 %v2616
    %v2895 = vunpack.c.h.b16 %v2616
    %v2896 = vunpack.c.l.b16 %v2617
    %v2897 = vunpack.c.h.b16 %v2617
    %v2898 = vunpack.c.l.b16 %v2618
    %v2899 = vunpack.c.h.b16 %v2618
    %v2900 = vunpack.c.l.b16 %v2619
    %v2901 = vunpack.c.h.b16 %v2619
    %v2902 = vunpack.c.l.b16 %v2620
    %v2903 = vunpack.c.h.b16 %v2620
    %v2904 = vunpack.c.l.b16 %v2621
    %v2905 = vunpack.c.h.b16 %v2621
    %v2906 = vunpack.c.l.b16 %v2622
    %v2907 = vunpack.c.h.b16 %v2622
    %v2908 = vunpack.c.l.b16 %v2623
    %v2909 = vunpack.c.h.b16 %v2623
    %v2910 = vunpack.c.l.b16 %v2624
    %v2911 = vunpack.c.h.b16 %v2624
    %v2912 = vunpack.c.l.b16 %v2625
    %v2913 = vunpack.c.h.b16 %v2625
    %v2914 = vunpack.c.l.b16 %v2626
    %v2915 = vunpack.c.h.b16 %v2626
    %v2916 = vunpack.c.l.b16 %v2627
    %v2917 = vunpack.c.h.b16 %v2627
    %v2918 = vunpack.c.l.b16 %v2628
    %v2919 = vunpack.c.h.b16 %v2628
    %v2920 = vunpack.c.l.b16 %v2629
    %v2921 = vunpack.c.h.b16 %v2629
    %v2922 = vunpack.c.l.b16 %v2630
    %v2923 = vunpack.c.h.b16 %v2630
    %v2924 = vunpack.c.l.b16 %v2631
    %v2925 = vunpack.c.h.b16 %v2631
    %v2926 = vunpack.c.l.b16 %v2632
    %v2927 = vunpack.c.h.b16 %v2632
    %v2928 = vunpack.c.l.b16 %v2633
    %v2929 = vunpack.c.h.b16 %v2633
    %v2930 = vunpack.c.l.b16 %v2634
    %v2931 = vunpack.c.h.b16 %v2634
    %v2932 = vunpack.c.l.b16 %v2635
    %v2933 = vunpack.c.h.b16 %v2635
    %v2934 = vunpack.c.l.b16 %v2636
    %v2935 = vunpack.c.h.b16 %v2636
    %v2936 = vunpack.c.l.b16 %v2637
    %v2937 = vunpack.c.h.b16 %v2637
    %v2938 = vunpack.c.l.b16 %v2638
    %v2939 = vunpack.c.h.b16 %v2638
    %v2940 = vunpack.c.l.b16 %v2639
    %v2941 = vunpack.c.h.b16 %v2639
    %v2942 = vunpack.c.l.b16 %v2640
    %v2943 = vunpack.c.h.b16 %v2640
    %v2944 = vunpack.c.l.b16 %v2641
    %v2945 = vunpack.c.h.b16 %v2641
    %v2946 = vunpack.c.l.b16 %v2642
    %v2947 = vunpack.c.h.b16 %v2642
    %v2948 = vunpack.c.l.b16 %v2643
    %v2949 = vunpack.c.h.b16 %v2643
    %v2950 = vunpack.c.l.b16 %v2644
    %v2951 = vunpack.c.h.b16 %v2644
    %v2952 = vunpack.c.l.b16 %v2645
    %v2953 = vunpack.c.h.b16 %v2645
    %v2954 = vunpack.c.l.b16 %v2646
    %v2955 = vunpack.c.h.b16 %v2646
    %v2956 = vunpack.c.l.b16 %v2647
    %v2957 = vunpack.c.h.b16 %v2647
    %v2958 = vunpack.c.l.b16 %v2648
    %v2959 = vunpack.c.h.b16 %v2648
    %v2960 = vunpack.c.l.b16 %v2649
    %v2961 = vunpack.c.h.b16 %v2649
    %v2962 = vunpack.c.l.b16 %v2650
    %v2963 = vunpack.c.h.b16 %v2650
    %v2964 = vunpack.c.l.b16 %v2651
    %v2965 = vunpack.c.h.b16 %v2651
    %v2966 = vunpack.c.l.b16 %v2652
    %v2967 = vunpack.c.h.b16 %v2652
    %v2968 = vunpack.c.l.b16 %v2653
    %v2969 = vunpack.c.h.b16 %v2653
    %v2970 = vunpack.c.l.b16 %v2654
    %v2971 = vunpack.c.h.b16 %v2654
    %v2972 = vunpack.c.l.b16 %v2655
    %v2973 = vunpack.c.h.b16 %v2655
    %v2974 = vunpack.c.l.b16 %v2656
    %v2975 = vunpack.c.h.b16 %v2656
    %v2976 = vunpack.c.l.b16 %v2657
    %v2977 = vunpack.c.h.b16 %v2657
    %v2978 = vunpack.c.l.b16 %v2658
    %v2979 = vunpack.c.h.b16 %v2658
    %v2980 = vunpack.c.l.b16 %v2659
    %v2981 = vunpack.c.h.b16 %v2659
    %v2982 = vunpack.c.l.b16 %v2660
    %v2983 = vunpack.c.h.b16 %v2660
    %v2984 = vunpack.c.l.b16 %v2661
    %v2985 = vunpack.c.h.b16 %v2661
    %v2986 = vunpack.c.l.b16 %v2662
    %v2987 = vunpack.c.h.b16 %v2662
    %v2988 = vunpack.c.l.b16 %v2663
    %v2989 = vunpack.c.h.b16 %v2663
    %v2990 = vunpack.c.l.b16 %v2664
    %v2991 = vunpack.c.h.b16 %v2664
    %v2992 = vunpack.c.l.b16 %v2665
    %v2993 = vunpack.c.h.b16 %v2665
    %v2994 = vunpack.c.l.b16 %v2666
    %v2995 = vunpack.c.h.b16 %v2666
    %v2996 = vunpack.c.l.b16 %v2667
    %v2997 = vunpack.c.h.b16 %v2667
    %v2998 = vunpack.c.l.b16 %v2668
    %v2999 = vunpack.c.h.b16 %v2668
    %v3000 = vunpack.c.l.b16 %v2669
    %v3001 = vunpack.c.h.b16 %v2669
    %v3002 = vunpack.c.l.b16 %v2670
    %v3003 = vunpack.c.h.b16 %v2670
    %v3004 = vunpack.c.l.b16 %v2671
    %v3005 = vunpack.c.h.b16 %v2671
    %v3006 = vunpack.c.l.b16 %v2672
    %v3007 = vunpack.c.h.b16 %v2672
    %v3008 = vunpack.c.l.b16 %v2673
    %v3009 = vunpack.c.h.b16 %v2673
    %v3010 = vunpack.c.l.b16 %v2674
    %v3011 = vunpack.c.h.b16 %v2674
    %v3012 = vunpack.c.l.b16 %v2675
    %v3013 = vunpack.c.h.b16 %v2675
    %v3014 = vunpack.c.l.b16 %v2676
    %v3015 = vunpack.c.h.b16 %v2676
    %v3016 = vunpack.c.l.b16 %v2677
    %v3017 = vunpack.c.h.b16 %v2677
    %v3018 = vunpack.c.l.b16 %v2678
    %v3019 = vunpack.c.h.b16 %v2678
    %v3020 = vunpack.c.l.b16 %v2679
    %v3021 = vunpack.c.h.b16 %v2679
    %v3022 = vunpack.c.l.b16 %v2680
    %v3023 = vunpack.c.h.b16 %v2680
    %v3024 = vunpack.c.l.b16 %v2681
    %v3025 = vunpack.c.h.b16 %v2681
    %v3026 = vunpack.c.l.b16 %v2682
    %v3027 = vunpack.c.h.b16 %v2682
    %v3028 = vunpack.c.l.b16 %v2683
    %v3029 = vunpack.c.h.b16 %v2683
    %v3030 = vunpack.c.l.b16 %v2684
    %v3031 = vunpack.c.h.b16 %v2684
    %v3032 = vunpack.c.l.b16 %v2685
    %v3033 = vunpack.c.h.b16 %v2685
    %v3034 = vunpack.c.l.b16 %v2686
    %v3035 = vunpack.c.h.b16 %v2686
    %v3036 = vunpack.c.l.b16 %v2687
    %v3037 = vunpack.c.h.b16 %v2687
    %v3038 = vunpack.c.l.b16 %v2688
    %v3039 = vunpack.c.h.b16 %v2688
    %v3040 = vunpack.c.l.b16 %v2689
    %v3041 = vunpack.c.h.b16 %v2689
    %v3042 = vunpack.c.l.b16 %v2690
    %v3043 = vunpack.c.h.b16 %v2690
    %v3044 = vunpack.c.l.b16 %v2691
    %v3045 = vunpack.c.h.b16 %v2691
    %v3046 = vunpack.c.l.b16 %v2692
    %v3047 = vunpack.c.h.b16 %v2692
    %v3048 = vunpack.c.l.b16 %v2693
    %v3049 = vunpack.c.h.b16 %v2693
    %v3050 = vunpack.c.l.b16 %v2694
    %v3051 = vunpack.c.h.b16 %v2694
    %v3052 = vunpack.c.l.b16 %v2695
    %v3053 = vunpack.c.h.b16 %v2695
    %v3054 = vunpack.c.l.b16 %v2696
    %v3055 = vunpack.c.h.b16 %v2696
    %v3056 = vunpack.c.l.b16 %v2697
    %v3057 = vunpack.c.h.b16 %v2697
    %v3058 = vunpack.c.l.b16 %v2698
    %v3059 = vunpack.c.h.b16 %v2698
    %v3060 = vunpack.c.l.b16 %v2699
    %v3061 = vunpack.c.h.b16 %v2699
    %v3062 = vunpack.c.l.b16 %v2700
    %v3063 = vunpack.c.h.b16 %v2700
    %v3064 = vunpack.c.l.b16 %v2701
    %v3065 = vunpack.c.h.b16 %v2701
    %v3066 = vunpack.c.l.b16 %v2702
    %v3067 = vunpack.c.h.b16 %v2702
    %v3068 = vunpack.c.l.b16 %v2703
    %v3069 = vunpack.c.h.b16 %v2703
    %v3070 = vunpack.c.l.b16 %v2704
    %v3071 = vunpack.c.h.b16 %v2704
    %v3072 = vunpack.c.l.b16 %v2705
    %v3073 = vunpack.c.h.b16 %v2705
    %v3074 = vunpack.c.l.b16 %v2706
    %v3075 = vunpack.c.h.b16 %v2706
    %v3076 = vunpack.c.l.b16 %v2707
    %v3077 = vunpack.c.h.b16 %v2707
    %v3078 = vunpack.c.l.b16 %v2708
    %v3079 = vunpack.c.h.b16 %v2708
    %v3080 = vunpack.c.l.b16 %v2709
    %v3081 = vunpack.c.h.b16 %v2709
    %v3082 = vunpack.c.l.b16 %v2710
    %v3083 = vunpack.c.h.b16 %v2710
    %v3084 = vunpack.c.l.b16 %v2711
    %v3085 = vunpack.c.h.b16 %v2711
    %v3086 = vunpack.c.l.b16 %v2712
    %v3087 = vunpack.c.h.b16 %v2712
    %v3088 = vunpack.c.l.b16 %v2713
    %v3089 = vunpack.c.h.b16 %v2713
    %v3090 = vunpack.c.l.b16 %v2714
    %v3091 = vunpack.c.h.b16 %v2714
    %v3092 = vunpack.c.l.b16 %v2715
    %v3093 = vunpack.c.h.b16 %v2715
    %v3094 = vunpack.c.l.b16 %v2716
    %v3095 = vunpack.c.h.b16 %v2716
    %v3096 = vunpack.c.l.b16 %v2717
    %v3097 = vunpack.c.h.b16 %v2717
    %v3098 = vunpack.c.l.b16 %v2718
    %v3099 = vunpack.c.h.b16 %v2718
    %v3100 = vunpack.c.l.b16 %v2719
    %v3101 = vunpack.c.h.b16 %v2719
    %v3102 = vunpack.c.l.b16 %v2720
    %v3103 = vunpack.c.h.b16 %v2720
    %v3104 = vunpack.c.l.b16 %v2721
    %v3105 = vunpack.c.h.b16 %v2721
    %v3106 = vunpack.c.l.b16 %v2722
    %v3107 = vunpack.c.h.b16 %v2722
    %v3108 = vunpack.c.l.b16 %v2723
    %v3109 = vunpack.c.h.b16 %v2723
    %v3110 = vunpack.c.l.b16 %v2724
    %v3111 = vunpack.c.h.b16 %v2724
    %v3112 = vunpack.c.l.b16 %v2725
    %v3113 = vunpack.c.h.b16 %v2725
    %v3114 = vunpack.c.l.b16 %v2726
    %v3115 = vunpack.c.h.b16 %v2726
    %v3116 = vunpack.c.l.b16 %v2727
    %v3117 = vunpack.c.h.b16 %v2727
    %v3118 = vunpack.c.l.b16 %v2728
    %v3119 = vunpack.c.h.b16 %v2728
    %v3120 = vunpack.c.l.b16 %v2729
    %v3121 = vunpack.c.h.b16 %v2729
    %v3122 = vunpack.c.l.b16 %v2730
    %v3123 = vunpack.c.h.b16 %v2730
    %v3124 = vunpack.c.l.b16 %v2731
    %v3125 = vunpack.c.h.b16 %v2731
    %v3126 = vunpack.c.l.b16 %v2732
    %v3127 = vunpack.c.h.b16 %v2732
    %v3128 = vpack.c.b16 %v2876, %v2872
    %v3129 = vpack.c.b16 %v2877, %v2873
    %v3130 = vpack.c.b16 %v2878, %v2874
    %v3131 = vpack.c.b16 %v2879, %v2875
    %v3132 = vpack.c.b16 %v2884, %v2880
    %v3133 = vpack.c.b16 %v2885, %v2881
    %v3134 = vpack.c.b16 %v2886, %v2882
    %v3135 = vpack.c.b16 %v2887, %v2883
    %v3136 = vpack.c.b16 %v2892, %v2888
    %v3137 = vpack.c.b16 %v2893, %v2889
    %v3138 = vpack.c.b16 %v2894, %v2890
    %v3139 = vpack.c.b16 %v2895, %v2891
    %v3140 = vpack.c.b16 %v2900, %v2896
    %v3141 = vpack.c.b16 %v2901, %v2897
    %v3142 = vpack.c.b16 %v2902, %v2898
    %v3143 = vpack.c.b16 %v2903, %v2899
    %v3144 = vpack.c.b16 %v2908, %v2904
    %v3145 = vpack.c.b16 %v2909, %v2905
    %v3146 = vpack.c.b16 %v2910, %v2906
    %v3147 = vpack.c.b16 %v2911, %v2907
    %v3148 = vpack.c.b16 %v2916, %v2912
    %v3149 = vpack.c.b16 %v2917, %v2913
    %v3150 = vpack.c.b16 %v2918, %v2914
    %v3151 = vpack.c.b16 %v2919, %v2915
    %v3152 = vpack.c.b16 %v2924, %v2920
    %v3153 = vpack.c.b16 %v2925, %v2921
    %v3154 = vpack.c.b16 %v2926, %v2922
    %v3155 = vpack.c.b16 %v2927, %v2923
    %v3156 = vpack.c.b16 %v2932, %v2928
    %v3157 = vpack.c.b16 %v2933, %v2929
    %v3158 = vpack.c.b16 %v2934, %v2930
    %v3159 = vpack.c.b16 %v2935, %v2931
    %v3160 = vpack.c.b16 %v2940, %v2936
    %v3161 = vpack.c.b16 %v2941, %v2937
    %v3162 = vpack.c.b16 %v2942, %v2938
    %v3163 = vpack.c.b16 %v2943, %v2939
    %v3164 = vpack.c.b16 %v2948, %v2944
    %v3165 = vpack.c.b16 %v2949, %v2945
    %v3166 = vpack.c.b16 %v2950, %v2946
    %v3167 = vpack.c.b16 %v2951, %v2947
    %v3168 = vpack.c.b16 %v2956, %v2952
    %v3169 = vpack.c.b16 %v2957, %v2953
    %v3170 = vpack.c.b16 %v2958, %v2954
    %v3171 = vpack.c.b16 %v2959, %v2955
    %v3172 = vpack.c.b16 %v2964, %v2960
    %v3173 = vpack.c.b16 %v2965, %v2961
    %v3174 = vpack.c.b16 %v2966, %v2962
    %v3175 = vpack.c.b16 %v2967, %v2963
    %v3176 = vpack.c.b16 %v2972, %v2968
    %v3177 = vpack.c.b16 %v2973, %v2969
    %v3178 = vpack.c.b16 %v2974, %v2970
    %v3179 = vpack.c.b16 %v2975, %v2971
    %v3180 = vpack.c.b16 %v2980, %v2976
    %v3181 = vpack.c.b16 %v2981, %v2977
    %v3182 = vpack.c.b16 %v2982, %v2978
    %v3183 = vpack.c.b16 %v2983, %v2979
    %v3184 = vpack.c.b16 %v2988, %v2984
    %v3185 = vpack.c.b16 %v2989, %v2985
    %v3186 = vpack.c.b16 %v2990, %v2986
    %v3187 = vpack.c.b16 %v2991, %v2987
    %v3188 = vpack.c.b16 %v2996, %v2992
    %v3189 = vpack.c.b16 %v2997, %v2993
    %v3190 = vpack.c.b16 %v2998, %v2994
    %v3191 = vpack.c.b16 %v2999, %v2995
    %v3192 = vpack.c.b16 %v3004, %v3000
    %v3193 = vpack.c.b16 %v3005, %v3001
    %v3194 = vpack.c.b16 %v3006, %v3002
    %v3195 = vpack.c.b16 %v3007, %v3003
    %v3196 = vpack.c.b16 %v3012, %v3008
    %v3197 = vpack.c.b16 %v3013, %v3009
    %v3198 = vpack.c.b16 %v3014, %v3010
    %v3199 = vpack.c.b16 %v3015, %v3011
    %v3200 = vpack.c.b16 %v3020, %v3016
    %v3201 = vpack.c.b16 %v3021, %v3017
    %v3202 = vpack.c.b16 %v3022, %v3018
    %v3203 = vpack.c.b16 %v3023, %v3019
    %v3204 = vpack.c.b16 %v3028, %v3024
    %v3205 = vpack.c.b16 %v3029, %v3025
    %v3206 = vpack.c.b16 %v3030, %v3026
    %v3207 = vpack.c.b16 %v3031, %v3027
    %v3208 = vpack.c.b16 %v3036, %v3032
    %v3209 = vpack.c.b16 %v3037, %v3033
    %v3210 = vpack.c.b16 %v3038, %v3034
    %v3211 = vpack.c.b16 %v3039, %v3035
    %v3212 = vpack.c.b16 %v3044, %v3040
    %v3213 = vpack.c.b16 %v3045, %v3041
    %v3214 = vpack.c.b16 %v3046, %v3042
    %v3215 = vpack.c.b16 %v3047, %v3043
    %v3216 = vpack.c.b16 %v3052, %v3048
    %v3217 = vpack.c.b16 %v3053, %v3049
    %v3218 = vpack.c.b16 %v3054, %v3050
    %v3219 = vpack.c.b16 %v3055, %v3051
    %v3220 = vpack.c.b16 %v3060, %v3056
    %v3221 = vpack.c.b16 %v3061, %v3057
    %v3222 = vpack.c.b16 %v3062, %v3058
    %v3223 = vpack.c.b16 %v3063, %v3059
    %v3224 = vpack.c.b16 %v3068, %v3064
    %v3225 = vpack.c.b16 %v3069, %v3065
    %v3226 = vpack.c.b16 %v3070, %v3066
    %v3227 = vpack.c.b16 %v3071, %v3067
    %v3228 = vpack.c.b16 %v3076, %v3072
    %v3229 = vpack.c.b16 %v3077, %v3073
    %v3230 = vpack.c.b16 %v3078, %v3074
    %v3231 = vpack.c.b16 %v3079, %v3075
    %v3232 = vpack.c.b16 %v3084, %v3080
    %v3233 = vpack.c.b16 %v3085, %v3081
    %v3234 = vpack.c.b16 %v3086, %v3082
    %v3235 = vpack.c.b16 %v3087, %v3083
    %v3236 = vpack.c.b16 %v3092, %v3088
    %v3237 = vpack.c.b16 %v3093, %v3089
    %v3238 = vpack.c.b16 %v3094, %v3090
    %v3239 = vpack.c.b16 %v3095, %v3091
    %v3240 = vpack.c.b16 %v3100, %v3096
    %v3241 = vpack.c.b16 %v3101, %v3097
    %v3242 = vpack.c.b16 %v3102, %v3098
    %v3243 = vpack.c.b16 %v3103, %v3099
    %v3244 = vpack.c.b16 %v3108, %v3104
    %v3245 = vpack.c.b16 %v3109, %v3105
    %v3246 = vpack.c.b16 %v3110, %v3106
    %v3247 = vpack.c.b16 %v3111, %v3107
    %v3248 = vpack.c.b16 %v3116, %v3112
    %v3249 = vpack.c.b16 %v3117, %v3113
    %v3250 = vpack.c.b16 %v3118, %v3114
    %v3251 = vpack.c.b16 %v3119, %v3115
    %v3252 = vpack.c.b16 %v3124, %v3120
    %v3253 = vpack.c.b16 %v3125, %v3121
    %v3254 = vpack.c.b16 %v3126, %v3122
    %v3255 = vpack.c.b16 %v3127, %v3123
    %3384 = vmatpush.bf16.msra.mxu0 %v3156
    %3385 = vmatpush.bf16.msra.mxu0 %v3152
    %3386 = vmatpush.bf16.msra.mxu0 %v3148
    %3387 = vmatpush.bf16.msra.mxu0 %v3144
    %3388 = vmatpush.bf16.msra.mxu0 %v3140
    %3389 = vmatpush.bf16.msra.mxu0 %v3136
    %3390 = vmatpush.bf16.msra.mxu0 %v3132
    %3391 = vmatpush.bf16.msra.mxu0 %v3128
    %3392 = vmatmul.bf16.gmra.mxu0 %v2601
    %v3393 = vpop.f32.mrf.mxu0
    %v3394 = vadd.f32 %v2736, %v3393
    %v3395 = vpop.f32.mrf.mxu0
    %3396 = vdwg.mxu0
    %3397 = vmatpush.bf16.msra.mxu0 %v3188
    %3398 = vmatpush.bf16.msra.mxu0 %v3184
    %3399 = vmatpush.bf16.msra.mxu0 %v3180
    %3400 = vmatpush.bf16.msra.mxu0 %v3176
    %3401 = vmatpush.bf16.msra.mxu0 %v3172
    %3402 = vmatpush.bf16.msra.mxu0 %v3168
    %3403 = vmatpush.bf16.msra.mxu0 %v3164
    %3404 = vmatpush.bf16.msra.mxu0 %v3160
    %3405 = vmatmul.bf16.gmra.mxu0 %v2602
    %v3406 = vpop.f32.mrf.mxu0
    %v3407 = vadd.f32 %v3394, %v3406
    %v3408 = vpop.f32.mrf.mxu0
    %3409 = vdwg.mxu0
    %3410 = vmatpush.bf16.msra.mxu0 %v3220
    %3411 = vmatpush.bf16.msra.mxu0 %v3216
    %3412 = vmatpush.bf16.msra.mxu0 %v3212
    %3413 = vmatpush.bf16.msra.mxu0 %v3208
    %3414 = vmatpush.bf16.msra.mxu0 %v3204
    %3415 = vmatpush.bf16.msra.mxu0 %v3200
    %3416 = vmatpush.bf16.msra.mxu0 %v3196
    %3417 = vmatpush.bf16.msra.mxu0 %v3192
    %3418 = vmatmul.bf16.gmra.mxu0 %v2603
    %v3419 = vpop.f32.mrf.mxu0
    %v3420 = vadd.f32 %v3407, %v3419
    %v3421 = vpop.f32.mrf.mxu0
    %3422 = vdwg.mxu0
    %3423 = vmatpush.bf16.msra.mxu0 %v3252
    %3424 = vmatpush.bf16.msra.mxu0 %v3248
    %3425 = vmatpush.bf16.msra.mxu0 %v3244
    %3426 = vmatpush.bf16.msra.mxu0 %v3240
    %3427 = vmatpush.bf16.msra.mxu0 %v3236
    %3428 = vmatpush.bf16.msra.mxu0 %v3232
    %3429 = vmatpush.bf16.msra.mxu0 %v3228
    %3430 = vmatpush.bf16.msra.mxu0 %v3224
    %3431 = vmatmul.bf16.gmra.mxu0 %v2604
    %v3432 = vpop.f32.mrf.mxu0
    %v3433 = vadd.f32 %v3420, %v3432
    %v3434 = vpop.f32.mrf.mxu0
    %3435 = vdwg.mxu0
    %3436 = vmatpush.bf16.msra.mxu0 %v3157
    %3437 = vmatpush.bf16.msra.mxu0 %v3153
    %3438 = vmatpush.bf16.msra.mxu0 %v3149
    %3439 = vmatpush.bf16.msra.mxu0 %v3145
    %3440 = vmatpush.bf16.msra.mxu0 %v3141
    %3441 = vmatpush.bf16.msra.mxu0 %v3137
    %3442 = vmatpush.bf16.msra.mxu0 %v3133
    %3443 = vmatpush.bf16.msra.mxu0 %v3129
    %3444 = vmatmul.bf16.gmra.mxu0 %v2601
    %v3445 = vpop.f32.mrf.mxu0
    %v3446 = vadd.f32 %v2737, %v3445
    %v3447 = vpop.f32.mrf.mxu0
    %3448 = vdwg.mxu0
    %3449 = vmatpush.bf16.msra.mxu0 %v3189
    %3450 = vmatpush.bf16.msra.mxu0 %v3185
    %3451 = vmatpush.bf16.msra.mxu0 %v3181
    %3452 = vmatpush.bf16.msra.mxu0 %v3177
    %3453 = vmatpush.bf16.msra.mxu0 %v3173
    %3454 = vmatpush.bf16.msra.mxu0 %v3169
    %3455 = vmatpush.bf16.msra.mxu0 %v3165
    %3456 = vmatpush.bf16.msra.mxu0 %v3161
    %3457 = vmatmul.bf16.gmra.mxu0 %v2602
    %v3458 = vpop.f32.mrf.mxu0
    %v3459 = vadd.f32 %v3446, %v3458
    %v3460 = vpop.f32.mrf.mxu0
    %3461 = vdwg.mxu0
    %3462 = vmatpush.bf16.msra.mxu0 %v3221
    %3463 = vmatpush.bf16.msra.mxu0 %v3217
    %3464 = vmatpush.bf16.msra.mxu0 %v3213
    %3465 = vmatpush.bf16.msra.mxu0 %v3209
    %3466 = vmatpush.bf16.msra.mxu0 %v3205
    %3467 = vmatpush.bf16.msra.mxu0 %v3201
    %3468 = vmatpush.bf16.msra.mxu0 %v3197
    %3469 = vmatpush.bf16.msra.mxu0 %v3193
    %3470 = vmatmul.bf16.gmra.mxu0 %v2603
    %v3471 = vpop.f32.mrf.mxu0
    %v3472 = vadd.f32 %v3459, %v3471
    %v3473 = vpop.f32.mrf.mxu0
    %3474 = vdwg.mxu0
    %3475 = vmatpush.bf16.msra.mxu0 %v3253
    %3476 = vmatpush.bf16.msra.mxu0 %v3249
    %3477 = vmatpush.bf16.msra.mxu0 %v3245
    %3478 = vmatpush.bf16.msra.mxu0 %v3241
    %3479 = vmatpush.bf16.msra.mxu0 %v3237
    %3480 = vmatpush.bf16.msra.mxu0 %v3233
    %3481 = vmatpush.bf16.msra.mxu0 %v3229
    %3482 = vmatpush.bf16.msra.mxu0 %v3225
    %3483 = vmatmul.bf16.gmra.mxu0 %v2604
    %v3484 = vpop.f32.mrf.mxu0
    %v3485 = vadd.f32 %v3472, %v3484
    %v3486 = vpop.f32.mrf.mxu0
    %3487 = vdwg.mxu0
    %3488 = vmatpush.bf16.msra.mxu0 %v3158
    %3489 = vmatpush.bf16.msra.mxu0 %v3154
    %3490 = vmatpush.bf16.msra.mxu0 %v3150
    %3491 = vmatpush.bf16.msra.mxu0 %v3146
    %3492 = vmatpush.bf16.msra.mxu0 %v3142
    %3493 = vmatpush.bf16.msra.mxu0 %v3138
    %3494 = vmatpush.bf16.msra.mxu0 %v3134
    %3495 = vmatpush.bf16.msra.mxu0 %v3130
    %3496 = vmatmul.bf16.gmra.mxu0 %v2601
    %v3497 = vpop.f32.mrf.mxu0
    %v3498 = vadd.f32 %v2738, %v3497
    %v3499 = vpop.f32.mrf.mxu0
    %3500 = vdwg.mxu0
    %3501 = vmatpush.bf16.msra.mxu0 %v3190
    %3502 = vmatpush.bf16.msra.mxu0 %v3186
    %3503 = vmatpush.bf16.msra.mxu0 %v3182
    %3504 = vmatpush.bf16.msra.mxu0 %v3178
    %3505 = vmatpush.bf16.msra.mxu0 %v3174
    %3506 = vmatpush.bf16.msra.mxu0 %v3170
    %3507 = vmatpush.bf16.msra.mxu0 %v3166
    %3508 = vmatpush.bf16.msra.mxu0 %v3162
    %3509 = vmatmul.bf16.gmra.mxu0 %v2602
    %v3510 = vpop.f32.mrf.mxu0
    %v3511 = vadd.f32 %v3498, %v3510
    %v3512 = vpop.f32.mrf.mxu0
    %3513 = vdwg.mxu0
    %3514 = vmatpush.bf16.msra.mxu0 %v3222
    %3515 = vmatpush.bf16.msra.mxu0 %v3218
    %3516 = vmatpush.bf16.msra.mxu0 %v3214
    %3517 = vmatpush.bf16.msra.mxu0 %v3210
    %3518 = vmatpush.bf16.msra.mxu0 %v3206
    %3519 = vmatpush.bf16.msra.mxu0 %v3202
    %3520 = vmatpush.bf16.msra.mxu0 %v3198
    %3521 = vmatpush.bf16.msra.mxu0 %v3194
    %3522 = vmatmul.bf16.gmra.mxu0 %v2603
    %v3523 = vpop.f32.mrf.mxu0
    %v3524 = vadd.f32 %v3511, %v3523
    %v3525 = vpop.f32.mrf.mxu0
    %3526 = vdwg.mxu0
    %3527 = vmatpush.bf16.msra.mxu0 %v3254
    %3528 = vmatpush.bf16.msra.mxu0 %v3250
    %3529 = vmatpush.bf16.msra.mxu0 %v3246
    %3530 = vmatpush.bf16.msra.mxu0 %v3242
    %3531 = vmatpush.bf16.msra.mxu0 %v3238
    %3532 = vmatpush.bf16.msra.mxu0 %v3234
    %3533 = vmatpush.bf16.msra.mxu0 %v3230
    %3534 = vmatpush.bf16.msra.mxu0 %v3226
    %3535 = vmatmul.bf16.gmra.mxu0 %v2604
    %v3536 = vpop.f32.mrf.mxu0
    %v3537 = vadd.f32 %v3524, %v3536
    %v3538 = vpop.f32.mrf.mxu0
    %3539 = vdwg.mxu0
    %3540 = vmatpush.bf16.msra.mxu0 %v3159
    %3541 = vmatpush.bf16.msra.mxu0 %v3155
    %3542 = vmatpush.bf16.msra.mxu0 %v3151
    %3543 = vmatpush.bf16.msra.mxu0 %v3147
    %3544 = vmatpush.bf16.msra.mxu0 %v3143
    %3545 = vmatpush.bf16.msra.mxu0 %v3139
    %3546 = vmatpush.bf16.msra.mxu0 %v3135
    %3547 = vmatpush.bf16.msra.mxu0 %v3131
    %3548 = vmatmul.bf16.gmra.mxu0 %v2601
    %v3549 = vpop.f32.mrf.mxu0
    %v3550 = vadd.f32 %v2739, %v3549
    %v3551 = vpop.f32.mrf.mxu0
    %3552 = vdwg.mxu0
    %3553 = vmatpush.bf16.msra.mxu0 %v3191
    %3554 = vmatpush.bf16.msra.mxu0 %v3187
    %3555 = vmatpush.bf16.msra.mxu0 %v3183
    %3556 = vmatpush.bf16.msra.mxu0 %v3179
    %3557 = vmatpush.bf16.msra.mxu0 %v3175
    %3558 = vmatpush.bf16.msra.mxu0 %v3171
    %3559 = vmatpush.bf16.msra.mxu0 %v3167
    %3560 = vmatpush.bf16.msra.mxu0 %v3163
    %3561 = vmatmul.bf16.gmra.mxu0 %v2602
    %v3562 = vpop.f32.mrf.mxu0
    %v3563 = vadd.f32 %v3550, %v3562
    %v3564 = vpop.f32.mrf.mxu0
    %3565 = vdwg.mxu0
    %3566 = vmatpush.bf16.msra.mxu0 %v3223
    %3567 = vmatpush.bf16.msra.mxu0 %v3219
    %3568 = vmatpush.bf16.msra.mxu0 %v3215
    %3569 = vmatpush.bf16.msra.mxu0 %v3211
    %3570 = vmatpush.bf16.msra.mxu0 %v3207
    %3571 = vmatpush.bf16.msra.mxu0 %v3203
    %3572 = vmatpush.bf16.msra.mxu0 %v3199
    %3573 = vmatpush.bf16.msra.mxu0 %v3195
    %3574 = vmatmul.bf16.gmra.mxu0 %v2603
    %v3575 = vpop.f32.mrf.mxu0
    %v3576 = vadd.f32 %v3563, %v3575
    %v3577 = vpop.f32.mrf.mxu0
    %3578 = vdwg.mxu0
    %3579 = vmatpush.bf16.msra.mxu0 %v3255
    %3580 = vmatpush.bf16.msra.mxu0 %v3251
    %3581 = vmatpush.bf16.msra.mxu0 %v3247
    %3582 = vmatpush.bf16.msra.mxu0 %v3243
    %3583 = vmatpush.bf16.msra.mxu0 %v3239
    %3584 = vmatpush.bf16.msra.mxu0 %v3235
    %3585 = vmatpush.bf16.msra.mxu0 %v3231
    %3586 = vmatpush.bf16.msra.mxu0 %v3227
    %3587 = vmatmul.bf16.gmra.mxu0 %v2604
    %v3588 = vpop.f32.mrf.mxu0
    %v3589 = vadd.f32 %v3576, %v3588
    %v3590 = vpop.f32.mrf.mxu0
    %3591 = vdwg.mxu0
    %v3592 = vmax.f32 %v3433, 0.0
    %v3593 = vmax.f32 %v3485, 0.0
    %v3594 = vmax.f32 %v3537, 0.0
    %v3595 = vmax.f32 %v3589, 0.0
    %v3596 = vpack.c.bf16 %v3592, %v3592
    %v3597 = vpack.c.bf16 %v3593, %v3593
    %v3598 = vpack.c.bf16 %v3594, %v3594
    %v3599 = vpack.c.bf16 %v3595, %v3595
    %v3600 = vld [vmem:[#allocation10] sm:$0xff]
    %v3601 = vld [vmem:[#allocation10 + $0x8] sm:$0xff]
    %v3602 = vld [vmem:[#allocation10 + $0x10] sm:$0xff]
    %v3603 = vld [vmem:[#allocation10 + $0x18] sm:$0xff]
    %v3604 = vld [vmem:[#allocation10 + $0x20] sm:$0xff]
    %v3605 = vld [vmem:[#allocation10 + $0x28] sm:$0xff]
    %v3606 = vld [vmem:[#allocation10 + $0x30] sm:$0xff]
    %v3607 = vld [vmem:[#allocation10 + $0x38] sm:$0xff]
    %v3608 = vld [vmem:[#allocation10 + $0x40] sm:$0xff]
    %v3609 = vld [vmem:[#allocation10 + $0x48] sm:$0xff]
    %v3610 = vld [vmem:[#allocation10 + $0x50] sm:$0xff]
    %v3611 = vld [vmem:[#allocation10 + $0x58] sm:$0xff]
    %v3612 = vld [vmem:[#allocation10 + $0x60] sm:$0xff]
    %v3613 = vld [vmem:[#allocation10 + $0x68] sm:$0xff]
    %v3614 = vld [vmem:[#allocation10 + $0x70] sm:$0xff]
    %v3615 = vld [vmem:[#allocation10 + $0x78] sm:$0xff]
    %v3616 = vld [vmem:[#allocation10 + $0x80] sm:$0xff]
    %v3617 = vld [vmem:[#allocation10 + $0x88] sm:$0xff]
    %v3618 = vld [vmem:[#allocation10 + $0x90] sm:$0xff]
    %v3619 = vld [vmem:[#allocation10 + $0x98] sm:$0xff]
    %v3620 = vld [vmem:[#allocation10 + $0xa0] sm:$0xff]
    %v3621 = vld [vmem:[#allocation10 + $0xa8] sm:$0xff]
    %v3622 = vld [vmem:[#allocation10 + $0xb0] sm:$0xff]
    %v3623 = vld [vmem:[#allocation10 + $0xb8] sm:$0xff]
    %v3624 = vld [vmem:[#allocation10 + $0xc0] sm:$0xff]
    %v3625 = vld [vmem:[#allocation10 + $0xc8] sm:$0xff]
    %v3626 = vld [vmem:[#allocation10 + $0xd0] sm:$0xff]
    %v3627 = vld [vmem:[#allocation10 + $0xd8] sm:$0xff]
    %v3628 = vld [vmem:[#allocation10 + $0xe0] sm:$0xff]
    %v3629 = vld [vmem:[#allocation10 + $0xe8] sm:$0xff]
    %v3630 = vld [vmem:[#allocation10 + $0xf0] sm:$0xff]
    %v3631 = vld [vmem:[#allocation10 + $0xf8] sm:$0xff]
    %v3632 = vld [vmem:[#allocation10 + $0x100] sm:$0xff]
    %v3633 = vld [vmem:[#allocation10 + $0x108] sm:$0xff]
    %v3634 = vld [vmem:[#allocation10 + $0x110] sm:$0xff]
    %v3635 = vld [vmem:[#allocation10 + $0x118] sm:$0xff]
    %v3636 = vld [vmem:[#allocation10 + $0x120] sm:$0xff]
    %v3637 = vld [vmem:[#allocation10 + $0x128] sm:$0xff]
    %v3638 = vld [vmem:[#allocation10 + $0x130] sm:$0xff]
    %v3639 = vld [vmem:[#allocation10 + $0x138] sm:$0xff]
    %v3640 = vld [vmem:[#allocation10 + $0x140] sm:$0xff]
    %v3641 = vld [vmem:[#allocation10 + $0x148] sm:$0xff]
    %v3642 = vld [vmem:[#allocation10 + $0x150] sm:$0xff]
    %v3643 = vld [vmem:[#allocation10 + $0x158] sm:$0xff]
    %v3644 = vld [vmem:[#allocation10 + $0x160] sm:$0xff]
    %v3645 = vld [vmem:[#allocation10 + $0x168] sm:$0xff]
    %v3646 = vld [vmem:[#allocation10 + $0x170] sm:$0xff]
    %v3647 = vld [vmem:[#allocation10 + $0x178] sm:$0xff]
    %v3648 = vld [vmem:[#allocation10 + $0x180] sm:$0xff]
    %v3649 = vld [vmem:[#allocation10 + $0x188] sm:$0xff]
    %v3650 = vld [vmem:[#allocation10 + $0x190] sm:$0xff]
    %v3651 = vld [vmem:[#allocation10 + $0x198] sm:$0xff]
    %v3652 = vld [vmem:[#allocation10 + $0x1a0] sm:$0xff]
    %v3653 = vld [vmem:[#allocation10 + $0x1a8] sm:$0xff]
    %v3654 = vld [vmem:[#allocation10 + $0x1b0] sm:$0xff]
    %v3655 = vld [vmem:[#allocation10 + $0x1b8] sm:$0xff]
    %v3656 = vld [vmem:[#allocation10 + $0x1c0] sm:$0xff]
    %v3657 = vld [vmem:[#allocation10 + $0x1c8] sm:$0xff]
    %v3658 = vld [vmem:[#allocation10 + $0x1d0] sm:$0xff]
    %v3659 = vld [vmem:[#allocation10 + $0x1d8] sm:$0xff]
    %v3660 = vld [vmem:[#allocation10 + $0x1e0] sm:$0xff]
    %v3661 = vld [vmem:[#allocation10 + $0x1e8] sm:$0xff]
    %v3662 = vld [vmem:[#allocation10 + $0x1f0] sm:$0xff]
    %v3663 = vld [vmem:[#allocation10 + $0x1f8] sm:$0xff]
    %v3664 = vld [vmem:[#allocation10 + $0x200] sm:$0xff]
    %v3665 = vld [vmem:[#allocation10 + $0x208] sm:$0xff]
    %v3666 = vld [vmem:[#allocation10 + $0x210] sm:$0xff]
    %v3667 = vld [vmem:[#allocation10 + $0x218] sm:$0xff]
    %v3668 = vld [vmem:[#allocation10 + $0x220] sm:$0xff]
    %v3669 = vld [vmem:[#allocation10 + $0x228] sm:$0xff]
    %v3670 = vld [vmem:[#allocation10 + $0x230] sm:$0xff]
    %v3671 = vld [vmem:[#allocation10 + $0x238] sm:$0xff]
    %v3672 = vld [vmem:[#allocation10 + $0x240] sm:$0xff]
    %v3673 = vld [vmem:[#allocation10 + $0x248] sm:$0xff]
    %v3674 = vld [vmem:[#allocation10 + $0x250] sm:$0xff]
    %v3675 = vld [vmem:[#allocation10 + $0x258] sm:$0xff]
    %v3676 = vld [vmem:[#allocation10 + $0x260] sm:$0xff]
    %v3677 = vld [vmem:[#allocation10 + $0x268] sm:$0xff]
    %v3678 = vld [vmem:[#allocation10 + $0x270] sm:$0xff]
    %v3679 = vld [vmem:[#allocation10 + $0x278] sm:$0xff]
    %v3680 = vld [vmem:[#allocation10 + $0x280] sm:$0xff]
    %v3681 = vld [vmem:[#allocation10 + $0x288] sm:$0xff]
    %v3682 = vld [vmem:[#allocation10 + $0x290] sm:$0xff]
    %v3683 = vld [vmem:[#allocation10 + $0x298] sm:$0xff]
    %v3684 = vld [vmem:[#allocation10 + $0x2a0] sm:$0xff]
    %v3685 = vld [vmem:[#allocation10 + $0x2a8] sm:$0xff]
    %v3686 = vld [vmem:[#allocation10 + $0x2b0] sm:$0xff]
    %v3687 = vld [vmem:[#allocation10 + $0x2b8] sm:$0xff]
    %v3688 = vld [vmem:[#allocation10 + $0x2c0] sm:$0xff]
    %v3689 = vld [vmem:[#allocation10 + $0x2c8] sm:$0xff]
    %v3690 = vld [vmem:[#allocation10 + $0x2d0] sm:$0xff]
    %v3691 = vld [vmem:[#allocation10 + $0x2d8] sm:$0xff]
    %v3692 = vld [vmem:[#allocation10 + $0x2e0] sm:$0xff]
    %v3693 = vld [vmem:[#allocation10 + $0x2e8] sm:$0xff]
    %v3694 = vld [vmem:[#allocation10 + $0x2f0] sm:$0xff]
    %v3695 = vld [vmem:[#allocation10 + $0x2f8] sm:$0xff]
    %v3696 = vld [vmem:[#allocation10 + $0x300] sm:$0xff]
    %v3697 = vld [vmem:[#allocation10 + $0x308] sm:$0xff]
    %v3698 = vld [vmem:[#allocation10 + $0x310] sm:$0xff]
    %v3699 = vld [vmem:[#allocation10 + $0x318] sm:$0xff]
    %v3700 = vld [vmem:[#allocation10 + $0x320] sm:$0xff]
    %v3701 = vld [vmem:[#allocation10 + $0x328] sm:$0xff]
    %v3702 = vld [vmem:[#allocation10 + $0x330] sm:$0xff]
    %v3703 = vld [vmem:[#allocation10 + $0x338] sm:$0xff]
    %v3704 = vld [vmem:[#allocation10 + $0x340] sm:$0xff]
    %v3705 = vld [vmem:[#allocation10 + $0x348] sm:$0xff]
    %v3706 = vld [vmem:[#allocation10 + $0x350] sm:$0xff]
    %v3707 = vld [vmem:[#allocation10 + $0x358] sm:$0xff]
    %v3708 = vld [vmem:[#allocation10 + $0x360] sm:$0xff]
    %v3709 = vld [vmem:[#allocation10 + $0x368] sm:$0xff]
    %v3710 = vld [vmem:[#allocation10 + $0x370] sm:$0xff]
    %v3711 = vld [vmem:[#allocation10 + $0x378] sm:$0xff]
    %v3712 = vld [vmem:[#allocation10 + $0x380] sm:$0xff]
    %v3713 = vld [vmem:[#allocation10 + $0x388] sm:$0xff]
    %v3714 = vld [vmem:[#allocation10 + $0x390] sm:$0xff]
    %v3715 = vld [vmem:[#allocation10 + $0x398] sm:$0xff]
    %v3716 = vld [vmem:[#allocation10 + $0x3a0] sm:$0xff]
    %v3717 = vld [vmem:[#allocation10 + $0x3a8] sm:$0xff]
    %v3718 = vld [vmem:[#allocation10 + $0x3b0] sm:$0xff]
    %v3719 = vld [vmem:[#allocation10 + $0x3b8] sm:$0xff]
    %v3720 = vld [vmem:[#allocation10 + $0x3c0] sm:$0xff]
    %v3721 = vld [vmem:[#allocation10 + $0x3c8] sm:$0xff]
    %v3722 = vld [vmem:[#allocation10 + $0x3d0] sm:$0xff]
    %v3723 = vld [vmem:[#allocation10 + $0x3d8] sm:$0xff]
    %v3724 = vld [vmem:[#allocation10 + $0x3e0] sm:$0xff]
    %v3725 = vld [vmem:[#allocation10 + $0x3e8] sm:$0xff]
    %v3726 = vld [vmem:[#allocation10 + $0x3f0] sm:$0xff]
    %v3727 = vld [vmem:[#allocation10 + $0x3f8] sm:$0xff]
    %s3728 = scalar_lea.vmem %s7, 3
    %v3729 = vld [vmem:[%s3728] ss:$4 sm:$0xf]
    %v3731 = vperm.slane %v3729, 0
    %v3732 = vperm.slane %v3729, 1
    %v3733 = vperm.slane %v3729, 2
    %v3734 = vperm.slane %v3729, 3
    %v3867 = vunpack.c.l.b16 %v3600
    %v3868 = vunpack.c.h.b16 %v3600
    %v3869 = vunpack.c.l.b16 %v3601
    %v3870 = vunpack.c.h.b16 %v3601
    %v3871 = vunpack.c.l.b16 %v3602
    %v3872 = vunpack.c.h.b16 %v3602
    %v3873 = vunpack.c.l.b16 %v3603
    %v3874 = vunpack.c.h.b16 %v3603
    %v3875 = vunpack.c.l.b16 %v3604
    %v3876 = vunpack.c.h.b16 %v3604
    %v3877 = vunpack.c.l.b16 %v3605
    %v3878 = vunpack.c.h.b16 %v3605
    %v3879 = vunpack.c.l.b16 %v3606
    %v3880 = vunpack.c.h.b16 %v3606
    %v3881 = vunpack.c.l.b16 %v3607
    %v3882 = vunpack.c.h.b16 %v3607
    %v3883 = vunpack.c.l.b16 %v3608
    %v3884 = vunpack.c.h.b16 %v3608
    %v3885 = vunpack.c.l.b16 %v3609
    %v3886 = vunpack.c.h.b16 %v3609
    %v3887 = vunpack.c.l.b16 %v3610
    %v3888 = vunpack.c.h.b16 %v3610
    %v3889 = vunpack.c.l.b16 %v3611
    %v3890 = vunpack.c.h.b16 %v3611
    %v3891 = vunpack.c.l.b16 %v3612
    %v3892 = vunpack.c.h.b16 %v3612
    %v3893 = vunpack.c.l.b16 %v3613
    %v3894 = vunpack.c.h.b16 %v3613
    %v3895 = vunpack.c.l.b16 %v3614
    %v3896 = vunpack.c.h.b16 %v3614
    %v3897 = vunpack.c.l.b16 %v3615
    %v3898 = vunpack.c.h.b16 %v3615
    %v3899 = vunpack.c.l.b16 %v3616
    %v3900 = vunpack.c.h.b16 %v3616
    %v3901 = vunpack.c.l.b16 %v3617
    %v3902 = vunpack.c.h.b16 %v3617
    %v3903 = vunpack.c.l.b16 %v3618
    %v3904 = vunpack.c.h.b16 %v3618
    %v3905 = vunpack.c.l.b16 %v3619
    %v3906 = vunpack.c.h.b16 %v3619
    %v3907 = vunpack.c.l.b16 %v3620
    %v3908 = vunpack.c.h.b16 %v3620
    %v3909 = vunpack.c.l.b16 %v3621
    %v3910 = vunpack.c.h.b16 %v3621
    %v3911 = vunpack.c.l.b16 %v3622
    %v3912 = vunpack.c.h.b16 %v3622
    %v3913 = vunpack.c.l.b16 %v3623
    %v3914 = vunpack.c.h.b16 %v3623
    %v3915 = vunpack.c.l.b16 %v3624
    %v3916 = vunpack.c.h.b16 %v3624
    %v3917 = vunpack.c.l.b16 %v3625
    %v3918 = vunpack.c.h.b16 %v3625
    %v3919 = vunpack.c.l.b16 %v3626
    %v3920 = vunpack.c.h.b16 %v3626
    %v3921 = vunpack.c.l.b16 %v3627
    %v3922 = vunpack.c.h.b16 %v3627
    %v3923 = vunpack.c.l.b16 %v3628
    %v3924 = vunpack.c.h.b16 %v3628
    %v3925 = vunpack.c.l.b16 %v3629
    %v3926 = vunpack.c.h.b16 %v3629
    %v3927 = vunpack.c.l.b16 %v3630
    %v3928 = vunpack.c.h.b16 %v3630
    %v3929 = vunpack.c.l.b16 %v3631
    %v3930 = vunpack.c.h.b16 %v3631
    %v3931 = vunpack.c.l.b16 %v3632
    %v3932 = vunpack.c.h.b16 %v3632
    %v3933 = vunpack.c.l.b16 %v3633
    %v3934 = vunpack.c.h.b16 %v3633
    %v3935 = vunpack.c.l.b16 %v3634
    %v3936 = vunpack.c.h.b16 %v3634
    %v3937 = vunpack.c.l.b16 %v3635
    %v3938 = vunpack.c.h.b16 %v3635
    %v3939 = vunpack.c.l.b16 %v3636
    %v3940 = vunpack.c.h.b16 %v3636
    %v3941 = vunpack.c.l.b16 %v3637
    %v3942 = vunpack.c.h.b16 %v3637
    %v3943 = vunpack.c.l.b16 %v3638
    %v3944 = vunpack.c.h.b16 %v3638
    %v3945 = vunpack.c.l.b16 %v3639
    %v3946 = vunpack.c.h.b16 %v3639
    %v3947 = vunpack.c.l.b16 %v3640
    %v3948 = vunpack.c.h.b16 %v3640
    %v3949 = vunpack.c.l.b16 %v3641
    %v3950 = vunpack.c.h.b16 %v3641
    %v3951 = vunpack.c.l.b16 %v3642
    %v3952 = vunpack.c.h.b16 %v3642
    %v3953 = vunpack.c.l.b16 %v3643
    %v3954 = vunpack.c.h.b16 %v3643
    %v3955 = vunpack.c.l.b16 %v3644
    %v3956 = vunpack.c.h.b16 %v3644
    %v3957 = vunpack.c.l.b16 %v3645
    %v3958 = vunpack.c.h.b16 %v3645
    %v3959 = vunpack.c.l.b16 %v3646
    %v3960 = vunpack.c.h.b16 %v3646
    %v3961 = vunpack.c.l.b16 %v3647
    %v3962 = vunpack.c.h.b16 %v3647
    %v3963 = vunpack.c.l.b16 %v3648
    %v3964 = vunpack.c.h.b16 %v3648
    %v3965 = vunpack.c.l.b16 %v3649
    %v3966 = vunpack.c.h.b16 %v3649
    %v3967 = vunpack.c.l.b16 %v3650
    %v3968 = vunpack.c.h.b16 %v3650
    %v3969 = vunpack.c.l.b16 %v3651
    %v3970 = vunpack.c.h.b16 %v3651
    %v3971 = vunpack.c.l.b16 %v3652
    %v3972 = vunpack.c.h.b16 %v3652
    %v3973 = vunpack.c.l.b16 %v3653
    %v3974 = vunpack.c.h.b16 %v3653
    %v3975 = vunpack.c.l.b16 %v3654
    %v3976 = vunpack.c.h.b16 %v3654
    %v3977 = vunpack.c.l.b16 %v3655
    %v3978 = vunpack.c.h.b16 %v3655
    %v3979 = vunpack.c.l.b16 %v3656
    %v3980 = vunpack.c.h.b16 %v3656
    %v3981 = vunpack.c.l.b16 %v3657
    %v3982 = vunpack.c.h.b16 %v3657
    %v3983 = vunpack.c.l.b16 %v3658
    %v3984 = vunpack.c.h.b16 %v3658
    %v3985 = vunpack.c.l.b16 %v3659
    %v3986 = vunpack.c.h.b16 %v3659
    %v3987 = vunpack.c.l.b16 %v3660
    %v3988 = vunpack.c.h.b16 %v3660
    %v3989 = vunpack.c.l.b16 %v3661
    %v3990 = vunpack.c.h.b16 %v3661
    %v3991 = vunpack.c.l.b16 %v3662
    %v3992 = vunpack.c.h.b16 %v3662
    %v3993 = vunpack.c.l.b16 %v3663
    %v3994 = vunpack.c.h.b16 %v3663
    %v3995 = vunpack.c.l.b16 %v3664
    %v3996 = vunpack.c.h.b16 %v3664
    %v3997 = vunpack.c.l.b16 %v3665
    %v3998 = vunpack.c.h.b16 %v3665
    %v3999 = vunpack.c.l.b16 %v3666
    %v4000 = vunpack.c.h.b16 %v3666
    %v4001 = vunpack.c.l.b16 %v3667
    %v4002 = vunpack.c.h.b16 %v3667
    %v4003 = vunpack.c.l.b16 %v3668
    %v4004 = vunpack.c.h.b16 %v3668
    %v4005 = vunpack.c.l.b16 %v3669
    %v4006 = vunpack.c.h.b16 %v3669
    %v4007 = vunpack.c.l.b16 %v3670
    %v4008 = vunpack.c.h.b16 %v3670
    %v4009 = vunpack.c.l.b16 %v3671
    %v4010 = vunpack.c.h.b16 %v3671
    %v4011 = vunpack.c.l.b16 %v3672
    %v4012 = vunpack.c.h.b16 %v3672
    %v4013 = vunpack.c.l.b16 %v3673
    %v4014 = vunpack.c.h.b16 %v3673
    %v4015 = vunpack.c.l.b16 %v3674
    %v4016 = vunpack.c.h.b16 %v3674
    %v4017 = vunpack.c.l.b16 %v3675
    %v4018 = vunpack.c.h.b16 %v3675
    %v4019 = vunpack.c.l.b16 %v3676
    %v4020 = vunpack.c.h.b16 %v3676
    %v4021 = vunpack.c.l.b16 %v3677
    %v4022 = vunpack.c.h.b16 %v3677
    %v4023 = vunpack.c.l.b16 %v3678
    %v4024 = vunpack.c.h.b16 %v3678
    %v4025 = vunpack.c.l.b16 %v3679
    %v4026 = vunpack.c.h.b16 %v3679
    %v4027 = vunpack.c.l.b16 %v3680
    %v4028 = vunpack.c.h.b16 %v3680
    %v4029 = vunpack.c.l.b16 %v3681
    %v4030 = vunpack.c.h.b16 %v3681
    %v4031 = vunpack.c.l.b16 %v3682
    %v4032 = vunpack.c.h.b16 %v3682
    %v4033 = vunpack.c.l.b16 %v3683
    %v4034 = vunpack.c.h.b16 %v3683
    %v4035 = vunpack.c.l.b16 %v3684
    %v4036 = vunpack.c.h.b16 %v3684
    %v4037 = vunpack.c.l.b16 %v3685
    %v4038 = vunpack.c.h.b16 %v3685
    %v4039 = vunpack.c.l.b16 %v3686
    %v4040 = vunpack.c.h.b16 %v3686
    %v4041 = vunpack.c.l.b16 %v3687
    %v4042 = vunpack.c.h.b16 %v3687
    %v4043 = vunpack.c.l.b16 %v3688
    %v4044 = vunpack.c.h.b16 %v3688
    %v4045 = vunpack.c.l.b16 %v3689
    %v4046 = vunpack.c.h.b16 %v3689
    %v4047 = vunpack.c.l.b16 %v3690
    %v4048 = vunpack.c.h.b16 %v3690
    %v4049 = vunpack.c.l.b16 %v3691
    %v4050 = vunpack.c.h.b16 %v3691
    %v4051 = vunpack.c.l.b16 %v3692
    %v4052 = vunpack.c.h.b16 %v3692
    %v4053 = vunpack.c.l.b16 %v3693
    %v4054 = vunpack.c.h.b16 %v3693
    %v4055 = vunpack.c.l.b16 %v3694
    %v4056 = vunpack.c.h.b16 %v3694
    %v4057 = vunpack.c.l.b16 %v3695
    %v4058 = vunpack.c.h.b16 %v3695
    %v4059 = vunpack.c.l.b16 %v3696
    %v4060 = vunpack.c.h.b16 %v3696
    %v4061 = vunpack.c.l.b16 %v3697
    %v4062 = vunpack.c.h.b16 %v3697
    %v4063 = vunpack.c.l.b16 %v3698
    %v4064 = vunpack.c.h.b16 %v3698
    %v4065 = vunpack.c.l.b16 %v3699
    %v4066 = vunpack.c.h.b16 %v3699
    %v4067 = vunpack.c.l.b16 %v3700
    %v4068 = vunpack.c.h.b16 %v3700
    %v4069 = vunpack.c.l.b16 %v3701
    %v4070 = vunpack.c.h.b16 %v3701
    %v4071 = vunpack.c.l.b16 %v3702
    %v4072 = vunpack.c.h.b16 %v3702
    %v4073 = vunpack.c.l.b16 %v3703
    %v4074 = vunpack.c.h.b16 %v3703
    %v4075 = vunpack.c.l.b16 %v3704
    %v4076 = vunpack.c.h.b16 %v3704
    %v4077 = vunpack.c.l.b16 %v3705
    %v4078 = vunpack.c.h.b16 %v3705
    %v4079 = vunpack.c.l.b16 %v3706
    %v4080 = vunpack.c.h.b16 %v3706
    %v4081 = vunpack.c.l.b16 %v3707
    %v4082 = vunpack.c.h.b16 %v3707
    %v4083 = vunpack.c.l.b16 %v3708
    %v4084 = vunpack.c.h.b16 %v3708
    %v4085 = vunpack.c.l.b16 %v3709
    %v4086 = vunpack.c.h.b16 %v3709
    %v4087 = vunpack.c.l.b16 %v3710
    %v4088 = vunpack.c.h.b16 %v3710
    %v4089 = vunpack.c.l.b16 %v3711
    %v4090 = vunpack.c.h.b16 %v3711
    %v4091 = vunpack.c.l.b16 %v3712
    %v4092 = vunpack.c.h.b16 %v3712
    %v4093 = vunpack.c.l.b16 %v3713
    %v4094 = vunpack.c.h.b16 %v3713
    %v4095 = vunpack.c.l.b16 %v3714
    %v4096 = vunpack.c.h.b16 %v3714
    %v4097 = vunpack.c.l.b16 %v3715
    %v4098 = vunpack.c.h.b16 %v3715
    %v4099 = vunpack.c.l.b16 %v3716
    %v4100 = vunpack.c.h.b16 %v3716
    %v4101 = vunpack.c.l.b16 %v3717
    %v4102 = vunpack.c.h.b16 %v3717
    %v4103 = vunpack.c.l.b16 %v3718
    %v4104 = vunpack.c.h.b16 %v3718
    %v4105 = vunpack.c.l.b16 %v3719
    %v4106 = vunpack.c.h.b16 %v3719
    %v4107 = vunpack.c.l.b16 %v3720
    %v4108 = vunpack.c.h.b16 %v3720
    %v4109 = vunpack.c.l.b16 %v3721
    %v4110 = vunpack.c.h.b16 %v3721
    %v4111 = vunpack.c.l.b16 %v3722
    %v4112 = vunpack.c.h.b16 %v3722
    %v4113 = vunpack.c.l.b16 %v3723
    %v4114 = vunpack.c.h.b16 %v3723
    %v4115 = vunpack.c.l.b16 %v3724
    %v4116 = vunpack.c.h.b16 %v3724
    %v4117 = vunpack.c.l.b16 %v3725
    %v4118 = vunpack.c.h.b16 %v3725
    %v4119 = vunpack.c.l.b16 %v3726
    %v4120 = vunpack.c.h.b16 %v3726
    %v4121 = vunpack.c.l.b16 %v3727
    %v4122 = vunpack.c.h.b16 %v3727
    %v4123 = vpack.c.b16 %v3871, %v3867
    %v4124 = vpack.c.b16 %v3872, %v3868
    %v4125 = vpack.c.b16 %v3873, %v3869
    %v4126 = vpack.c.b16 %v3874, %v3870
    %v4127 = vpack.c.b16 %v3879, %v3875
    %v4128 = vpack.c.b16 %v3880, %v3876
    %v4129 = vpack.c.b16 %v3881, %v3877
    %v4130 = vpack.c.b16 %v3882, %v3878
    %v4131 = vpack.c.b16 %v3887, %v3883
    %v4132 = vpack.c.b16 %v3888, %v3884
    %v4133 = vpack.c.b16 %v3889, %v3885
    %v4134 = vpack.c.b16 %v3890, %v3886
    %v4135 = vpack.c.b16 %v3895, %v3891
    %v4136 = vpack.c.b16 %v3896, %v3892
    %v4137 = vpack.c.b16 %v3897, %v3893
    %v4138 = vpack.c.b16 %v3898, %v3894
    %v4139 = vpack.c.b16 %v3903, %v3899
    %v4140 = vpack.c.b16 %v3904, %v3900
    %v4141 = vpack.c.b16 %v3905, %v3901
    %v4142 = vpack.c.b16 %v3906, %v3902
    %v4143 = vpack.c.b16 %v3911, %v3907
    %v4144 = vpack.c.b16 %v3912, %v3908
    %v4145 = vpack.c.b16 %v3913, %v3909
    %v4146 = vpack.c.b16 %v3914, %v3910
    %v4147 = vpack.c.b16 %v3919, %v3915
    %v4148 = vpack.c.b16 %v3920, %v3916
    %v4149 = vpack.c.b16 %v3921, %v3917
    %v4150 = vpack.c.b16 %v3922, %v3918
    %v4151 = vpack.c.b16 %v3927, %v3923
    %v4152 = vpack.c.b16 %v3928, %v3924
    %v4153 = vpack.c.b16 %v3929, %v3925
    %v4154 = vpack.c.b16 %v3930, %v3926
    %v4155 = vpack.c.b16 %v3935, %v3931
    %v4156 = vpack.c.b16 %v3936, %v3932
    %v4157 = vpack.c.b16 %v3937, %v3933
    %v4158 = vpack.c.b16 %v3938, %v3934
    %v4159 = vpack.c.b16 %v3943, %v3939
    %v4160 = vpack.c.b16 %v3944, %v3940
    %v4161 = vpack.c.b16 %v3945, %v3941
    %v4162 = vpack.c.b16 %v3946, %v3942
    %v4163 = vpack.c.b16 %v3951, %v3947
    %v4164 = vpack.c.b16 %v3952, %v3948
    %v4165 = vpack.c.b16 %v3953, %v3949
    %v4166 = vpack.c.b16 %v3954, %v3950
    %v4167 = vpack.c.b16 %v3959, %v3955
    %v4168 = vpack.c.b16 %v3960, %v3956
    %v4169 = vpack.c.b16 %v3961, %v3957
    %v4170 = vpack.c.b16 %v3962, %v3958
    %v4171 = vpack.c.b16 %v3967, %v3963
    %v4172 = vpack.c.b16 %v3968, %v3964
    %v4173 = vpack.c.b16 %v3969, %v3965
    %v4174 = vpack.c.b16 %v3970, %v3966
    %v4175 = vpack.c.b16 %v3975, %v3971
    %v4176 = vpack.c.b16 %v3976, %v3972
    %v4177 = vpack.c.b16 %v3977, %v3973
    %v4178 = vpack.c.b16 %v3978, %v3974
    %v4179 = vpack.c.b16 %v3983, %v3979
    %v4180 = vpack.c.b16 %v3984, %v3980
    %v4181 = vpack.c.b16 %v3985, %v3981
    %v4182 = vpack.c.b16 %v3986, %v3982
    %v4183 = vpack.c.b16 %v3991, %v3987
    %v4184 = vpack.c.b16 %v3992, %v3988
    %v4185 = vpack.c.b16 %v3993, %v3989
    %v4186 = vpack.c.b16 %v3994, %v3990
    %v4187 = vpack.c.b16 %v3999, %v3995
    %v4188 = vpack.c.b16 %v4000, %v3996
    %v4189 = vpack.c.b16 %v4001, %v3997
    %v4190 = vpack.c.b16 %v4002, %v3998
    %v4191 = vpack.c.b16 %v4007, %v4003
    %v4192 = vpack.c.b16 %v4008, %v4004
    %v4193 = vpack.c.b16 %v4009, %v4005
    %v4194 = vpack.c.b16 %v4010, %v4006
    %v4195 = vpack.c.b16 %v4015, %v4011
    %v4196 = vpack.c.b16 %v4016, %v4012
    %v4197 = vpack.c.b16 %v4017, %v4013
    %v4198 = vpack.c.b16 %v4018, %v4014
    %v4199 = vpack.c.b16 %v4023, %v4019
    %v4200 = vpack.c.b16 %v4024, %v4020
    %v4201 = vpack.c.b16 %v4025, %v4021
    %v4202 = vpack.c.b16 %v4026, %v4022
    %v4203 = vpack.c.b16 %v4031, %v4027
    %v4204 = vpack.c.b16 %v4032, %v4028
    %v4205 = vpack.c.b16 %v4033, %v4029
    %v4206 = vpack.c.b16 %v4034, %v4030
    %v4207 = vpack.c.b16 %v4039, %v4035
    %v4208 = vpack.c.b16 %v4040, %v4036
    %v4209 = vpack.c.b16 %v4041, %v4037
    %v4210 = vpack.c.b16 %v4042, %v4038
    %v4211 = vpack.c.b16 %v4047, %v4043
    %v4212 = vpack.c.b16 %v4048, %v4044
    %v4213 = vpack.c.b16 %v4049, %v4045
    %v4214 = vpack.c.b16 %v4050, %v4046
    %v4215 = vpack.c.b16 %v4055, %v4051
    %v4216 = vpack.c.b16 %v4056, %v4052
    %v4217 = vpack.c.b16 %v4057, %v4053
    %v4218 = vpack.c.b16 %v4058, %v4054
    %v4219 = vpack.c.b16 %v4063, %v4059
    %v4220 = vpack.c.b16 %v4064, %v4060
    %v4221 = vpack.c.b16 %v4065, %v4061
    %v4222 = vpack.c.b16 %v4066, %v4062
    %v4223 = vpack.c.b16 %v4071, %v4067
    %v4224 = vpack.c.b16 %v4072, %v4068
    %v4225 = vpack.c.b16 %v4073, %v4069
    %v4226 = vpack.c.b16 %v4074, %v4070
    %v4227 = vpack.c.b16 %v4079, %v4075
    %v4228 = vpack.c.b16 %v4080, %v4076
    %v4229 = vpack.c.b16 %v4081, %v4077
    %v4230 = vpack.c.b16 %v4082, %v4078
    %v4231 = vpack.c.b16 %v4087, %v4083
    %v4232 = vpack.c.b16 %v4088, %v4084
    %v4233 = vpack.c.b16 %v4089, %v4085
    %v4234 = vpack.c.b16 %v4090, %v4086
    %v4235 = vpack.c.b16 %v4095, %v4091
    %v4236 = vpack.c.b16 %v4096, %v4092
    %v4237 = vpack.c.b16 %v4097, %v4093
    %v4238 = vpack.c.b16 %v4098, %v4094
    %v4239 = vpack.c.b16 %v4103, %v4099
    %v4240 = vpack.c.b16 %v4104, %v4100
    %v4241 = vpack.c.b16 %v4105, %v4101
    %v4242 = vpack.c.b16 %v4106, %v4102
    %v4243 = vpack.c.b16 %v4111, %v4107
    %v4244 = vpack.c.b16 %v4112, %v4108
    %v4245 = vpack.c.b16 %v4113, %v4109
    %v4246 = vpack.c.b16 %v4114, %v4110
    %v4247 = vpack.c.b16 %v4119, %v4115
    %v4248 = vpack.c.b16 %v4120, %v4116
    %v4249 = vpack.c.b16 %v4121, %v4117
    %v4250 = vpack.c.b16 %v4122, %v4118
    %4379 = vmatpush.bf16.msra.mxu0 %v4151
    %4380 = vmatpush.bf16.msra.mxu0 %v4147
    %4381 = vmatpush.bf16.msra.mxu0 %v4143
    %4382 = vmatpush.bf16.msra.mxu0 %v4139
    %4383 = vmatpush.bf16.msra.mxu0 %v4135
    %4384 = vmatpush.bf16.msra.mxu0 %v4131
    %4385 = vmatpush.bf16.msra.mxu0 %v4127
    %4386 = vmatpush.bf16.msra.mxu0 %v4123
    %4387 = vmatmul.bf16.gmra.mxu0 %v3596
    %v4388 = vpop.f32.mrf.mxu0
    %v4389 = vadd.f32 %v3731, %v4388
    %v4390 = vpop.f32.mrf.mxu0
    %4391 = vdwg.mxu0
    %4392 = vmatpush.bf16.msra.mxu0 %v4183
    %4393 = vmatpush.bf16.msra.mxu0 %v4179
    %4394 = vmatpush.bf16.msra.mxu0 %v4175
    %4395 = vmatpush.bf16.msra.mxu0 %v4171
    %4396 = vmatpush.bf16.msra.mxu0 %v4167
    %4397 = vmatpush.bf16.msra.mxu0 %v4163
    %4398 = vmatpush.bf16.msra.mxu0 %v4159
    %4399 = vmatpush.bf16.msra.mxu0 %v4155
    %4400 = vmatmul.bf16.gmra.mxu0 %v3597
    %v4401 = vpop.f32.mrf.mxu0
    %v4402 = vadd.f32 %v4389, %v4401
    %v4403 = vpop.f32.mrf.mxu0
    %4404 = vdwg.mxu0
    %4405 = vmatpush.bf16.msra.mxu0 %v4215
    %4406 = vmatpush.bf16.msra.mxu0 %v4211
    %4407 = vmatpush.bf16.msra.mxu0 %v4207
    %4408 = vmatpush.bf16.msra.mxu0 %v4203
    %4409 = vmatpush.bf16.msra.mxu0 %v4199
    %4410 = vmatpush.bf16.msra.mxu0 %v4195
    %4411 = vmatpush.bf16.msra.mxu0 %v4191
    %4412 = vmatpush.bf16.msra.mxu0 %v4187
    %4413 = vmatmul.bf16.gmra.mxu0 %v3598
    %v4414 = vpop.f32.mrf.mxu0
    %v4415 = vadd.f32 %v4402, %v4414
    %v4416 = vpop.f32.mrf.mxu0
    %4417 = vdwg.mxu0
    %4418 = vmatpush.bf16.msra.mxu0 %v4247
    %4419 = vmatpush.bf16.msra.mxu0 %v4243
    %4420 = vmatpush.bf16.msra.mxu0 %v4239
    %4421 = vmatpush.bf16.msra.mxu0 %v4235
    %4422 = vmatpush.bf16.msra.mxu0 %v4231
    %4423 = vmatpush.bf16.msra.mxu0 %v4227
    %4424 = vmatpush.bf16.msra.mxu0 %v4223
    %4425 = vmatpush.bf16.msra.mxu0 %v4219
    %4426 = vmatmul.bf16.gmra.mxu0 %v3599
    %v4427 = vpop.f32.mrf.mxu0
    %v4428 = vadd.f32 %v4415, %v4427
    %v4429 = vpop.f32.mrf.mxu0
    %4430 = vdwg.mxu0
    %4431 = vmatpush.bf16.msra.mxu0 %v4152
    %4432 = vmatpush.bf16.msra.mxu0 %v4148
    %4433 = vmatpush.bf16.msra.mxu0 %v4144
    %4434 = vmatpush.bf16.msra.mxu0 %v4140
    %4435 = vmatpush.bf16.msra.mxu0 %v4136
    %4436 = vmatpush.bf16.msra.mxu0 %v4132
    %4437 = vmatpush.bf16.msra.mxu0 %v4128
    %4438 = vmatpush.bf16.msra.mxu0 %v4124
    %4439 = vmatmul.bf16.gmra.mxu0 %v3596
    %v4440 = vpop.f32.mrf.mxu0
    %v4441 = vadd.f32 %v3732, %v4440
    %v4442 = vpop.f32.mrf.mxu0
    %4443 = vdwg.mxu0
    %4444 = vmatpush.bf16.msra.mxu0 %v4184
    %4445 = vmatpush.bf16.msra.mxu0 %v4180
    %4446 = vmatpush.bf16.msra.mxu0 %v4176
    %4447 = vmatpush.bf16.msra.mxu0 %v4172
    %4448 = vmatpush.bf16.msra.mxu0 %v4168
    %4449 = vmatpush.bf16.msra.mxu0 %v4164
    %4450 = vmatpush.bf16.msra.mxu0 %v4160
    %4451 = vmatpush.bf16.msra.mxu0 %v4156
    %4452 = vmatmul.bf16.gmra.mxu0 %v3597
    %v4453 = vpop.f32.mrf.mxu0
    %v4454 = vadd.f32 %v4441, %v4453
    %v4455 = vpop.f32.mrf.mxu0
    %4456 = vdwg.mxu0
    %4457 = vmatpush.bf16.msra.mxu0 %v4216
    %4458 = vmatpush.bf16.msra.mxu0 %v4212
    %4459 = vmatpush.bf16.msra.mxu0 %v4208
    %4460 = vmatpush.bf16.msra.mxu0 %v4204
    %4461 = vmatpush.bf16.msra.mxu0 %v4200
    %4462 = vmatpush.bf16.msra.mxu0 %v4196
    %4463 = vmatpush.bf16.msra.mxu0 %v4192
    %4464 = vmatpush.bf16.msra.mxu0 %v4188
    %4465 = vmatmul.bf16.gmra.mxu0 %v3598
    %v4466 = vpop.f32.mrf.mxu0
    %v4467 = vadd.f32 %v4454, %v4466
    %v4468 = vpop.f32.mrf.mxu0
    %4469 = vdwg.mxu0
    %4470 = vmatpush.bf16.msra.mxu0 %v4248
    %4471 = vmatpush.bf16.msra.mxu0 %v4244
    %4472 = vmatpush.bf16.msra.mxu0 %v4240
    %4473 = vmatpush.bf16.msra.mxu0 %v4236
    %4474 = vmatpush.bf16.msra.mxu0 %v4232
    %4475 = vmatpush.bf16.msra.mxu0 %v4228
    %4476 = vmatpush.bf16.msra.mxu0 %v4224
    %4477 = vmatpush.bf16.msra.mxu0 %v4220
    %4478 = vmatmul.bf16.gmra.mxu0 %v3599
    %v4479 = vpop.f32.mrf.mxu0
    %v4480 = vadd.f32 %v4467, %v4479
    %v4481 = vpop.f32.mrf.mxu0
    %4482 = vdwg.mxu0
    %4483 = vmatpush.bf16.msra.mxu0 %v4153
    %4484 = vmatpush.bf16.msra.mxu0 %v4149
    %4485 = vmatpush.bf16.msra.mxu0 %v4145
    %4486 = vmatpush.bf16.msra.mxu0 %v4141
    %4487 = vmatpush.bf16.msra.mxu0 %v4137
    %4488 = vmatpush.bf16.msra.mxu0 %v4133
    %4489 = vmatpush.bf16.msra.mxu0 %v4129
    %4490 = vmatpush.bf16.msra.mxu0 %v4125
    %4491 = vmatmul.bf16.gmra.mxu0 %v3596
    %v4492 = vpop.f32.mrf.mxu0
    %v4493 = vadd.f32 %v3733, %v4492
    %v4494 = vpop.f32.mrf.mxu0
    %4495 = vdwg.mxu0
    %4496 = vmatpush.bf16.msra.mxu0 %v4185
    %4497 = vmatpush.bf16.msra.mxu0 %v4181
    %4498 = vmatpush.bf16.msra.mxu0 %v4177
    %4499 = vmatpush.bf16.msra.mxu0 %v4173
    %4500 = vmatpush.bf16.msra.mxu0 %v4169
    %4501 = vmatpush.bf16.msra.mxu0 %v4165
    %4502 = vmatpush.bf16.msra.mxu0 %v4161
    %4503 = vmatpush.bf16.msra.mxu0 %v4157
    %4504 = vmatmul.bf16.gmra.mxu0 %v3597
    %v4505 = vpop.f32.mrf.mxu0
    %v4506 = vadd.f32 %v4493, %v4505
    %v4507 = vpop.f32.mrf.mxu0
    %4508 = vdwg.mxu0
    %4509 = vmatpush.bf16.msra.mxu0 %v4217
    %4510 = vmatpush.bf16.msra.mxu0 %v4213
    %4511 = vmatpush.bf16.msra.mxu0 %v4209
    %4512 = vmatpush.bf16.msra.mxu0 %v4205
    %4513 = vmatpush.bf16.msra.mxu0 %v4201
    %4514 = vmatpush.bf16.msra.mxu0 %v4197
    %4515 = vmatpush.bf16.msra.mxu0 %v4193
    %4516 = vmatpush.bf16.msra.mxu0 %v4189
    %4517 = vmatmul.bf16.gmra.mxu0 %v3598
    %v4518 = vpop.f32.mrf.mxu0
    %v4519 = vadd.f32 %v4506, %v4518
    %v4520 = vpop.f32.mrf.mxu0
    %4521 = vdwg.mxu0
    %4522 = vmatpush.bf16.msra.mxu0 %v4249
    %4523 = vmatpush.bf16.msra.mxu0 %v4245
    %4524 = vmatpush.bf16.msra.mxu0 %v4241
    %4525 = vmatpush.bf16.msra.mxu0 %v4237
    %4526 = vmatpush.bf16.msra.mxu0 %v4233
    %4527 = vmatpush.bf16.msra.mxu0 %v4229
    %4528 = vmatpush.bf16.msra.mxu0 %v4225
    %4529 = vmatpush.bf16.msra.mxu0 %v4221
    %4530 = vmatmul.bf16.gmra.mxu0 %v3599
    %v4531 = vpop.f32.mrf.mxu0
    %v4532 = vadd.f32 %v4519, %v4531
    %v4533 = vpop.f32.mrf.mxu0
    %4534 = vdwg.mxu0
    %4535 = vmatpush.bf16.msra.mxu0 %v4154
    %4536 = vmatpush.bf16.msra.mxu0 %v4150
    %4537 = vmatpush.bf16.msra.mxu0 %v4146
    %4538 = vmatpush.bf16.msra.mxu0 %v4142
    %4539 = vmatpush.bf16.msra.mxu0 %v4138
    %4540 = vmatpush.bf16.msra.mxu0 %v4134
    %4541 = vmatpush.bf16.msra.mxu0 %v4130
    %4542 = vmatpush.bf16.msra.mxu0 %v4126
    %4543 = vmatmul.bf16.gmra.mxu0 %v3596
    %v4544 = vpop.f32.mrf.mxu0
    %v4545 = vadd.f32 %v3734, %v4544
    %v4546 = vpop.f32.mrf.mxu0
    %4547 = vdwg.mxu0
    %4548 = vmatpush.bf16.msra.mxu0 %v4186
    %4549 = vmatpush.bf16.msra.mxu0 %v4182
    %4550 = vmatpush.bf16.msra.mxu0 %v4178
    %4551 = vmatpush.bf16.msra.mxu0 %v4174
    %4552 = vmatpush.bf16.msra.mxu0 %v4170
    %4553 = vmatpush.bf16.msra.mxu0 %v4166
    %4554 = vmatpush.bf16.msra.mxu0 %v4162
    %4555 = vmatpush.bf16.msra.mxu0 %v4158
    %4556 = vmatmul.bf16.gmra.mxu0 %v3597
    %v4557 = vpop.f32.mrf.mxu0
    %v4558 = vadd.f32 %v4545, %v4557
    %v4559 = vpop.f32.mrf.mxu0
    %4560 = vdwg.mxu0
    %4561 = vmatpush.bf16.msra.mxu0 %v4218
    %4562 = vmatpush.bf16.msra.mxu0 %v4214
    %4563 = vmatpush.bf16.msra.mxu0 %v4210
    %4564 = vmatpush.bf16.msra.mxu0 %v4206
    %4565 = vmatpush.bf16.msra.mxu0 %v4202
    %4566 = vmatpush.bf16.msra.mxu0 %v4198
    %4567 = vmatpush.bf16.msra.mxu0 %v4194
    %4568 = vmatpush.bf16.msra.mxu0 %v4190
    %4569 = vmatmul.bf16.gmra.mxu0 %v3598
    %v4570 = vpop.f32.mrf.mxu0
    %v4571 = vadd.f32 %v4558, %v4570
    %v4572 = vpop.f32.mrf.mxu0
    %4573 = vdwg.mxu0
    %4574 = vmatpush.bf16.msra.mxu0 %v4250
    %4575 = vmatpush.bf16.msra.mxu0 %v4246
    %4576 = vmatpush.bf16.msra.mxu0 %v4242
    %4577 = vmatpush.bf16.msra.mxu0 %v4238
    %4578 = vmatpush.bf16.msra.mxu0 %v4234
    %4579 = vmatpush.bf16.msra.mxu0 %v4230
    %4580 = vmatpush.bf16.msra.mxu0 %v4226
    %4581 = vmatpush.bf16.msra.mxu0 %v4222
    %4582 = vmatmul.bf16.gmra.mxu0 %v3599
    %v4583 = vpop.f32.mrf.mxu0
    %v4584 = vadd.f32 %v4571, %v4583
    %v4585 = vpop.f32.mrf.mxu0
    %4586 = vdwg.mxu0
    %v4587 = vadd.f32 %v108, %v4428
    %v4588 = vadd.f32 %v109, %v4480
    %v4589 = vadd.f32 %v110, %v4532
    %v4590 = vadd.f32 %v111, %v4584
    %4591 = vst [vmem:[#allocation11] sm:$0xff] %v4587
    %4592 = vst [vmem:[#allocation11 + $0x8] sm:$0xff] %v4588
    %4593 = vst [vmem:[#allocation11 + $0x10] sm:$0xff] %v4589
    %4594 = vst [vmem:[#allocation11 + $0x18] sm:$0xff] %v4590
    // Predicated region
    $region54: #{transfer_decoder_blink_forward.1} parent=1 // pred_check
      _
    $region55: #{transfer_decoder_blink_forward.1} parent=1 // pred_check_branch
      %4596 = sbr.rel (0) target = $region57
    $region56: #{transfer_decoder_blink_forward.1} parent=1 // pred_region
      %4598 = vsyncadd [#allocation4], 0
      %s4600 = sshll.u32 [#allocation11], 4
      %s4601 = int_to_ptr.vmem [resolvable:$true] %s4600
      %s4602 = sshll.u32 %s8, 4
      %s4603 = int_to_ptr.hbm [resolvable:$true] %s4602
      %4605 = dma.vmem_to_hbm [thread:$0]  %s4601, 512, %s4603, [#allocation4]
    $region57: #{transfer_decoder_blink_forward.1} parent=1 // pred_fallthru
      _
    // Predicated region
    $region58: #{transfer_decoder_blink_forward.1} parent=1 // pred_check
      _
    $region59: #{transfer_decoder_blink_forward.1} parent=1 // pred_check_branch
      %4607 = sbr.rel (0) target = $region61
    $region60: #{transfer_decoder_blink_forward.1} parent=1 // pred_region
      %4609 = dma.done [#allocation4], 512
    $region61: #{transfer_decoder_blink_forward.1} parent=1 // pred_fallthru
      _
    %4610 = vsyncpa [#allocation3], 1
    %4611 = vsyncpa [#allocation6], 1
    %4612 = vsyncpa [#allocation9], 1
    %4613 = vsyncpa [#allocation4], 1

</llo_original>
